<compile_context>
chip_gen: v6e
topology: v6e:2x2x1
jax: 0.10.0
libtpu: 0.0.40
codegen_flags: <defaults>
</compile_context>

<pallas_src>
import functools

import jax
import jax.numpy as jnp
import numpy as np
from jax import lax
from jax.experimental import pallas as pl
from jax.experimental.pallas import tpu as pltpu


# ---------------------------------------------------------------------------
# In-kernel helpers
# ---------------------------------------------------------------------------
def _mxu(a, b):
    """MXU matmul: bf16 operands, f32 accumulation (review item #1)."""
    return jnp.dot(a.astype(jnp.bfloat16), b.astype(jnp.bfloat16),
                   preferred_element_type=jnp.float32)


def _sel(a, sel):
    """Exact 0/1 pixel selection (stride-2 decimation).

    Kept at HIGHEST so the f32 operand is not truncated to bf16 (that would
    perturb the avg-pool shortcut beyond test tolerance); these are two tiny
    matmuls well off the hot path.
    """
    return jnp.dot(a, sel, precision=lax.Precision.HIGHEST,
                   preferred_element_type=jnp.float32)


def _store_padded(pad_ref, val, P, npix):
    """Write `val` (C, npix) into the interior of the flat zero-padded map."""
    c = pad_ref.shape[0]
    l = pad_ref.shape[1]
    # Re-zero the tiny pad lanes every step (megacore-safe; interior is fully
    # overwritten below, so nothing stale can leak between grid steps).
    pad_ref[:, 0:P] = jnp.zeros((c, P), pad_ref.dtype)
    pad_ref[:, P + npix:l] = jnp.zeros((c, l - P - npix), pad_ref.dtype)
    pad_ref[:, P:P + npix] = val


def _dw3x3(pad_ref, masks, H, W, w9=None):
    """3x3 taps over the whole image from a row-zero-padded flat (C, L) map.

    Every tap is one static contiguous lane slice.  Horizontal wrap-around at
    the row seams is cancelled by the column masks (masks[0]: w==0 zeroed for
    dx=-1 taps, masks[1]: w==W-1 zeroed for dx=+1 taps), applied once per
    dx-group.  `w9` is the per-channel depthwise weight (C, 9); if None the
    plain 3x3 window sum is returned (avg-pool shortcut).
    """
    npix = H * W
    P = W + 1
    out = None
    for dx in (-1, 0, 1):
        acc = None
        for dy in (-1, 0, 1):
            k = (dy + 1) * 3 + (dx + 1)
            s = P + dy * W + dx
            t = pad_ref[:, s:s + npix]
            if w9 is not None:
                t = t * w9[:, k:k + 1]
            acc = t if acc is None else acc + t
        if dx == -1:
            acc = acc * masks[0:1, :]
        elif dx == 1:
            acc = acc * masks[1:2, :]
        out = acc if out is None else out + acc
    return out


# ---------------------------------------------------------------------------
# Fused Block kernels (one grid step == one image, channel-major (C, H*W))
# ---------------------------------------------------------------------------
def _block_s1_kernel(x_ref, w1_ref, s1_ref, b1_ref, w2_ref, s2_ref, b2_ref,
                     w3_ref, s3_ref, b3_ref, m_ref, o_ref, ypad_ref, *, H, W):
    npix = H * W
    P = W + 1
    x = x_ref[0]                                               # (Cin, npix)
    # 1x1 grouped conv (+ folded channel shuffle) + BN + ReLU: one matmul.
    y1 = _mxu(w1_ref[...], x)                                  # (Mid, npix)
    y1 = jnp.maximum(y1 * s1_ref[...] + b1_ref[...], 0.0)
    # Depthwise 3x3 (pad=1) + BN over the whole image.
    _store_padded(ypad_ref, y1, P, npix)
    y2 = _dw3x3(ypad_ref, m_ref[...], H, W, w9=w2_ref[...])
    y2 = y2 * s2_ref[...] + b2_ref[...]
    # 1x1 grouped conv + BN, residual add, ReLU; one lane-dense store.
    y3 = _mxu(w3_ref[...], y2) * s3_ref[...] + b3_ref[...]     # (Cout, npix)
    o_ref[0] = jnp.maximum(y3 + x, 0.0)


def _block_s2_kernel(x_ref, w1_ref, s1_ref, b1_ref, w2_ref, s2_ref, b2_ref,
                     w3_ref, s3_ref, b3_ref, m_ref, sel_ref, o_ref,
                     ypad_ref, xpad_ref, *, H, W, COUT):
    npix = H * W
    P = W + 1
    cin = x_ref.shape[1]
    x = x_ref[0]                                               # (Cin, npix)
    y1 = _mxu(w1_ref[...], x)
    y1 = jnp.maximum(y1 * s1_ref[...] + b1_ref[...], 0.0)
    masks = m_ref[...]
    _store_padded(ypad_ref, y1, P, npix)
    _store_padded(xpad_ref, x, P, npix)
    # Depthwise 3x3 at full resolution + BN, then one exact whole-image
    # stride-2 pixel selection (replaces the per-row one-hot matmuls).
    y2 = _dw3x3(ypad_ref, masks, H, W, w9=w2_ref[...])
    y2 = y2 * s2_ref[...] + b2_ref[...]
    sel = sel_ref[...]                                         # (npix, npix_o)
    y2d = _sel(y2, sel)                                        # (Mid, npix_o)
    y3 = _mxu(w3_ref[...], y2d) * s3_ref[...] + b3_ref[...]    # (Cout, npix_o)
    # Shortcut: AvgPool2d(3, stride=2, padding=1), count_include_pad=True.
    xsum = _dw3x3(xpad_ref, masks, H, W, w9=None)
    pool = _sel(xsum, sel) * (1.0 / 9.0)                       # (Cin, npix_o)
    # Concat along channels == along sublanes: two aligned slab stores.
    o_ref[0, 0:COUT, :] = jnp.maximum(y3, 0.0)
    o_ref[0, COUT:COUT + cin, :] = jnp.maximum(pool, 0.0)


# ---------------------------------------------------------------------------
# pallas_call wrapper: one fused call per Block (NCHW in / NCHW out)
# ---------------------------------------------------------------------------
def _full_spec(arr):
    nd = arr.ndim
    return pl.BlockSpec(arr.shape, lambda i, _nd=nd: (0,) * _nd)


def block_forward(x, p, stride, in_planes, out_planes, groups):
    n, cin, h, w = x.shape
    assert cin == in_planes
    mid = out_planes // 4
    ho, wo = h // stride, w // stride
    npix, npix_o = h * w, ho * wo
    cout_tot = out_planes + (cin if stride == 2 else 0)

    x_cm = x.reshape(n, cin, npix)                     # NCHW -> channel-major

    w1 = jnp.transpose(p['w1s'])                       # (mid, cin), shuffle folded
    s1 = p['s1s'].reshape(mid, 1)
    b1 = p['b1s'].reshape(mid, 1)
    w2 = p['w2'].reshape(mid, 9)                       # OIHW (mid,1,3,3) -> (mid,9)
    s2 = p['s2'].reshape(mid, 1)
    b2 = p['b2'].reshape(mid, 1)
    w3 = jnp.transpose(p['w3'])                        # (out_planes, mid)
    s3 = p['s3'].reshape(out_planes, 1)
    b3 = p['b3'].reshape(out_planes, 1)

    # Column masks that cancel horizontal wrap-around of the flattened taps.
    col = np.arange(npix) % w
    masks = jnp.asarray(
        np.stack([(col != 0), (col != w - 1)]).astype(np.float32))   # (2, npix)

    pad_len = npix + 2 * (w + 1)

    common_in = [x_cm, w1, s1, b1, w2, s2, b2, w3, s3, b3, masks]
    common_specs = ([pl.BlockSpec((1, cin, npix), lambda i: (i, 0, 0))] +
                    [_full_spec(a) for a in common_in[1:]])

    if stride == 1:
        assert in_planes == out_planes
        kern = functools.partial(_block_s1_kernel, H=h, W=w)
        ins, specs = common_in, common_specs
        scratch = [pltpu.VMEM((mid, pad_len), jnp.float32)]
    else:
        qy, qx = np.divmod(np.arange(npix_o), wo)
        src = 2 * qy * w + 2 * qx
        sel_np = np.zeros((npix, npix_o), np.float32)
        sel_np[src, np.arange(npix_o)] = 1.0
        sel = jnp.asarray(sel_np)
        kern = functools.partial(_block_s2_kernel, H=h, W=w, COUT=out_planes)
        ins = common_in + [sel]
        specs = common_specs + [_full_spec(sel)]
        scratch = [pltpu.VMEM((mid, pad_len), jnp.float32),
                   pltpu.VMEM((cin, pad_len), jnp.float32)]

    out = pl.pallas_call(
        kern,
        out_shape=jax.ShapeDtypeStruct((n, cout_tot, npix_o), jnp.float32),
        grid=(n,),
        in_specs=specs,
        out_specs=pl.BlockSpec((1, cout_tot, npix_o), lambda i: (i, 0, 0)),
        scratch_shapes=scratch,
        compiler_params=pltpu.CompilerParams(
            dimension_semantics=("parallel",),
            vmem_limit_bytes=32 * 1024 * 1024),
    )(*ins)
    return out.reshape(n, cout_tot, ho, wo)


def stage_forward(x, params, in_planes, out_planes, groups, num_blocks):
    cur = in_planes
    for i in range(num_blocks):
        stride = 2 if i == 0 else 1
        cat = cur if i == 0 else 0
        x = block_forward(x, params[i], stride, cur, out_planes - cat, groups)
        cur = out_planes
    return x


# ---------------------------------------------------------------------------
# Parameters (deterministic synthetic init, mirrors the PyTorch shapes)
# ---------------------------------------------------------------------------
def _grouped1x1_to_dense(wt, groups, cin, cout):
    # wt: (cout, cin // groups)  == torch Conv2d weight (Cout, Cin/g, 1, 1)
    cin_g, cout_g = cin // groups, cout // groups
    dense = jnp.zeros((cin, cout), jnp.float32)
    for gi in range(groups):
        blk = wt[gi * cout_g:(gi + 1) * cout_g, :]           # (cout_g, cin_g)
        dense = dense.at[gi * cin_g:(gi + 1) * cin_g,
                         gi * cout_g:(gi + 1) * cout_g].set(blk.T)
    return dense


def _fold_bn(key, c):
    k1, k2, k3, k4 = jax.random.split(key, 4)
    gamma = jax.random.uniform(k1, (c,), jnp.float32, 0.5, 1.5)
    beta = 0.1 * jax.random.normal(k2, (c,), jnp.float32)
    mean = 0.1 * jax.random.normal(k3, (c,), jnp.float32)
    var = jax.random.uniform(k4, (c,), jnp.float32, 0.5, 1.5)
    scale = gamma / jnp.sqrt(var + 1e-5)
    return scale, beta - mean * scale


def init_block_params(key, in_planes, out_planes, groups):
    mid = out_planes // 4
    g = 1 if in_planes == 24 else groups
    ks = jax.random.split(key, 6)
    w1 = 0.1 * jax.random.normal(ks[0], (mid, in_planes // g), jnp.float32)
    s1, b1 = _fold_bn(ks[1], mid)
    w2 = 0.1 * jax.random.normal(ks[2], (mid, 1, 3, 3), jnp.float32)  # OIHW
    s2, b2 = _fold_bn(ks[3], mid)
    w3 = 0.1 * jax.random.normal(ks[4], (out_planes, mid // groups), jnp.float32)
    s3, b3 = _fold_bn(ks[5], out_planes)

    w1d = _grouped1x1_to_dense(w1, g, in_planes, mid)
    # Channel-shuffle permutation folded into conv1's output channels
    # (static weight permutation -> zero runtime cost).
    perm = np.arange(mid).reshape(g, mid // g).T.reshape(-1)
    return dict(
        w1=w1d, s1=s1, b1=b1,                             # unfolded (reference)
        w1s=w1d[:, perm], s1s=s1[perm], b1s=b1[perm],     # shuffle folded
        w2=w2, s2=s2, b2=b2,
        w3=_grouped1x1_to_dense(w3, groups, mid, out_planes), s3=s3, b3=b3,
    )


def init_stage_params(key, in_planes, out_planes, groups, num_blocks):
    params = []
    cur = in_planes
    for i in range(num_blocks):
        cat = cur if i == 0 else 0
        key, sub = jax.random.split(key)
        params.append(init_block_params(sub, cur, out_planes - cat, groups))
        cur = out_planes
    return params


# ---------------------------------------------------------------------------
# Pure-JAX reference (NCHW, torch semantics) for the correctness check
# ---------------------------------------------------------------------------
def _pw_ref(x, w_io):
    # 1x1 conv with dense (Cin, Cout) weight; bf16 MXU operands, f32 accum
    # (matches the kernel's _mxu precision).
    n, c, h, w = x.shape
    y = jnp.einsum('io,nip->nop', w_io.astype(jnp.bfloat16),
                   x.reshape(n, c, h * w).astype(jnp.bfloat16),
                   preferred_element_type=jnp.float32)
    return y.reshape(n, -1, h, w)


def block_ref(x, p, stride, in_planes, out_planes, groups):
    n, cin, h, w = x.shape
    mid = out_planes // 4
    g = 1 if in_planes == 24 else groups
    y = _pw_ref(x, p['w1'])
    y = jnp.maximum(y * p['s1'].reshape(1, mid, 1, 1)
                    + p['b1'].reshape(1, mid, 1, 1), 0.0)
    # channel shuffle
    y = y.reshape(n, g, mid // g, h, w).swapaxes(1, 2).reshape(n, mid, h, w)
    # depthwise 3x3 (f32)
    y = lax.conv_general_dilated(y, p['w2'], (stride, stride), [(1, 1), (1, 1)],
                                 dimension_numbers=('NCHW', 'OIHW', 'NCHW'),
                                 feature_group_count=mid,
                                 precision=lax.Precision.HIGHEST)
    y = y * p['s2'].reshape(1, mid, 1, 1) + p['b2'].reshape(1, mid, 1, 1)
    y = _pw_ref(y, p['w3'])
    y = y * p['s3'].reshape(1, -1, 1, 1) + p['b3'].reshape(1, -1, 1, 1)
    if stride == 2:
        s = lax.reduce_window(x, 0.0, lax.add, (1, 1, 3, 3), (1, 1, 2, 2),
                              [(0, 0), (0, 0), (1, 1), (1, 1)]) / 9.0
        return jnp.maximum(jnp.concatenate([y, s], axis=1), 0.0)
    return jnp.maximum(y + x, 0.0)


def stage_ref(x, params, in_planes, out_planes, groups, num_blocks):
    cur = in_planes
    for i in range(num_blocks):
        stride = 2 if i == 0 else 1
        cat = cur if i == 0 else 0
        x = block_ref(x, params[i], stride, cur, out_planes - cat, groups)
        cur = out_planes
    return x


# ---------------------------------------------------------------------------
if __name__ == "__main__":
    key = jax.random.PRNGKey(0)
    kx, kp = jax.random.split(key)

    N, CIN, H, W = 2, 8, 16, 16
    OUT_PLANES, GROUPS, NUM_BLOCKS = 32, 2, 2

    x = jax.random.normal(kx, (N, CIN, H, W), jnp.float32)    # NCHW
    params = init_stage_params(kp, CIN, OUT_PLANES, GROUPS, NUM_BLOCKS)

    fwd = jax.jit(lambda xx, pp: stage_forward(
        xx, pp, CIN, OUT_PLANES, GROUPS, NUM_BLOCKS))
    out = jax.block_until_ready(fwd(x, params))

    ref = stage_ref(x, params, CIN, OUT_PLANES, GROUPS, NUM_BLOCKS)

    assert out.shape == (N, OUT_PLANES, H // 2, W // 2), out.shape
    np.testing.assert_allclose(np.asarray(out), np.asarray(ref),
                               atol=1e-3, rtol=1e-3)
    print("KERNEL_OK")
</pallas_src>

<mosaic_0001>
module attributes {stable_mosaic.version = 11 : i64} {
  func.func @_block_s2_kernel(%arg0: i32, %arg1: memref<1x8x256xf32, #tpu.memory_space<vmem>>, %arg2: memref<6x8xf32, #tpu.memory_space<vmem>>, %arg3: memref<6x1xf32, #tpu.memory_space<vmem>>, %arg4: memref<6x1xf32, #tpu.memory_space<vmem>>, %arg5: memref<6x9xf32, #tpu.memory_space<vmem>>, %arg6: memref<6x1xf32, #tpu.memory_space<vmem>>, %arg7: memref<6x1xf32, #tpu.memory_space<vmem>>, %arg8: memref<24x6xf32, #tpu.memory_space<vmem>>, %arg9: memref<24x1xf32, #tpu.memory_space<vmem>>, %arg10: memref<24x1xf32, #tpu.memory_space<vmem>>, %arg11: memref<2x256xf32, #tpu.memory_space<vmem>>, %arg12: memref<256x64xf32, #tpu.memory_space<vmem>>, %arg13: memref<1x32x64xf32, #tpu.memory_space<vmem>>, %arg14: memref<6x290xf32, #tpu.memory_space<vmem>>, %arg15: memref<8x290xf32, #tpu.memory_space<vmem>>) attributes {dimension_semantics = [#tpu.dimension_semantics<parallel>], iteration_bounds = array<i64: 2>, scalar_prefetch = 0 : i64, scratch_operands = 2 : i64, tpu.core_type = #tpu.core_type<tc>, window_params = [{transform_indices = @transform_0, window_bounds = array<i64: 1, 8, 256>}, {pipeline_mode = #tpu.pipeline_mode<synchronous>, transform_indices = @transform_1, window_bounds = array<i64: 6, 8>}, {pipeline_mode = #tpu.pipeline_mode<synchronous>, transform_indices = @transform_2, window_bounds = array<i64: 6, 1>}, {pipeline_mode = #tpu.pipeline_mode<synchronous>, transform_indices = @transform_3, window_bounds = array<i64: 6, 1>}, {pipeline_mode = #tpu.pipeline_mode<synchronous>, transform_indices = @transform_4, window_bounds = array<i64: 6, 9>}, {pipeline_mode = #tpu.pipeline_mode<synchronous>, transform_indices = @transform_5, window_bounds = array<i64: 6, 1>}, {pipeline_mode = #tpu.pipeline_mode<synchronous>, transform_indices = @transform_6, window_bounds = array<i64: 6, 1>}, {pipeline_mode = #tpu.pipeline_mode<synchronous>, transform_indices = @transform_7, window_bounds = array<i64: 24, 6>}, {pipeline_mode = #tpu.pipeline_mode<synchronous>, transform_indices = @transform_8, window_bounds = array<i64: 24, 1>}, {pipeline_mode = #tpu.pipeline_mode<synchronous>, transform_indices = @transform_9, window_bounds = array<i64: 24, 1>}, {pipeline_mode = #tpu.pipeline_mode<synchronous>, transform_indices = @transform_10, window_bounds = array<i64: 2, 256>}, {pipeline_mode = #tpu.pipeline_mode<synchronous>, transform_indices = @transform_11, window_bounds = array<i64: 256, 64>}, {transform_indices = @transform_12, window_bounds = array<i64: 1, 32, 64>}]} {
    %c0 = arith.constant 0 : index
    %c0_0 = arith.constant 0 : index
    %c0_1 = arith.constant 0 : index
    %0 = vector.load %arg1[%c0, %c0_0, %c0_1] : memref<1x8x256xf32, #tpu.memory_space<vmem>>, vector<1x8x256xf32>
    %1 = vector.shape_cast %0 : vector<1x8x256xf32> to vector<8x256xf32>
    %c0_2 = arith.constant 0 : index
    %c0_3 = arith.constant 0 : index
    %2 = vector.load %arg2[%c0_2, %c0_3] : memref<6x8xf32, #tpu.memory_space<vmem>>, vector<6x8xf32>
    %3 = arith.truncf %2 : vector<6x8xf32> to vector<6x8xbf16>
    %4 = arith.truncf %1 : vector<8x256xf32> to vector<8x256xbf16>
    %cst = arith.constant dense<0.000000e+00> : vector<6x256xf32>
    %5 = tpu.matmul %3, %4, %cst {dimension_numbers = #tpu.dot_dimension_numbers<[1], [0], [0], [1], [0, 0, 1, 1], [], []>} : vector<6x8xbf16>, vector<8x256xbf16>, vector<6x256xf32> -> vector<6x256xf32>
    %c0_4 = arith.constant 0 : index
    %c0_5 = arith.constant 0 : index
    %6 = vector.load %arg3[%c0_4, %c0_5] : memref<6x1xf32, #tpu.memory_space<vmem>>, vector<6x1xf32>
    %7 = vector.broadcast %6 : vector<6x1xf32> to vector<6x256xf32>
    %8 = arith.mulf %5, %7 : vector<6x256xf32>
    %c0_6 = arith.constant 0 : index
    %c0_7 = arith.constant 0 : index
    %9 = vector.load %arg4[%c0_6, %c0_7] : memref<6x1xf32, #tpu.memory_space<vmem>>, vector<6x1xf32>
    %10 = vector.broadcast %9 : vector<6x1xf32> to vector<6x256xf32>
    %11 = arith.addf %8, %10 : vector<6x256xf32>
    %cst_8 = arith.constant 0.000000e+00 : f32
    %12 = vector.broadcast %cst_8 : f32 to vector<6x256xf32>
    %13 = arith.maximumf %11, %12 : vector<6x256xf32>
    %c0_9 = arith.constant 0 : index
    %c0_10 = arith.constant 0 : index
    %14 = vector.load %arg11[%c0_9, %c0_10] : memref<2x256xf32, #tpu.memory_space<vmem>>, vector<2x256xf32>
    %cst_11 = arith.constant 0.000000e+00 : f32
    %15 = vector.broadcast %cst_11 : f32 to vector<6x17xf32>
    %c0_12 = arith.constant 0 : index
    %c0_13 = arith.constant 0 : index
    %16 = vector.load %arg14[%c0_12, %c0_13] : memref<6x290xf32, #tpu.memory_space<vmem>>, vector<6x17xf32>
    tpu.vector_store %arg14[%c0_12, %c0_13], %15 {strides = array<i32>} : memref<6x290xf32, #tpu.memory_space<vmem>>, vector<6x17xf32>,
    %cst_14 = arith.constant 0.000000e+00 : f32
    %17 = vector.broadcast %cst_14 : f32 to vector<6x17xf32>
    %c0_15 = arith.constant 0 : index
    %c273 = arith.constant 273 : index
    %18 = vector.load %arg14[%c0_15, %c273] : memref<6x290xf32, #tpu.memory_space<vmem>>, vector<6x17xf32>
    tpu.vector_store %arg14[%c0_15, %c273], %17 {strides = array<i32>} : memref<6x290xf32, #tpu.memory_space<vmem>>, vector<6x17xf32>,
    %c0_16 = arith.constant 0 : index
    %c17 = arith.constant 17 : index
    %19 = vector.load %arg14[%c0_16, %c17] : memref<6x290xf32, #tpu.memory_space<vmem>>, vector<6x256xf32>
    tpu.vector_store %arg14[%c0_16, %c17], %13 {strides = array<i32>} : memref<6x290xf32, #tpu.memory_space<vmem>>, vector<6x256xf32>,
    %cst_17 = arith.constant 0.000000e+00 : f32
    %20 = vector.broadcast %cst_17 : f32 to vector<8x17xf32>
    %c0_18 = arith.constant 0 : index
    %c0_19 = arith.constant 0 : index
    %21 = vector.load %arg15[%c0_18, %c0_19] : memref<8x290xf32, #tpu.memory_space<vmem>>, vector<8x17xf32>
    tpu.vector_store %arg15[%c0_18, %c0_19], %20 {strides = array<i32>} : memref<8x290xf32, #tpu.memory_space<vmem>>, vector<8x17xf32>,
    %cst_20 = arith.constant 0.000000e+00 : f32
    %22 = vector.broadcast %cst_20 : f32 to vector<8x17xf32>
    %c0_21 = arith.constant 0 : index
    %c273_22 = arith.constant 273 : index
    %23 = vector.load %arg15[%c0_21, %c273_22] : memref<8x290xf32, #tpu.memory_space<vmem>>, vector<8x17xf32>
    tpu.vector_store %arg15[%c0_21, %c273_22], %22 {strides = array<i32>} : memref<8x290xf32, #tpu.memory_space<vmem>>, vector<8x17xf32>,
    %c0_23 = arith.constant 0 : index
    %c17_24 = arith.constant 17 : index
    %24 = vector.load %arg15[%c0_23, %c17_24] : memref<8x290xf32, #tpu.memory_space<vmem>>, vector<8x256xf32>
    tpu.vector_store %arg15[%c0_23, %c17_24], %1 {strides = array<i32>} : memref<8x290xf32, #tpu.memory_space<vmem>>, vector<8x256xf32>,
    %c0_25 = arith.constant 0 : index
    %c0_26 = arith.constant 0 : index
    %25 = vector.load %arg5[%c0_25, %c0_26] : memref<6x9xf32, #tpu.memory_space<vmem>>, vector<6x9xf32>
    %c0_27 = arith.constant 0 : index
    %c0_28 = arith.constant 0 : index
    %26 = vector.load %arg14[%c0_27, %c0_28] : memref<6x290xf32, #tpu.memory_space<vmem>>, vector<6x256xf32>
    %27 = vector.extract_strided_slice %25 {offsets = [0, 0], sizes = [6, 1], strides = [1, 1]} : vector<6x9xf32> to vector<6x1xf32>
    %28 = vector.broadcast %27 : vector<6x1xf32> to vector<6x256xf32>
    %29 = arith.mulf %26, %28 : vector<6x256xf32>
    %c0_29 = arith.constant 0 : index
    %c16 = arith.constant 16 : index
    %30 = vector.load %arg14[%c0_29, %c16] : memref<6x290xf32, #tpu.memory_space<vmem>>, vector<6x256xf32>
    %31 = vector.extract_strided_slice %25 {offsets = [0, 3], sizes = [6, 1], strides = [1, 1]} : vector<6x9xf32> to vector<6x1xf32>
    %32 = vector.broadcast %31 : vector<6x1xf32> to vector<6x256xf32>
    %33 = arith.mulf %30, %32 : vector<6x256xf32>
    %34 = arith.addf %29, %33 : vector<6x256xf32>
    %c0_30 = arith.constant 0 : index
    %c32 = arith.constant 32 : index
    %35 = vector.load %arg14[%c0_30, %c32] : memref<6x290xf32, #tpu.memory_space<vmem>>, vector<6x256xf32>
    %36 = vector.extract_strided_slice %25 {offsets = [0, 6], sizes = [6, 1], strides = [1, 1]} : vector<6x9xf32> to vector<6x1xf32>
    %37 = vector.broadcast %36 : vector<6x1xf32> to vector<6x256xf32>
    %38 = arith.mulf %35, %37 : vector<6x256xf32>
    %39 = arith.addf %34, %38 : vector<6x256xf32>
    %40 = vector.extract_strided_slice %14 {offsets = [0, 0], sizes = [1, 256], strides = [1, 1]} : vector<2x256xf32> to vector<1x256xf32>
    %41 = vector.broadcast %40 : vector<1x256xf32> to vector<6x256xf32>
    %42 = arith.mulf %39, %41 : vector<6x256xf32>
    %c0_31 = arith.constant 0 : index
    %c1 = arith.constant 1 : index
    %43 = vector.load %arg14[%c0_31, %c1] : memref<6x290xf32, #tpu.memory_space<vmem>>, vector<6x256xf32>
    %44 = vector.extract_strided_slice %25 {offsets = [0, 1], sizes = [6, 1], strides = [1, 1]} : vector<6x9xf32> to vector<6x1xf32>
    %45 = vector.broadcast %44 : vector<6x1xf32> to vector<6x256xf32>
    %46 = arith.mulf %43, %45 : vector<6x256xf32>
    %c0_32 = arith.constant 0 : index
    %c17_33 = arith.constant 17 : index
    %47 = vector.load %arg14[%c0_32, %c17_33] : memref<6x290xf32, #tpu.memory_space<vmem>>, vector<6x256xf32>
    %48 = vector.extract_strided_slice %25 {offsets = [0, 4], sizes = [6, 1], strides = [1, 1]} : vector<6x9xf32> to vector<6x1xf32>
    %49 = vector.broadcast %48 : vector<6x1xf32> to vector<6x256xf32>
    %50 = arith.mulf %47, %49 : vector<6x256xf32>
    %51 = arith.addf %46, %50 : vector<6x256xf32>
    %c0_34 = arith.constant 0 : index
    %c33 = arith.constant 33 : index
    %52 = vector.load %arg14[%c0_34, %c33] : memref<6x290xf32, #tpu.memory_space<vmem>>, vector<6x256xf32>
    %53 = vector.extract_strided_slice %25 {offsets = [0, 7], sizes = [6, 1], strides = [1, 1]} : vector<6x9xf32> to vector<6x1xf32>
    %54 = vector.broadcast %53 : vector<6x1xf32> to vector<6x256xf32>
    %55 = arith.mulf %52, %54 : vector<6x256xf32>
    %56 = arith.addf %51, %55 : vector<6x256xf32>
    %57 = arith.addf %42, %56 : vector<6x256xf32>
    %c0_35 = arith.constant 0 : index
    %c2 = arith.constant 2 : index
    %58 = vector.load %arg14[%c0_35, %c2] : memref<6x290xf32, #tpu.memory_space<vmem>>, vector<6x256xf32>
    %59 = vector.extract_strided_slice %25 {offsets = [0, 2], sizes = [6, 1], strides = [1, 1]} : vector<6x9xf32> to vector<6x1xf32>
    %60 = vector.broadcast %59 : vector<6x1xf32> to vector<6x256xf32>
    %61 = arith.mulf %58, %60 : vector<6x256xf32>
    %c0_36 = arith.constant 0 : index
    %c18 = arith.constant 18 : index
    %62 = vector.load %arg14[%c0_36, %c18] : memref<6x290xf32, #tpu.memory_space<vmem>>, vector<6x256xf32>
    %63 = vector.extract_strided_slice %25 {offsets = [0, 5], sizes = [6, 1], strides = [1, 1]} : vector<6x9xf32> to vector<6x1xf32>
    %64 = vector.broadcast %63 : vector<6x1xf32> to vector<6x256xf32>
    %65 = arith.mulf %62, %64 : vector<6x256xf32>
    %66 = arith.addf %61, %65 : vector<6x256xf32>
    %c0_37 = arith.constant 0 : index
    %c34 = arith.constant 34 : index
    %67 = vector.load %arg14[%c0_37, %c34] : memref<6x290xf32, #tpu.memory_space<vmem>>, vector<6x256xf32>
    %68 = vector.extract_strided_slice %25 {offsets = [0, 8], sizes = [6, 1], strides = [1, 1]} : vector<6x9xf32> to vector<6x1xf32>
    %69 = vector.broadcast %68 : vector<6x1xf32> to vector<6x256xf32>
    %70 = arith.mulf %67, %69 : vector<6x256xf32>
    %71 = arith.addf %66, %70 : vector<6x256xf32>
    %72 = vector.extract_strided_slice %14 {offsets = [1, 0], sizes = [1, 256], strides = [1, 1]} : vector<2x256xf32> to vector<1x256xf32>
    %73 = vector.broadcast %72 : vector<1x256xf32> to vector<6x256xf32>
    %74 = arith.mulf %71, %73 : vector<6x256xf32>
    %75 = arith.addf %57, %74 : vector<6x256xf32>
    %c0_38 = arith.constant 0 : index
    %c0_39 = arith.constant 0 : index
    %76 = vector.load %arg6[%c0_38, %c0_39] : memref<6x1xf32, #tpu.memory_space<vmem>>, vector<6x1xf32>
    %77 = vector.broadcast %76 : vector<6x1xf32> to vector<6x256xf32>
    %78 = arith.mulf %75, %77 : vector<6x256xf32>
    %c0_40 = arith.constant 0 : index
    %c0_41 = arith.constant 0 : index
    %79 = vector.load %arg7[%c0_40, %c0_41] : memref<6x1xf32, #tpu.memory_space<vmem>>, vector<6x1xf32>
    %80 = vector.broadcast %79 : vector<6x1xf32> to vector<6x256xf32>
    %81 = arith.addf %78, %80 : vector<6x256xf32>
    %c0_42 = arith.constant 0 : index
    %c0_43 = arith.constant 0 : index
    %82 = vector.load %arg12[%c0_42, %c0_43] : memref<256x64xf32, #tpu.memory_space<vmem>>, vector<256x64xf32>
    %cst_44 = arith.constant dense<0.000000e+00> : vector<6x64xf32>
    %83 = tpu.matmul %81, %82, %cst_44 {dimension_numbers = #tpu.dot_dimension_numbers<[1], [0], [0], [1], [0, 0, 1, 1], [], []>, precision = #tpu.contract_precision<fp32>} : vector<6x256xf32>, vector<256x64xf32>, vector<6x64xf32> -> vector<6x64xf32>
    %c0_45 = arith.constant 0 : index
    %c0_46 = arith.constant 0 : index
    %84 = vector.load %arg8[%c0_45, %c0_46] : memref<24x6xf32, #tpu.memory_space<vmem>>, vector<24x6xf32>
    %85 = arith.truncf %84 : vector<24x6xf32> to vector<24x6xbf16>
    %86 = arith.truncf %83 : vector<6x64xf32> to vector<6x64xbf16>
    %cst_47 = arith.constant dense<0.000000e+00> : vector<24x64xf32>
    %87 = tpu.matmul %85, %86, %cst_47 {dimension_numbers = #tpu.dot_dimension_numbers<[1], [0], [0], [1], [0, 0, 1, 1], [], []>} : vector<24x6xbf16>, vector<6x64xbf16>, vector<24x64xf32> -> vector<24x64xf32>
    %c0_48 = arith.constant 0 : index
    %c0_49 = arith.constant 0 : index
    %88 = vector.load %arg9[%c0_48, %c0_49] : memref<24x1xf32, #tpu.memory_space<vmem>>, vector<24x1xf32>
    %89 = vector.broadcast %88 : vector<24x1xf32> to vector<24x64xf32>
    %90 = arith.mulf %87, %89 : vector<24x64xf32>
    %c0_50 = arith.constant 0 : index
    %c0_51 = arith.constant 0 : index
    %91 = vector.load %arg10[%c0_50, %c0_51] : memref<24x1xf32, #tpu.memory_space<vmem>>, vector<24x1xf32>
    %92 = vector.broadcast %91 : vector<24x1xf32> to vector<24x64xf32>
    %93 = arith.addf %90, %92 : vector<24x64xf32>
    %c0_52 = arith.constant 0 : index
    %c0_53 = arith.constant 0 : index
    %94 = vector.load %arg15[%c0_52, %c0_53] : memref<8x290xf32, #tpu.memory_space<vmem>>, vector<8x256xf32>
    %c0_54 = arith.constant 0 : index
    %c16_55 = arith.constant 16 : index
    %95 = vector.load %arg15[%c0_54, %c16_55] : memref<8x290xf32, #tpu.memory_space<vmem>>, vector<8x256xf32>
    %96 = arith.addf %94, %95 : vector<8x256xf32>
    %c0_56 = arith.constant 0 : index
    %c32_57 = arith.constant 32 : index
    %97 = vector.load %arg15[%c0_56, %c32_57] : memref<8x290xf32, #tpu.memory_space<vmem>>, vector<8x256xf32>
    %98 = arith.addf %96, %97 : vector<8x256xf32>
    %99 = vector.extract_strided_slice %14 {offsets = [0, 0], sizes = [1, 256], strides = [1, 1]} : vector<2x256xf32> to vector<1x256xf32>
    %100 = vector.broadcast %99 : vector<1x256xf32> to vector<8x256xf32>
    %101 = arith.mulf %98, %100 : vector<8x256xf32>
    %c0_58 = arith.constant 0 : index
    %c1_59 = arith.constant 1 : index
    %102 = vector.load %arg15[%c0_58, %c1_59] : memref<8x290xf32, #tpu.memory_space<vmem>>, vector<8x256xf32>
    %c0_60 = arith.constant 0 : index
    %c17_61 = arith.constant 17 : index
    %103 = vector.load %arg15[%c0_60, %c17_61] : memref<8x290xf32, #tpu.memory_space<vmem>>, vector<8x256xf32>
    %104 = arith.addf %102, %103 : vector<8x256xf32>
    %c0_62 = arith.constant 0 : index
    %c33_63 = arith.constant 33 : index
    %105 = vector.load %arg15[%c0_62, %c33_63] : memref<8x290xf32, #tpu.memory_space<vmem>>, vector<8x256xf32>
    %106 = arith.addf %104, %105 : vector<8x256xf32>
    %107 = arith.addf %101, %106 : vector<8x256xf32>
    %c0_64 = arith.constant 0 : index
    %c2_65 = arith.constant 2 : index
    %108 = vector.load %arg15[%c0_64, %c2_65] : memref<8x290xf32, #tpu.memory_space<vmem>>, vector<8x256xf32>
    %c0_66 = arith.constant 0 : index
    %c18_67 = arith.constant 18 : index
    %109 = vector.load %arg15[%c0_66, %c18_67] : memref<8x290xf32, #tpu.memory_space<vmem>>, vector<8x256xf32>
    %110 = arith.addf %108, %109 : vector<8x256xf32>
    %c0_68 = arith.constant 0 : index
    %c34_69 = arith.constant 34 : index
    %111 = vector.load %arg15[%c0_68, %c34_69] : memref<8x290xf32, #tpu.memory_space<vmem>>, vector<8x256xf32>
    %112 = arith.addf %110, %111 : vector<8x256xf32>
    %113 = vector.extract_strided_slice %14 {offsets = [1, 0], sizes = [1, 256], strides = [1, 1]} : vector<2x256xf32> to vector<1x256xf32>
    %114 = vector.broadcast %113 : vector<1x256xf32> to vector<8x256xf32>
    %115 = arith.mulf %112, %114 : vector<8x256xf32>
    %116 = arith.addf %107, %115 : vector<8x256xf32>
    %cst_70 = arith.constant dense<0.000000e+00> : vector<8x64xf32>
    %117 = tpu.matmul %116, %82, %cst_70 {dimension_numbers = #tpu.dot_dimension_numbers<[1], [0], [0], [1], [0, 0, 1, 1], [], []>, precision = #tpu.contract_precision<fp32>} : vector<8x256xf32>, vector<256x64xf32>, vector<8x64xf32> -> vector<8x64xf32>
    %cst_71 = arith.constant 0.111111112 : f32
    %118 = vector.broadcast %cst_71 : f32 to vector<8x64xf32>
    %119 = arith.mulf %117, %118 : vector<8x64xf32>
    %cst_72 = arith.constant 0.000000e+00 : f32
    %120 = vector.broadcast %cst_72 : f32 to vector<24x64xf32>
    %121 = arith.maximumf %93, %120 : vector<24x64xf32>
    %c0_73 = arith.constant 0 : index
    %c0_74 = arith.constant 0 : index
    %c0_75 = arith.constant 0 : index
    %122 = vector.load %arg13[%c0_73, %c0_74, %c0_75] : memref<1x32x64xf32, #tpu.memory_space<vmem>>, vector<1x24x64xf32>
    %123 = vector.shape_cast %122 : vector<1x24x64xf32> to vector<24x64xf32>
    %124 = vector.shape_cast %121 : vector<24x64xf32> to vector<1x24x64xf32>
    tpu.vector_store %arg13[%c0_73, %c0_74, %c0_75], %124 {strides = array<i32>} : memref<1x32x64xf32, #tpu.memory_space<vmem>>, vector<1x24x64xf32>,
    %cst_76 = arith.constant 0.000000e+00 : f32
    %125 = vector.broadcast %cst_76 : f32 to vector<8x64xf32>
    %126 = arith.maximumf %119, %125 : vector<8x64xf32>
    %c0_77 = arith.constant 0 : index
    %c24 = arith.constant 24 : index
    %c0_78 = arith.constant 0 : index
    %127 = vector.load %arg13[%c0_77, %c24, %c0_78] : memref<1x32x64xf32, #tpu.memory_space<vmem>>, vector<1x8x64xf32>
    %128 = vector.shape_cast %127 : vector<1x8x64xf32> to vector<8x64xf32>
    %129 = vector.shape_cast %126 : vector<8x64xf32> to vector<1x8x64xf32>
    tpu.vector_store %arg13[%c0_77, %c24, %c0_78], %129 {strides = array<i32>} : memref<1x32x64xf32, #tpu.memory_space<vmem>>, vector<1x8x64xf32>,
    return
  }
  func.func @transform_0(%arg0: i32) -> (i32, i32, i32) {
    %c0_i32 = arith.constant 0 : i32
    %c0_i32_0 = arith.constant 0 : i32
    %c0_i32_1 = arith.constant 0 : i32
    return %arg0, %c0_i32, %c0_i32_0 : i32, i32, i32
  }
  func.func @transform_1(%arg0: i32) -> (i32, i32) {
    %c0_i32 = arith.constant 0 : i32
    %c0_i32_0 = arith.constant 0 : i32
    %c0_i32_1 = arith.constant 0 : i32
    return %c0_i32, %c0_i32_0 : i32, i32
  }
  func.func @transform_2(%arg0: i32) -> (i32, i32) {
    %c0_i32 = arith.constant 0 : i32
    %c0_i32_0 = arith.constant 0 : i32
    %c0_i32_1 = arith.constant 0 : i32
    return %c0_i32, %c0_i32_0 : i32, i32
  }
  func.func @transform_3(%arg0: i32) -> (i32, i32) {
    %c0_i32 = arith.constant 0 : i32
    %c0_i32_0 = arith.constant 0 : i32
    %c0_i32_1 = arith.constant 0 : i32
    return %c0_i32, %c0_i32_0 : i32, i32
  }
  func.func @transform_4(%arg0: i32) -> (i32, i32) {
    %c0_i32 = arith.constant 0 : i32
    %c0_i32_0 = arith.constant 0 : i32
    %c0_i32_1 = arith.constant 0 : i32
    return %c0_i32, %c0_i32_0 : i32, i32
  }
  func.func @transform_5(%arg0: i32) -> (i32, i32) {
    %c0_i32 = arith.constant 0 : i32
    %c0_i32_0 = arith.constant 0 : i32
    %c0_i32_1 = arith.constant 0 : i32
    return %c0_i32, %c0_i32_0 : i32, i32
  }
  func.func @transform_6(%arg0: i32) -> (i32, i32) {
    %c0_i32 = arith.constant 0 : i32
    %c0_i32_0 = arith.constant 0 : i32
    %c0_i32_1 = arith.constant 0 : i32
    return %c0_i32, %c0_i32_0 : i32, i32
  }
  func.func @transform_7(%arg0: i32) -> (i32, i32) {
    %c0_i32 = arith.constant 0 : i32
    %c0_i32_0 = arith.constant 0 : i32
    %c0_i32_1 = arith.constant 0 : i32
    return %c0_i32, %c0_i32_0 : i32, i32
  }
  func.func @transform_8(%arg0: i32) -> (i32, i32) {
    %c0_i32 = arith.constant 0 : i32
    %c0_i32_0 = arith.constant 0 : i32
    %c0_i32_1 = arith.constant 0 : i32
    return %c0_i32, %c0_i32_0 : i32, i32
  }
  func.func @transform_9(%arg0: i32) -> (i32, i32) {
    %c0_i32 = arith.constant 0 : i32
    %c0_i32_0 = arith.constant 0 : i32
    %c0_i32_1 = arith.constant 0 : i32
    return %c0_i32, %c0_i32_0 : i32, i32
  }
  func.func @transform_10(%arg0: i32) -> (i32, i32) {
    %c0_i32 = arith.constant 0 : i32
    %c0_i32_0 = arith.constant 0 : i32
    %c0_i32_1 = arith.constant 0 : i32
    return %c0_i32, %c0_i32_0 : i32, i32
  }
  func.func @transform_11(%arg0: i32) -> (i32, i32) {
    %c0_i32 = arith.constant 0 : i32
    %c0_i32_0 = arith.constant 0 : i32
    %c0_i32_1 = arith.constant 0 : i32
    return %c0_i32, %c0_i32_0 : i32, i32
  }
  func.func @transform_12(%arg0: i32) -> (i32, i32, i32) {
    %c0_i32 = arith.constant 0 : i32
    %c0_i32_0 = arith.constant 0 : i32
    %c0_i32_1 = arith.constant 0 : i32
    return %arg0, %c0_i32, %c0_i32_0 : i32, i32, i32
  }
}

module attributes {stable_mosaic.version = 11 : i64} {
  func.func @_block_s1_kernel(%arg0: i32, %arg1: memref<1x32x64xf32, #tpu.memory_space<vmem>>, %arg2: memref<8x32xf32, #tpu.memory_space<vmem>>, %arg3: memref<8x1xf32, #tpu.memory_space<vmem>>, %arg4: memref<8x1xf32, #tpu.memory_space<vmem>>, %arg5: memref<8x9xf32, #tpu.memory_space<vmem>>, %arg6: memref<8x1xf32, #tpu.memory_space<vmem>>, %arg7: memref<8x1xf32, #tpu.memory_space<vmem>>, %arg8: memref<32x8xf32, #tpu.memory_space<vmem>>, %arg9: memref<32x1xf32, #tpu.memory_space<vmem>>, %arg10: memref<32x1xf32, #tpu.memory_space<vmem>>, %arg11: memref<2x64xf32, #tpu.memory_space<vmem>>, %arg12: memref<1x32x64xf32, #tpu.memory_space<vmem>>, %arg13: memref<8x82xf32, #tpu.memory_space<vmem>>) attributes {dimension_semantics = [#tpu.dimension_semantics<parallel>], iteration_bounds = array<i64: 2>, scalar_prefetch = 0 : i64, scratch_operands = 1 : i64, tpu.core_type = #tpu.core_type<tc>, window_params = [{transform_indices = @transform_0, window_bounds = array<i64: 1, 32, 64>}, {pipeline_mode = #tpu.pipeline_mode<synchronous>, transform_indices = @transform_1, window_bounds = array<i64: 8, 32>}, {pipeline_mode = #tpu.pipeline_mode<synchronous>, transform_indices = @transform_2, window_bounds = array<i64: 8, 1>}, {pipeline_mode = #tpu.pipeline_mode<synchronous>, transform_indices = @transform_3, window_bounds = array<i64: 8, 1>}, {pipeline_mode = #tpu.pipeline_mode<synchronous>, transform_indices = @transform_4, window_bounds = array<i64: 8, 9>}, {pipeline_mode = #tpu.pipeline_mode<synchronous>, transform_indices = @transform_5, window_bounds = array<i64: 8, 1>}, {pipeline_mode = #tpu.pipeline_mode<synchronous>, transform_indices = @transform_6, window_bounds = array<i64: 8, 1>}, {pipeline_mode = #tpu.pipeline_mode<synchronous>, transform_indices = @transform_7, window_bounds = array<i64: 32, 8>}, {pipeline_mode = #tpu.pipeline_mode<synchronous>, transform_indices = @transform_8, window_bounds = array<i64: 32, 1>}, {pipeline_mode = #tpu.pipeline_mode<synchronous>, transform_indices = @transform_9, window_bounds = array<i64: 32, 1>}, {pipeline_mode = #tpu.pipeline_mode<synchronous>, transform_indices = @transform_10, window_bounds = array<i64: 2, 64>}, {transform_indices = @transform_11, window_bounds = array<i64: 1, 32, 64>}]} {
    %c0 = arith.constant 0 : index
    %c0_0 = arith.constant 0 : index
    %c0_1 = arith.constant 0 : index
    %0 = vector.load %arg1[%c0, %c0_0, %c0_1] : memref<1x32x64xf32, #tpu.memory_space<vmem>>, vector<1x32x64xf32>
    %1 = vector.shape_cast %0 : vector<1x32x64xf32> to vector<32x64xf32>
    %c0_2 = arith.constant 0 : index
    %c0_3 = arith.constant 0 : index
    %2 = vector.load %arg2[%c0_2, %c0_3] : memref<8x32xf32, #tpu.memory_space<vmem>>, vector<8x32xf32>
    %3 = arith.truncf %2 : vector<8x32xf32> to vector<8x32xbf16>
    %4 = arith.truncf %1 : vector<32x64xf32> to vector<32x64xbf16>
    %cst = arith.constant dense<0.000000e+00> : vector<8x64xf32>
    %5 = tpu.matmul %3, %4, %cst {dimension_numbers = #tpu.dot_dimension_numbers<[1], [0], [0], [1], [0, 0, 1, 1], [], []>} : vector<8x32xbf16>, vector<32x64xbf16>, vector<8x64xf32> -> vector<8x64xf32>
    %c0_4 = arith.constant 0 : index
    %c0_5 = arith.constant 0 : index
    %6 = vector.load %arg3[%c0_4, %c0_5] : memref<8x1xf32, #tpu.memory_space<vmem>>, vector<8x1xf32>
    %7 = vector.broadcast %6 : vector<8x1xf32> to vector<8x64xf32>
    %8 = arith.mulf %5, %7 : vector<8x64xf32>
    %c0_6 = arith.constant 0 : index
    %c0_7 = arith.constant 0 : index
    %9 = vector.load %arg4[%c0_6, %c0_7] : memref<8x1xf32, #tpu.memory_space<vmem>>, vector<8x1xf32>
    %10 = vector.broadcast %9 : vector<8x1xf32> to vector<8x64xf32>
    %11 = arith.addf %8, %10 : vector<8x64xf32>
    %cst_8 = arith.constant 0.000000e+00 : f32
    %12 = vector.broadcast %cst_8 : f32 to vector<8x64xf32>
    %13 = arith.maximumf %11, %12 : vector<8x64xf32>
    %cst_9 = arith.constant 0.000000e+00 : f32
    %14 = vector.broadcast %cst_9 : f32 to vector<8x9xf32>
    %c0_10 = arith.constant 0 : index
    %c0_11 = arith.constant 0 : index
    %15 = vector.load %arg13[%c0_10, %c0_11] : memref<8x82xf32, #tpu.memory_space<vmem>>, vector<8x9xf32>
    tpu.vector_store %arg13[%c0_10, %c0_11], %14 {strides = array<i32>} : memref<8x82xf32, #tpu.memory_space<vmem>>, vector<8x9xf32>,
    %cst_12 = arith.constant 0.000000e+00 : f32
    %16 = vector.broadcast %cst_12 : f32 to vector<8x9xf32>
    %c0_13 = arith.constant 0 : index
    %c73 = arith.constant 73 : index
    %17 = vector.load %arg13[%c0_13, %c73] : memref<8x82xf32, #tpu.memory_space<vmem>>, vector<8x9xf32>
    tpu.vector_store %arg13[%c0_13, %c73], %16 {strides = array<i32>} : memref<8x82xf32, #tpu.memory_space<vmem>>, vector<8x9xf32>,
    %c0_14 = arith.constant 0 : index
    %c9 = arith.constant 9 : index
    %18 = vector.load %arg13[%c0_14, %c9] : memref<8x82xf32, #tpu.memory_space<vmem>>, vector<8x64xf32>
    tpu.vector_store %arg13[%c0_14, %c9], %13 {strides = array<i32>} : memref<8x82xf32, #tpu.memory_space<vmem>>, vector<8x64xf32>,
    %c0_15 = arith.constant 0 : index
    %c0_16 = arith.constant 0 : index
    %19 = vector.load %arg11[%c0_15, %c0_16] : memref<2x64xf32, #tpu.memory_space<vmem>>, vector<2x64xf32>
    %c0_17 = arith.constant 0 : index
    %c0_18 = arith.constant 0 : index
    %20 = vector.load %arg5[%c0_17, %c0_18] : memref<8x9xf32, #tpu.memory_space<vmem>>, vector<8x9xf32>
    %c0_19 = arith.constant 0 : index
    %c0_20 = arith.constant 0 : index
    %21 = vector.load %arg13[%c0_19, %c0_20] : memref<8x82xf32, #tpu.memory_space<vmem>>, vector<8x64xf32>
    %22 = vector.extract_strided_slice %20 {offsets = [0, 0], sizes = [8, 1], strides = [1, 1]} : vector<8x9xf32> to vector<8x1xf32>
    %23 = vector.broadcast %22 : vector<8x1xf32> to vector<8x64xf32>
    %24 = arith.mulf %21, %23 : vector<8x64xf32>
    %c0_21 = arith.constant 0 : index
    %c8 = arith.constant 8 : index
    %25 = vector.load %arg13[%c0_21, %c8] : memref<8x82xf32, #tpu.memory_space<vmem>>, vector<8x64xf32>
    %26 = vector.extract_strided_slice %20 {offsets = [0, 3], sizes = [8, 1], strides = [1, 1]} : vector<8x9xf32> to vector<8x1xf32>
    %27 = vector.broadcast %26 : vector<8x1xf32> to vector<8x64xf32>
    %28 = arith.mulf %25, %27 : vector<8x64xf32>
    %29 = arith.addf %24, %28 : vector<8x64xf32>
    %c0_22 = arith.constant 0 : index
    %c16 = arith.constant 16 : index
    %30 = vector.load %arg13[%c0_22, %c16] : memref<8x82xf32, #tpu.memory_space<vmem>>, vector<8x64xf32>
    %31 = vector.extract_strided_slice %20 {offsets = [0, 6], sizes = [8, 1], strides = [1, 1]} : vector<8x9xf32> to vector<8x1xf32>
    %32 = vector.broadcast %31 : vector<8x1xf32> to vector<8x64xf32>
    %33 = arith.mulf %30, %32 : vector<8x64xf32>
    %34 = arith.addf %29, %33 : vector<8x64xf32>
    %35 = vector.extract_strided_slice %19 {offsets = [0, 0], sizes = [1, 64], strides = [1, 1]} : vector<2x64xf32> to vector<1x64xf32>
    %36 = vector.broadcast %35 : vector<1x64xf32> to vector<8x64xf32>
    %37 = arith.mulf %34, %36 : vector<8x64xf32>
    %c0_23 = arith.constant 0 : index
    %c1 = arith.constant 1 : index
    %38 = vector.load %arg13[%c0_23, %c1] : memref<8x82xf32, #tpu.memory_space<vmem>>, vector<8x64xf32>
    %39 = vector.extract_strided_slice %20 {offsets = [0, 1], sizes = [8, 1], strides = [1, 1]} : vector<8x9xf32> to vector<8x1xf32>
    %40 = vector.broadcast %39 : vector<8x1xf32> to vector<8x64xf32>
    %41 = arith.mulf %38, %40 : vector<8x64xf32>
    %c0_24 = arith.constant 0 : index
    %c9_25 = arith.constant 9 : index
    %42 = vector.load %arg13[%c0_24, %c9_25] : memref<8x82xf32, #tpu.memory_space<vmem>>, vector<8x64xf32>
    %43 = vector.extract_strided_slice %20 {offsets = [0, 4], sizes = [8, 1], strides = [1, 1]} : vector<8x9xf32> to vector<8x1xf32>
    %44 = vector.broadcast %43 : vector<8x1xf32> to vector<8x64xf32>
    %45 = arith.mulf %42, %44 : vector<8x64xf32>
    %46 = arith.addf %41, %45 : vector<8x64xf32>
    %c0_26 = arith.constant 0 : index
    %c17 = arith.constant 17 : index
    %47 = vector.load %arg13[%c0_26, %c17] : memref<8x82xf32, #tpu.memory_space<vmem>>, vector<8x64xf32>
    %48 = vector.extract_strided_slice %20 {offsets = [0, 7], sizes = [8, 1], strides = [1, 1]} : vector<8x9xf32> to vector<8x1xf32>
    %49 = vector.broadcast %48 : vector<8x1xf32> to vector<8x64xf32>
    %50 = arith.mulf %47, %49 : vector<8x64xf32>
    %51 = arith.addf %46, %50 : vector<8x64xf32>
    %52 = arith.addf %37, %51 : vector<8x64xf32>
    %c0_27 = arith.constant 0 : index
    %c2 = arith.constant 2 : index
    %53 = vector.load %arg13[%c0_27, %c2] : memref<8x82xf32, #tpu.memory_space<vmem>>, vector<8x64xf32>
    %54 = vector.extract_strided_slice %20 {offsets = [0, 2], sizes = [8, 1], strides = [1, 1]} : vector<8x9xf32> to vector<8x1xf32>
    %55 = vector.broadcast %54 : vector<8x1xf32> to vector<8x64xf32>
    %56 = arith.mulf %53, %55 : vector<8x64xf32>
    %c0_28 = arith.constant 0 : index
    %c10 = arith.constant 10 : index
    %57 = vector.load %arg13[%c0_28, %c10] : memref<8x82xf32, #tpu.memory_space<vmem>>, vector<8x64xf32>
    %58 = vector.extract_strided_slice %20 {offsets = [0, 5], sizes = [8, 1], strides = [1, 1]} : vector<8x9xf32> to vector<8x1xf32>
    %59 = vector.broadcast %58 : vector<8x1xf32> to vector<8x64xf32>
    %60 = arith.mulf %57, %59 : vector<8x64xf32>
    %61 = arith.addf %56, %60 : vector<8x64xf32>
    %c0_29 = arith.constant 0 : index
    %c18 = arith.constant 18 : index
    %62 = vector.load %arg13[%c0_29, %c18] : memref<8x82xf32, #tpu.memory_space<vmem>>, vector<8x64xf32>
    %63 = vector.extract_strided_slice %20 {offsets = [0, 8], sizes = [8, 1], strides = [1, 1]} : vector<8x9xf32> to vector<8x1xf32>
    %64 = vector.broadcast %63 : vector<8x1xf32> to vector<8x64xf32>
    %65 = arith.mulf %62, %64 : vector<8x64xf32>
    %66 = arith.addf %61, %65 : vector<8x64xf32>
    %67 = vector.extract_strided_slice %19 {offsets = [1, 0], sizes = [1, 64], strides = [1, 1]} : vector<2x64xf32> to vector<1x64xf32>
    %68 = vector.broadcast %67 : vector<1x64xf32> to vector<8x64xf32>
    %69 = arith.mulf %66, %68 : vector<8x64xf32>
    %70 = arith.addf %52, %69 : vector<8x64xf32>
    %c0_30 = arith.constant 0 : index
    %c0_31 = arith.constant 0 : index
    %71 = vector.load %arg6[%c0_30, %c0_31] : memref<8x1xf32, #tpu.memory_space<vmem>>, vector<8x1xf32>
    %72 = vector.broadcast %71 : vector<8x1xf32> to vector<8x64xf32>
    %73 = arith.mulf %70, %72 : vector<8x64xf32>
    %c0_32 = arith.constant 0 : index
    %c0_33 = arith.constant 0 : index
    %74 = vector.load %arg7[%c0_32, %c0_33] : memref<8x1xf32, #tpu.memory_space<vmem>>, vector<8x1xf32>
    %75 = vector.broadcast %74 : vector<8x1xf32> to vector<8x64xf32>
    %76 = arith.addf %73, %75 : vector<8x64xf32>
    %c0_34 = arith.constant 0 : index
    %c0_35 = arith.constant 0 : index
    %77 = vector.load %arg8[%c0_34, %c0_35] : memref<32x8xf32, #tpu.memory_space<vmem>>, vector<32x8xf32>
    %78 = arith.truncf %77 : vector<32x8xf32> to vector<32x8xbf16>
    %79 = arith.truncf %76 : vector<8x64xf32> to vector<8x64xbf16>
    %cst_36 = arith.constant dense<0.000000e+00> : vector<32x64xf32>
    %80 = tpu.matmul %78, %79, %cst_36 {dimension_numbers = #tpu.dot_dimension_numbers<[1], [0], [0], [1], [0, 0, 1, 1], [], []>} : vector<32x8xbf16>, vector<8x64xbf16>, vector<32x64xf32> -> vector<32x64xf32>
    %c0_37 = arith.constant 0 : index
    %c0_38 = arith.constant 0 : index
    %81 = vector.load %arg9[%c0_37, %c0_38] : memref<32x1xf32, #tpu.memory_space<vmem>>, vector<32x1xf32>
    %82 = vector.broadcast %81 : vector<32x1xf32> to vector<32x64xf32>
    %83 = arith.mulf %80, %82 : vector<32x64xf32>
    %c0_39 = arith.constant 0 : index
    %c0_40 = arith.constant 0 : index
    %84 = vector.load %arg10[%c0_39, %c0_40] : memref<32x1xf32, #tpu.memory_space<vmem>>, vector<32x1xf32>
    %85 = vector.broadcast %84 : vector<32x1xf32> to vector<32x64xf32>
    %86 = arith.addf %83, %85 : vector<32x64xf32>
    %87 = arith.addf %86, %1 : vector<32x64xf32>
    %cst_41 = arith.constant 0.000000e+00 : f32
    %88 = vector.broadcast %cst_41 : f32 to vector<32x64xf32>
    %89 = arith.maximumf %87, %88 : vector<32x64xf32>
    %c0_42 = arith.constant 0 : index
    %c0_43 = arith.constant 0 : index
    %c0_44 = arith.constant 0 : index
    %90 = vector.load %arg12[%c0_42, %c0_43, %c0_44] : memref<1x32x64xf32, #tpu.memory_space<vmem>>, vector<1x32x64xf32>
    %91 = vector.shape_cast %90 : vector<1x32x64xf32> to vector<32x64xf32>
    %92 = vector.shape_cast %89 : vector<32x64xf32> to vector<1x32x64xf32>
    tpu.vector_store %arg12[%c0_42, %c0_43, %c0_44], %92 {strides = array<i32>} : memref<1x32x64xf32, #tpu.memory_space<vmem>>, vector<1x32x64xf32>,
    return
  }
  func.func @transform_0(%arg0: i32) -> (i32, i32, i32) {
    %c0_i32 = arith.constant 0 : i32
    %c0_i32_0 = arith.constant 0 : i32
    %c0_i32_1 = arith.constant 0 : i32
    return %arg0, %c0_i32, %c0_i32_0 : i32, i32, i32
  }
  func.func @transform_1(%arg0: i32) -> (i32, i32) {
    %c0_i32 = arith.constant 0 : i32
    %c0_i32_0 = arith.constant 0 : i32
    %c0_i32_1 = arith.constant 0 : i32
    return %c0_i32, %c0_i32_0 : i32, i32
  }
  func.func @transform_2(%arg0: i32) -> (i32, i32) {
    %c0_i32 = arith.constant 0 : i32
    %c0_i32_0 = arith.constant 0 : i32
    %c0_i32_1 = arith.constant 0 : i32
    return %c0_i32, %c0_i32_0 : i32, i32
  }
  func.func @transform_3(%arg0: i32) -> (i32, i32) {
    %c0_i32 = arith.constant 0 : i32
    %c0_i32_0 = arith.constant 0 : i32
    %c0_i32_1 = arith.constant 0 : i32
    return %c0_i32, %c0_i32_0 : i32, i32
  }
  func.func @transform_4(%arg0: i32) -> (i32, i32) {
    %c0_i32 = arith.constant 0 : i32
    %c0_i32_0 = arith.constant 0 : i32
    %c0_i32_1 = arith.constant 0 : i32
    return %c0_i32, %c0_i32_0 : i32, i32
  }
  func.func @transform_5(%arg0: i32) -> (i32, i32) {
    %c0_i32 = arith.constant 0 : i32
    %c0_i32_0 = arith.constant 0 : i32
    %c0_i32_1 = arith.constant 0 : i32
    return %c0_i32, %c0_i32_0 : i32, i32
  }
  func.func @transform_6(%arg0: i32) -> (i32, i32) {
    %c0_i32 = arith.constant 0 : i32
    %c0_i32_0 = arith.constant 0 : i32
    %c0_i32_1 = arith.constant 0 : i32
    return %c0_i32, %c0_i32_0 : i32, i32
  }
  func.func @transform_7(%arg0: i32) -> (i32, i32) {
    %c0_i32 = arith.constant 0 : i32
    %c0_i32_0 = arith.constant 0 : i32
    %c0_i32_1 = arith.constant 0 : i32
    return %c0_i32, %c0_i32_0 : i32, i32
  }
  func.func @transform_8(%arg0: i32) -> (i32, i32) {
    %c0_i32 = arith.constant 0 : i32
    %c0_i32_0 = arith.constant 0 : i32
    %c0_i32_1 = arith.constant 0 : i32
    return %c0_i32, %c0_i32_0 : i32, i32
  }
  func.func @transform_9(%arg0: i32) -> (i32, i32) {
    %c0_i32 = arith.constant 0 : i32
    %c0_i32_0 = arith.constant 0 : i32
    %c0_i32_1 = arith.constant 0 : i32
    return %c0_i32, %c0_i32_0 : i32, i32
  }
  func.func @transform_10(%arg0: i32) -> (i32, i32) {
    %c0_i32 = arith.constant 0 : i32
    %c0_i32_0 = arith.constant 0 : i32
    %c0_i32_1 = arith.constant 0 : i32
    return %c0_i32, %c0_i32_0 : i32, i32
  }
  func.func @transform_11(%arg0: i32) -> (i32, i32, i32) {
    %c0_i32 = arith.constant 0 : i32
    %c0_i32_0 = arith.constant 0 : i32
    %c0_i32_1 = arith.constant 0 : i32
    return %arg0, %c0_i32, %c0_i32_0 : i32, i32, i32
  }
}

</mosaic_0001>

<llo_original>
// kernel: _lambda_.3
$region0: #{_lambda_.3}
  #allocation0 [shape = 'u32[]', space=smem, size = 0x4, offset = 0x4, fixed_abs, tag = 'smem constant byte address 0x4 - core index']
  #allocation1 [shape = 'u32[144,128]{1,0:T(1,128)}', space=vmem, size = 0x12000, scoped, tag = 'internal scratch']
  #allocation2 [shape = 'f32[8,82]{1,0:T(8,128)}', space=vmem, size = 0x1000, scoped, tag = 'scratch operand']
  %s0 = inlined_call_operand.vmem [shape: f32[2,32,64], index: 0, kind: input, shape index: {}]
  %s1 = inlined_call_operand.vmem [shape: f32[8,32], index: 1, kind: input, shape index: {}]
  %s2 = inlined_call_operand.vmem [shape: f32[8,1], index: 2, kind: input, shape index: {}]
  %s3 = inlined_call_operand.vmem [shape: f32[8,1], index: 3, kind: input, shape index: {}]
  %s4 = inlined_call_operand.vmem [shape: f32[8,9], index: 4, kind: input, shape index: {}]
  %s5 = inlined_call_operand.vmem [shape: f32[8,1], index: 5, kind: input, shape index: {}]
  %s6 = inlined_call_operand.vmem [shape: f32[8,1], index: 6, kind: input, shape index: {}]
  %s7 = inlined_call_operand.vmem [shape: f32[32,8], index: 7, kind: input, shape index: {}]
  %s8 = inlined_call_operand.vmem [shape: f32[32,1], index: 8, kind: input, shape index: {}]
  %s9 = inlined_call_operand.vmem [shape: f32[32,1], index: 9, kind: input, shape index: {}]
  %s10 = inlined_call_operand.vmem [shape: f32[2,64], index: 10, kind: input, shape index: {}]
  %s11 = inlined_call_operand.vmem [shape: f32[2,32,64], index: 11, kind: output, shape index: {}]
  %s12 = sld [smem:[#allocation0]]
  $region77: #{_lambda_.3} parent=0
    _
  %s14 = ssub.s32 1, %s12
  %s15 = scalar_select 0, %s14, %s12
  loop: start=0, step=1, limit=4
  $region2: #{_lambda_.3} parent=0 // loop_pre_header
    _
  $region3: #{_lambda_.3} parent=0 // loop_header
    %s17 = sphi 0, %s21
    %p18 = scmp.ge.s32.totalorder %s17, 4
    %s27 = sphi 0, %s29
    %s30 = sphi 0, %s27
    %s31 = sphi 0, %s30
    %s47 = sphi 0, %s31
    %s51 = sphi 0, %s51
    %s53 = sphi 0, %s51
    %s54 = sphi 0, %s53
    %s68 = sphi 0, %s54
    %s72 = sphi 0, %s72
    %s74 = sphi 0, %s72
    %s75 = sphi 0, %s74
    %s89 = sphi 0, %s75
    %s93 = sphi 0, %s93
    %s95 = sphi 0, %s93
    %s96 = sphi 0, %s95
    %s110 = sphi 0, %s96
    %s114 = sphi 0, %s114
    %s116 = sphi 0, %s114
    %s117 = sphi 0, %s116
    %s131 = sphi 0, %s117
    %s135 = sphi 0, %s135
    %s137 = sphi 0, %s135
    %s138 = sphi 0, %s137
    %s152 = sphi 0, %s138
    %s156 = sphi 0, %s156
    %s158 = sphi 0, %s156
    %s159 = sphi 0, %s158
    %s173 = sphi 0, %s159
    %s177 = sphi 0, %s177
    %s179 = sphi 0, %s177
    %s180 = sphi 0, %s179
    %s194 = sphi 0, %s180
    %s198 = sphi 0, %s198
    %s200 = sphi 0, %s198
    %s201 = sphi 0, %s200
    %s215 = sphi 0, %s201
    %s219 = sphi 0, %s219
    %s221 = sphi 0, %s219
    %s222 = sphi 0, %s221
    %s236 = sphi 0, %s222
    %s240 = sphi 0, %s240
    %s242 = sphi 0, %s240
    %s243 = sphi 0, %s242
    %s257 = sphi 0, %s243
    %s263 = sphi 0, %s265
    %s266 = sphi 0, %s263
    %s267 = sphi 0, %s266
    %s283 = sphi 0, %s267
  $region4: #{_lambda_.3} parent=0 // loop_header_branch
    %20 = sbr.rel (%p18) target = $region8
  $region5: #{_lambda_.3} parent=0 // loop_body
    %s22 = ssub.s32 %s17, 1
    %s23 = ssub.s32 %s17, 2
    %s24 = sadd.s32 %s17, 1
    %s25 = ssub.s32 %s17, %s24
    %p26 = scmp.eq.s32.totalorder %s25, 0
    %s28 = sadd.s32 %s27, 1
    %s29 = scalar_select %p26, %s27, %s28
    %p32 = pneg %p26
    %p33 = scmp.eq.s32.totalorder %s17, 1
    %p34 = por %p32, %p33
    %p35 = scmp.ne.s32.totalorder %s27, %s30
    %p36 = scmp.eq.s32.totalorder %s17, 0
    %p37 = por %p35, %p36
    %p38 = scmp.ne.s32.totalorder %s27, %s30
    %p39 = scmp.eq.s32.totalorder %s22, 1
    %p40 = por %p38, %p39
    %p41 = scmp.ne.s32.totalorder %s30, %s31
    %p42 = scmp.eq.s32.totalorder %s22, 0
    %p43 = por %p41, %p42
    %p44 = scmp.ne.s32.totalorder %s30, %s31
    %p45 = scmp.eq.s32.totalorder %s23, 1
    %p46 = por %p44, %p45
    %p48 = scmp.ne.s32.totalorder %s31, %s47
    %p49 = scmp.eq.s32.totalorder %s23, 0
    %p50 = por %p48, %p49
    %s52 = sadd.s32 %s51, 1
    %p55 = scmp.eq.s32.totalorder %s17, 1
    %p56 = scmp.ne.s32.totalorder %s51, %s53
    %p57 = scmp.eq.s32.totalorder %s17, 0
    %p58 = por %p56, %p57
    %p59 = scmp.ne.s32.totalorder %s51, %s53
    %p60 = scmp.eq.s32.totalorder %s22, 1
    %p61 = por %p59, %p60
    %p62 = scmp.ne.s32.totalorder %s53, %s54
    %p63 = scmp.eq.s32.totalorder %s22, 0
    %p64 = por %p62, %p63
    %p65 = scmp.ne.s32.totalorder %s53, %s54
    %p66 = scmp.eq.s32.totalorder %s23, 1
    %p67 = por %p65, %p66
    %p69 = scmp.ne.s32.totalorder %s54, %s68
    %p70 = scmp.eq.s32.totalorder %s23, 0
    %p71 = por %p69, %p70
    %s73 = sadd.s32 %s72, 1
    %p76 = scmp.eq.s32.totalorder %s17, 1
    %p77 = scmp.ne.s32.totalorder %s72, %s74
    %p78 = scmp.eq.s32.totalorder %s17, 0
    %p79 = por %p77, %p78
    %p80 = scmp.ne.s32.totalorder %s72, %s74
    %p81 = scmp.eq.s32.totalorder %s22, 1
    %p82 = por %p80, %p81
    %p83 = scmp.ne.s32.totalorder %s74, %s75
    %p84 = scmp.eq.s32.totalorder %s22, 0
    %p85 = por %p83, %p84
    %p86 = scmp.ne.s32.totalorder %s74, %s75
    %p87 = scmp.eq.s32.totalorder %s23, 1
    %p88 = por %p86, %p87
    %p90 = scmp.ne.s32.totalorder %s75, %s89
    %p91 = scmp.eq.s32.totalorder %s23, 0
    %p92 = por %p90, %p91
    %s94 = sadd.s32 %s93, 1
    %p97 = scmp.eq.s32.totalorder %s17, 1
    %p98 = scmp.ne.s32.totalorder %s93, %s95
    %p99 = scmp.eq.s32.totalorder %s17, 0
    %p100 = por %p98, %p99
    %p101 = scmp.ne.s32.totalorder %s93, %s95
    %p102 = scmp.eq.s32.totalorder %s22, 1
    %p103 = por %p101, %p102
    %p104 = scmp.ne.s32.totalorder %s95, %s96
    %p105 = scmp.eq.s32.totalorder %s22, 0
    %p106 = por %p104, %p105
    %p107 = scmp.ne.s32.totalorder %s95, %s96
    %p108 = scmp.eq.s32.totalorder %s23, 1
    %p109 = por %p107, %p108
    %p111 = scmp.ne.s32.totalorder %s96, %s110
    %p112 = scmp.eq.s32.totalorder %s23, 0
    %p113 = por %p111, %p112
    %s115 = sadd.s32 %s114, 1
    %p118 = scmp.eq.s32.totalorder %s17, 1
    %p119 = scmp.ne.s32.totalorder %s114, %s116
    %p120 = scmp.eq.s32.totalorder %s17, 0
    %p121 = por %p119, %p120
    %p122 = scmp.ne.s32.totalorder %s114, %s116
    %p123 = scmp.eq.s32.totalorder %s22, 1
    %p124 = por %p122, %p123
    %p125 = scmp.ne.s32.totalorder %s116, %s117
    %p126 = scmp.eq.s32.totalorder %s22, 0
    %p127 = por %p125, %p126
    %p128 = scmp.ne.s32.totalorder %s116, %s117
    %p129 = scmp.eq.s32.totalorder %s23, 1
    %p130 = por %p128, %p129
    %p132 = scmp.ne.s32.totalorder %s117, %s131
    %p133 = scmp.eq.s32.totalorder %s23, 0
    %p134 = por %p132, %p133
    %s136 = sadd.s32 %s135, 1
    %p139 = scmp.eq.s32.totalorder %s17, 1
    %p140 = scmp.ne.s32.totalorder %s135, %s137
    %p141 = scmp.eq.s32.totalorder %s17, 0
    %p142 = por %p140, %p141
    %p143 = scmp.ne.s32.totalorder %s135, %s137
    %p144 = scmp.eq.s32.totalorder %s22, 1
    %p145 = por %p143, %p144
    %p146 = scmp.ne.s32.totalorder %s137, %s138
    %p147 = scmp.eq.s32.totalorder %s22, 0
    %p148 = por %p146, %p147
    %p149 = scmp.ne.s32.totalorder %s137, %s138
    %p150 = scmp.eq.s32.totalorder %s23, 1
    %p151 = por %p149, %p150
    %p153 = scmp.ne.s32.totalorder %s138, %s152
    %p154 = scmp.eq.s32.totalorder %s23, 0
    %p155 = por %p153, %p154
    %s157 = sadd.s32 %s156, 1
    %p160 = scmp.eq.s32.totalorder %s17, 1
    %p161 = scmp.ne.s32.totalorder %s156, %s158
    %p162 = scmp.eq.s32.totalorder %s17, 0
    %p163 = por %p161, %p162
    %p164 = scmp.ne.s32.totalorder %s156, %s158
    %p165 = scmp.eq.s32.totalorder %s22, 1
    %p166 = por %p164, %p165
    %p167 = scmp.ne.s32.totalorder %s158, %s159
    %p168 = scmp.eq.s32.totalorder %s22, 0
    %p169 = por %p167, %p168
    %p170 = scmp.ne.s32.totalorder %s158, %s159
    %p171 = scmp.eq.s32.totalorder %s23, 1
    %p172 = por %p170, %p171
    %p174 = scmp.ne.s32.totalorder %s159, %s173
    %p175 = scmp.eq.s32.totalorder %s23, 0
    %p176 = por %p174, %p175
    %s178 = sadd.s32 %s177, 1
    %p181 = scmp.eq.s32.totalorder %s17, 1
    %p182 = scmp.ne.s32.totalorder %s177, %s179
    %p183 = scmp.eq.s32.totalorder %s17, 0
    %p184 = por %p182, %p183
    %p185 = scmp.ne.s32.totalorder %s177, %s179
    %p186 = scmp.eq.s32.totalorder %s22, 1
    %p187 = por %p185, %p186
    %p188 = scmp.ne.s32.totalorder %s179, %s180
    %p189 = scmp.eq.s32.totalorder %s22, 0
    %p190 = por %p188, %p189
    %p191 = scmp.ne.s32.totalorder %s179, %s180
    %p192 = scmp.eq.s32.totalorder %s23, 1
    %p193 = por %p191, %p192
    %p195 = scmp.ne.s32.totalorder %s180, %s194
    %p196 = scmp.eq.s32.totalorder %s23, 0
    %p197 = por %p195, %p196
    %s199 = sadd.s32 %s198, 1
    %p202 = scmp.eq.s32.totalorder %s17, 1
    %p203 = scmp.ne.s32.totalorder %s198, %s200
    %p204 = scmp.eq.s32.totalorder %s17, 0
    %p205 = por %p203, %p204
    %p206 = scmp.ne.s32.totalorder %s198, %s200
    %p207 = scmp.eq.s32.totalorder %s22, 1
    %p208 = por %p206, %p207
    %p209 = scmp.ne.s32.totalorder %s200, %s201
    %p210 = scmp.eq.s32.totalorder %s22, 0
    %p211 = por %p209, %p210
    %p212 = scmp.ne.s32.totalorder %s200, %s201
    %p213 = scmp.eq.s32.totalorder %s23, 1
    %p214 = por %p212, %p213
    %p216 = scmp.ne.s32.totalorder %s201, %s215
    %p217 = scmp.eq.s32.totalorder %s23, 0
    %p218 = por %p216, %p217
    %s220 = sadd.s32 %s219, 1
    %p223 = scmp.eq.s32.totalorder %s17, 1
    %p224 = scmp.ne.s32.totalorder %s219, %s221
    %p225 = scmp.eq.s32.totalorder %s17, 0
    %p226 = por %p224, %p225
    %p227 = scmp.ne.s32.totalorder %s219, %s221
    %p228 = scmp.eq.s32.totalorder %s22, 1
    %p229 = por %p227, %p228
    %p230 = scmp.ne.s32.totalorder %s221, %s222
    %p231 = scmp.eq.s32.totalorder %s22, 0
    %p232 = por %p230, %p231
    %p233 = scmp.ne.s32.totalorder %s221, %s222
    %p234 = scmp.eq.s32.totalorder %s23, 1
    %p235 = por %p233, %p234
    %p237 = scmp.ne.s32.totalorder %s222, %s236
    %p238 = scmp.eq.s32.totalorder %s23, 0
    %p239 = por %p237, %p238
    %s241 = sadd.s32 %s240, 1
    %p244 = scmp.eq.s32.totalorder %s17, 1
    %p245 = scmp.ne.s32.totalorder %s240, %s242
    %p246 = scmp.eq.s32.totalorder %s17, 0
    %p247 = por %p245, %p246
    %p248 = scmp.ne.s32.totalorder %s240, %s242
    %p249 = scmp.eq.s32.totalorder %s22, 1
    %p250 = por %p248, %p249
    %p251 = scmp.ne.s32.totalorder %s242, %s243
    %p252 = scmp.eq.s32.totalorder %s22, 0
    %p253 = por %p251, %p252
    %p254 = scmp.ne.s32.totalorder %s242, %s243
    %p255 = scmp.eq.s32.totalorder %s23, 1
    %p256 = por %p254, %p255
    %p258 = scmp.ne.s32.totalorder %s243, %s257
    %p259 = scmp.eq.s32.totalorder %s23, 0
    %p260 = por %p258, %p259
    %s261 = ssub.s32 %s17, %s24
    %p262 = scmp.eq.s32.totalorder %s261, 0
    %s264 = sadd.s32 %s263, 1
    %s265 = scalar_select %p262, %s263, %s264
    %p268 = pneg %p262
    %p269 = scmp.eq.s32.totalorder %s17, 1
    %p270 = por %p268, %p269
    %p271 = scmp.ne.s32.totalorder %s263, %s266
    %p272 = scmp.eq.s32.totalorder %s17, 0
    %p273 = por %p271, %p272
    %p274 = scmp.ne.s32.totalorder %s263, %s266
    %p275 = scmp.eq.s32.totalorder %s22, 1
    %p276 = por %p274, %p275
    %p277 = scmp.ne.s32.totalorder %s266, %s267
    %p278 = scmp.eq.s32.totalorder %s22, 0
    %p279 = por %p277, %p278
    %p280 = scmp.ne.s32.totalorder %s266, %s267
    %p281 = scmp.eq.s32.totalorder %s23, 1
    %p282 = por %p280, %p281
    %p284 = scmp.ne.s32.totalorder %s267, %s283
    %p285 = scmp.eq.s32.totalorder %s23, 0
    %p286 = por %p284, %p285
    %p287 = scmp.le.s32.totalorder 1, %s17
    %p288 = scmp.lt.s32.totalorder %s17, 3
    %p289 = pnand %p287, %p288
    %p290 = pneg %p289
    // Predicated region
    $region9: #{_lambda_.3} parent=5 // pred_check
      _
    $region10: #{_lambda_.3} parent=5 // pred_check_branch
      %292 = sbr.rel (%p289) target = $region12
    $region11: #{_lambda_.3} parent=5 // pred_region
      %s293 = ssub.s32 %s17, 1
      // Predicated region
      $region13: #{_lambda_.3} parent=11 // pred_check
        %p294 = pneg %p64
      $region14: #{_lambda_.3} parent=11 // pred_check_branch
        %296 = sbr.rel (%p294) target = $region16
      $region15: #{_lambda_.3} parent=11 // pred_region
        _
      $region16: #{_lambda_.3} parent=11 // pred_fallthru
        _
      // Predicated region
      $region17: #{_lambda_.3} parent=11 // pred_check
        %p297 = pneg %p85
      $region18: #{_lambda_.3} parent=11 // pred_check_branch
        %299 = sbr.rel (%p297) target = $region20
      $region19: #{_lambda_.3} parent=11 // pred_region
        _
      $region20: #{_lambda_.3} parent=11 // pred_fallthru
        _
      // Predicated region
      $region21: #{_lambda_.3} parent=11 // pred_check
        %p300 = pneg %p106
      $region22: #{_lambda_.3} parent=11 // pred_check_branch
        %302 = sbr.rel (%p300) target = $region24
      $region23: #{_lambda_.3} parent=11 // pred_region
        _
      $region24: #{_lambda_.3} parent=11 // pred_fallthru
        _
      // Predicated region
      $region25: #{_lambda_.3} parent=11 // pred_check
        %p303 = pneg %p127
      $region26: #{_lambda_.3} parent=11 // pred_check_branch
        %305 = sbr.rel (%p303) target = $region28
      $region27: #{_lambda_.3} parent=11 // pred_region
        _
      $region28: #{_lambda_.3} parent=11 // pred_fallthru
        _
      // Predicated region
      $region29: #{_lambda_.3} parent=11 // pred_check
        %p306 = pneg %p148
      $region30: #{_lambda_.3} parent=11 // pred_check_branch
        %308 = sbr.rel (%p306) target = $region32
      $region31: #{_lambda_.3} parent=11 // pred_region
        _
      $region32: #{_lambda_.3} parent=11 // pred_fallthru
        _
      // Predicated region
      $region33: #{_lambda_.3} parent=11 // pred_check
        %p309 = pneg %p169
      $region34: #{_lambda_.3} parent=11 // pred_check_branch
        %311 = sbr.rel (%p309) target = $region36
      $region35: #{_lambda_.3} parent=11 // pred_region
        _
      $region36: #{_lambda_.3} parent=11 // pred_fallthru
        _
      // Predicated region
      $region37: #{_lambda_.3} parent=11 // pred_check
        %p312 = pneg %p190
      $region38: #{_lambda_.3} parent=11 // pred_check_branch
        %314 = sbr.rel (%p312) target = $region40
      $region39: #{_lambda_.3} parent=11 // pred_region
        _
      $region40: #{_lambda_.3} parent=11 // pred_fallthru
        _
      // Predicated region
      $region41: #{_lambda_.3} parent=11 // pred_check
        %p315 = pneg %p211
      $region42: #{_lambda_.3} parent=11 // pred_check_branch
        %317 = sbr.rel (%p315) target = $region44
      $region43: #{_lambda_.3} parent=11 // pred_region
        _
      $region44: #{_lambda_.3} parent=11 // pred_fallthru
        _
      // Predicated region
      $region45: #{_lambda_.3} parent=11 // pred_check
        %p318 = pneg %p232
      $region46: #{_lambda_.3} parent=11 // pred_check_branch
        %320 = sbr.rel (%p318) target = $region48
      $region47: #{_lambda_.3} parent=11 // pred_region
        _
      $region48: #{_lambda_.3} parent=11 // pred_fallthru
        _
      // Predicated region
      $region49: #{_lambda_.3} parent=11 // pred_check
        %p321 = pneg %p253
      $region50: #{_lambda_.3} parent=11 // pred_check_branch
        %323 = sbr.rel (%p321) target = $region52
      $region51: #{_lambda_.3} parent=11 // pred_region
        _
      $region52: #{_lambda_.3} parent=11 // pred_fallthru
        _
    $region12: #{_lambda_.3} parent=5 // pred_fallthru
      _
    %p324 = scmp.lt.s32.totalorder %s17, 2
    // Predicated region
    $region53: #{_lambda_.3} parent=5 // pred_check
      %p325 = pneg %p324
    $region54: #{_lambda_.3} parent=5 // pred_check_branch
      %327 = sbr.rel (%p325) target = $region56
    $region55: #{_lambda_.3} parent=5 // pred_region
      // Predicated region
      $region57: #{_lambda_.3} parent=55 // pred_check
        %p328 = pneg %p37
      $region58: #{_lambda_.3} parent=55 // pred_check_branch
        %330 = sbr.rel (%p328) target = $region60
      $region59: #{_lambda_.3} parent=55 // pred_region
        %p331 = scmp.lt.s32.totalorder %s17, 1
        %s332 = scalar_select %p331, %s17, 1
        %s333 = smul.addr %s332, 4
        %s334 = smul.addr %s333, 8
        %s335 = scalar_lea.vmem %s0, %s334
      $region60: #{_lambda_.3} parent=55 // pred_fallthru
        _
    $region56: #{_lambda_.3} parent=5 // pred_fallthru
      _
    %p336 = scmp.le.s32.totalorder 1, %s17
    %p337 = scmp.lt.s32.totalorder %s17, 3
    %p338 = pnand %p336, %p337
    %p339 = pneg %p338
    // Predicated region
    $region61: #{_lambda_.3} parent=5 // pred_check
      _
    $region62: #{_lambda_.3} parent=5 // pred_check_branch
      %341 = sbr.rel (%p338) target = $region64
    $region63: #{_lambda_.3} parent=5 // pred_region
      %s342 = ssub.s32 %s17, 1
      %p343 = scmp.lt.s32.totalorder %s22, 1
      %s344 = scalar_select %p343, %s22, 1
      %s345 = smul.addr %s344, 4
      %s346 = smul.addr %s345, 8
      %s347 = scalar_lea.vmem %s0, %s346
      %p348 = pneg %p43
      %p349 = pneg %p40
      %p350 = pneg %p64
      %p351 = pneg %p61
      %p352 = pneg %p85
      %p353 = pneg %p82
      %p354 = pneg %p106
      %p355 = pneg %p103
      %p356 = pneg %p127
      %p357 = pneg %p124
      %p358 = pneg %p148
      %p359 = pneg %p145
      %p360 = pneg %p169
      %p361 = pneg %p166
      %p362 = pneg %p190
      %p363 = pneg %p187
      %p364 = pneg %p211
      %p365 = pneg %p208
      %p366 = pneg %p232
      %p367 = pneg %p229
      %p368 = pneg %p253
      %p369 = pneg %p250
      %p370 = pneg %p279
      %p371 = pneg %p276
      %p372 = scmp.lt.s32.totalorder %s22, 1
      %s373 = scalar_select %p372, %s22, 1
      %s374 = smul.addr %s373, 4
      %s375 = smul.addr %s374, 8
      %s376 = scalar_lea.vmem %s11, %s375
      %p377 = scmp.lt.s32.totalorder %s22, 1
      %s378 = scalar_select %p377, %s22, 1
      %s379 = smul.addr %s378, 4
      %s380 = smul.addr %s379, 8
      %s381 = scalar_lea.vmem %s0, %s380
      %p382 = scmp.lt.s32.totalorder %s22, 1
      %s383 = scalar_select %p382, %s22, 1
      %s384 = smul.addr %s383, 4
      %s385 = smul.addr %s384, 8
      %s386 = scalar_lea.vmem %s11, %s385
      %v388 = vld [vmem:[%s381] sm:$0xff]
      %v389 = vld [vmem:[%s381 + $0x8] sm:$0xff]
      %v390 = vld [vmem:[%s381 + $0x10] sm:$0xff]
      %v391 = vld [vmem:[%s381 + $0x18] sm:$0xff]
      %v392 = vld [vmem:[%s1] sm:$0xff]
      %v393 = vpack.c.bf16 %v392, %v392
      %v394 = vpack.c.bf16 %v389, %v388
      %v395 = vpack.c.bf16 %v391, %v390
      %vm396 = vcmask 261120
      %v398 = vsel %vm396, %v393, 0
      %400 = vmatprep.subr.bf16.mxu0 0
      %401 = vmatpush1.bf16.msra.mxu0 0
      %402 = vmatprep.subr.bf16.mxu0 0
      %403 = vmatpush1.bf16.msra.mxu0 0
      %404 = vmatprep.subr.bf16.mxu0 0
      %405 = vmatpush1.bf16.msra.mxu0 0
      %406 = vmatprep.subr.bf16.mxu0 0
      %407 = vmatpush1.bf16.msra.mxu0 0
      %408 = vmatprep.subr.bf16.mxu0 0
      %409 = vmatpush1.bf16.msra.mxu0 0
      %410 = vmatprep.subr.bf16.mxu0 0
      %411 = vmatpush1.bf16.msra.mxu0 0
      %412 = vmatprep.subr.bf16.mxu0 0
      %413 = vmatpush1.bf16.msra.mxu0 %v395
      %414 = vmatprep.subr.bf16.mxu0 0
      %415 = vmatpush1.bf16.msra.mxu0 %v394
      %416 = vmatprep.subr.bf16.mxu0 0
      %417 = vmatpush2.bf16.msra.mxu0 0
      %418 = vmatprep.subr.bf16.mxu0 0
      %419 = vmatpush2.bf16.msra.mxu0 0
      %420 = vmatprep.subr.bf16.mxu0 0
      %421 = vmatpush2.bf16.msra.mxu0 0
      %422 = vmatprep.subr.bf16.mxu0 0
      %423 = vmatpush2.bf16.msra.mxu0 0
      %424 = vmatprep.subr.bf16.mxu0 0
      %425 = vmatpush2.bf16.msra.mxu0 0
      %426 = vmatprep.subr.bf16.mxu0 0
      %427 = vmatpush2.bf16.msra.mxu0 0
      %428 = vmatprep.subr.bf16.mxu0 0
      %429 = vmatpush2.bf16.msra.mxu0 0
      %430 = vmatprep.subr.bf16.mxu0 0
      %431 = vmatpush2.bf16.msra.mxu0 0
      %432 = vmatprep.mubr.bf16.mxu0 0
      %433 = vmatmul.mubr.bf16.gmra.mxu0 %v398
      %v434 = vpop.f32.mrf.mxu0
      %v435 = vadd.f32 0.0, %v434
      %v436 = vpop.f32.mrf.mxu0
      %v437 = vpop.f32.mrf.mxu0
      %v438 = vpop.f32.mrf.mxu0
      %439 = vdwg.mxu0
      %v440 = vld [vmem:[%s2] sm:$0xff]
      %442 = vset.pattern.permute.xlu0 0
      %443 = vperm.xlu0 %442, %v440
      %v444 = vpop.permute.xlu0 %443
      %v446 = vmul.f32 %v435, %v444
      %v447 = vld [vmem:[%s3] sm:$0xff]
      %449 = vset.pattern.permute.xlu0 0
      %450 = vperm.xlu0 %449, %v447
      %v451 = vpop.permute.xlu0 %450
      %v453 = vadd.f32 %v446, %v451
      %v454 = vmax.f32 %v453, 0.0
      %vm455 = vcmask 72704
      %456 = vst.msk [vmem:[#allocation2] sm:$0xff] %vm455, 0.0
      %vm457 = vcmask 671304
      %458 = vst.msk [vmem:[#allocation2] sm:$0xff] %vm457, 0.0
      %460 = vrot.lane.b32.xlu0 %v454, 9
      %v461 = vpop.permute.xlu0 %460
      %vm463 = vcmask 597064
      %464 = vst.msk [vmem:[#allocation2] sm:$0xff] %vm463, %v461
      %v465 = vld [vmem:[%s10] sm:$0x3]
      %v466 = vld [vmem:[%s4] sm:$0xff]
      %v467 = vld [vmem:[#allocation2] sm:$0xff]
      %469 = vset.pattern.permute.xlu0 0
      %470 = vperm.xlu0 %469, %v466
      %v471 = vpop.permute.xlu0 %470
      %v473 = vmul.f32 %v467, %v471
      %474 = vset.pattern.permute.xlu0 3
      %475 = vperm.xlu0 %474, %v466
      %v476 = vpop.permute.xlu0 %475
      %v478 = vmul.f32 %v467, %v476
      %480 = vrot.lane.b32.xlu0 %v478, 120
      %v481 = vpop.permute.xlu0 %480
      %v483 = vadd.f32 %v473, %v481
      %484 = vset.pattern.permute.xlu0 6
      %485 = vperm.xlu0 %484, %v466
      %v486 = vpop.permute.xlu0 %485
      %v488 = vmul.f32 %v467, %v486
      %490 = vrot.lane.b32.xlu0 %v488, 112
      %v491 = vpop.permute.xlu0 %490
      %v493 = vadd.f32 %v483, %v491
      %v494 = vlaneseq
      %v495 = vshrl.u32 %v494, 7
      %v496 = vsub.s32 0, %v495
      %v497 = vrot.slane %v465, %v496
      %v498 = vmul.f32 %v493, %v497
      %499 = vset.pattern.permute.xlu0 1
      %500 = vperm.xlu0 %499, %v466
      %v501 = vpop.permute.xlu0 %500
      %v503 = vmul.f32 %v467, %v501
      %504 = vset.pattern.permute.xlu0 4
      %505 = vperm.xlu0 %504, %v466
      %v506 = vpop.permute.xlu0 %505
      %v508 = vmul.f32 %v467, %v506
      %510 = vrot.lane.b32.xlu0 %v508, 120
      %v511 = vpop.permute.xlu0 %510
      %v513 = vadd.f32 %v503, %v511
      %514 = vset.pattern.permute.xlu0 7
      %515 = vperm.xlu0 %514, %v466
      %v516 = vpop.permute.xlu0 %515
      %v518 = vmul.f32 %v467, %v516
      %520 = vrot.lane.b32.xlu0 %v518, 112
      %v521 = vpop.permute.xlu0 %520
      %v523 = vadd.f32 %v513, %v521
      %525 = vrot.lane.b32.xlu0 %v523, 127
      %v526 = vpop.permute.xlu0 %525
      %v528 = vadd.f32 %v498, %v526
      %529 = vset.pattern.permute.xlu0 2
      %530 = vperm.xlu0 %529, %v466
      %v531 = vpop.permute.xlu0 %530
      %v533 = vmul.f32 %v467, %v531
      %534 = vset.pattern.permute.xlu0 5
      %535 = vperm.xlu0 %534, %v466
      %v536 = vpop.permute.xlu0 %535
      %v538 = vmul.f32 %v467, %v536
      %540 = vrot.lane.b32.xlu0 %v538, 120
      %v541 = vpop.permute.xlu0 %540
      %v543 = vadd.f32 %v533, %v541
      %544 = vset.pattern.permute.xlu0 8
      %545 = vperm.xlu0 %544, %v466
      %v546 = vpop.permute.xlu0 %545
      %v548 = vmul.f32 %v467, %v546
      %550 = vrot.lane.b32.xlu0 %v548, 112
      %v551 = vpop.permute.xlu0 %550
      %v553 = vadd.f32 %v543, %v551
      %v554 = vlaneseq
      %v555 = vshrl.u32 %v554, 7
      %v556 = vsub.s32 1, %v555
      %v557 = vrot.slane %v465, %v556
      %559 = vrot.lane.b32.xlu0 %v557, 2
      %v560 = vpop.permute.xlu0 %559
      %v562 = vmul.f32 %v553, %v560
      %564 = vrot.lane.b32.xlu0 %v562, 126
      %v565 = vpop.permute.xlu0 %564
      %v567 = vadd.f32 %v528, %v565
      %v568 = vld [vmem:[%s5] sm:$0xff]
      %570 = vset.pattern.permute.xlu0 0
      %571 = vperm.xlu0 %570, %v568
      %v572 = vpop.permute.xlu0 %571
      %v574 = vmul.f32 %v567, %v572
      %v575 = vld [vmem:[%s6] sm:$0xff]
      %577 = vset.pattern.permute.xlu0 0
      %578 = vperm.xlu0 %577, %v575
      %v579 = vpop.permute.xlu0 %578
      %v581 = vadd.f32 %v574, %v579
      %v582 = vld [vmem:[%s7] sm:$0xff]
      %v583 = vld [vmem:[%s7 + $0x8] sm:$0xff]
      %v584 = vld [vmem:[%s7 + $0x10] sm:$0xff]
      %v585 = vld [vmem:[%s7 + $0x18] sm:$0xff]
      %v586 = vpack.c.bf16 %v583, %v582
      %v587 = vpack.c.bf16 %v585, %v584
      %v588 = vpack.c.bf16 %v581, %v581
      %vm589 = vcmask 64512
      %v591 = vsel %vm589, %v586, 0
      %v594 = vsel %vm589, %v587, 0
      %vm596 = vcmask 1043456
      %v598 = vsel %vm596, %v588, 0
      %600 = vmatprep.subr.bf16.mxu0 0
      %601 = vmatpush1.bf16.msra.mxu0 0
      %602 = vmatprep.subr.bf16.mxu0 0
      %603 = vmatpush1.bf16.msra.mxu0 0
      %604 = vmatprep.subr.bf16.mxu0 0
      %605 = vmatpush1.bf16.msra.mxu0 0
      %606 = vmatprep.subr.bf16.mxu0 0
      %607 = vmatpush1.bf16.msra.mxu0 0
      %608 = vmatprep.subr.bf16.mxu0 0
      %609 = vmatpush1.bf16.msra.mxu0 0
      %610 = vmatprep.subr.bf16.mxu0 0
      %611 = vmatpush1.bf16.msra.mxu0 0
      %612 = vmatprep.subr.bf16.mxu0 0
      %613 = vmatpush1.bf16.msra.mxu0 0
      %614 = vmatprep.subr.bf16.mxu0 0
      %615 = vmatpush1.bf16.msra.mxu0 %v598
      %616 = vmatprep.subr.bf16.mxu0 0
      %617 = vmatpush2.bf16.msra.mxu0 0
      %618 = vmatprep.subr.bf16.mxu0 0
      %619 = vmatpush2.bf16.msra.mxu0 0
      %620 = vmatprep.subr.bf16.mxu0 0
      %621 = vmatpush2.bf16.msra.mxu0 0
      %622 = vmatprep.subr.bf16.mxu0 0
      %623 = vmatpush2.bf16.msra.mxu0 0
      %624 = vmatprep.subr.bf16.mxu0 0
      %625 = vmatpush2.bf16.msra.mxu0 0
      %626 = vmatprep.subr.bf16.mxu0 0
      %627 = vmatpush2.bf16.msra.mxu0 0
      %628 = vmatprep.subr.bf16.mxu0 0
      %629 = vmatpush2.bf16.msra.mxu0 0
      %630 = vmatprep.subr.bf16.mxu0 0
      %631 = vmatpush2.bf16.msra.mxu0 0
      %632 = vmatprep.mubr.bf16.mxu0 0
      %633 = vmatmul.mubr.bf16.gmra.mxu0 %v591
      %v634 = vpop.f32.mrf.mxu0
      %v635 = vadd.f32 0.0, %v634
      %v636 = vpop.f32.mrf.mxu0
      %v637 = vpop.f32.mrf.mxu0
      %v638 = vadd.f32 0.0, %v637
      %v639 = vpop.f32.mrf.mxu0
      %640 = vmatprep.mubr.bf16.mxu0 0
      %641 = vmatmul.mubr.bf16.gmra.mxu0 %v594
      %v642 = vpop.f32.mrf.mxu0
      %v643 = vadd.f32 0.0, %v642
      %v644 = vpop.f32.mrf.mxu0
      %v645 = vpop.f32.mrf.mxu0
      %v646 = vadd.f32 0.0, %v645
      %v647 = vpop.f32.mrf.mxu0
      %648 = vdwg.mxu0
      %v649 = vld [vmem:[%s8] sm:$0xff]
      %v650 = vld [vmem:[%s8 + $0x8] sm:$0xff]
      %v651 = vld [vmem:[%s8 + $0x10] sm:$0xff]
      %v652 = vld [vmem:[%s8 + $0x18] sm:$0xff]
      %654 = vset.pattern.permute.xlu0 0
      %655 = vperm.xlu0 %654, %v649
      %v656 = vpop.permute.xlu0 %655
      %659 = vset.pattern.permute.xlu0 0
      %660 = vperm.xlu0 %659, %v650
      %v661 = vpop.permute.xlu0 %660
      %664 = vset.pattern.permute.xlu0 0
      %665 = vperm.xlu0 %664, %v651
      %v666 = vpop.permute.xlu0 %665
      %669 = vset.pattern.permute.xlu0 0
      %670 = vperm.xlu0 %669, %v652
      %v671 = vpop.permute.xlu0 %670
      %v673 = vmul.f32 %v635, %v656
      %v674 = vmul.f32 %v638, %v661
      %v675 = vmul.f32 %v643, %v666
      %v676 = vmul.f32 %v646, %v671
      %v677 = vld [vmem:[%s9] sm:$0xff]
      %v678 = vld [vmem:[%s9 + $0x8] sm:$0xff]
      %v679 = vld [vmem:[%s9 + $0x10] sm:$0xff]
      %v680 = vld [vmem:[%s9 + $0x18] sm:$0xff]
      %682 = vset.pattern.permute.xlu0 0
      %683 = vperm.xlu0 %682, %v677
      %v684 = vpop.permute.xlu0 %683
      %687 = vset.pattern.permute.xlu0 0
      %688 = vperm.xlu0 %687, %v678
      %v689 = vpop.permute.xlu0 %688
      %692 = vset.pattern.permute.xlu0 0
      %693 = vperm.xlu0 %692, %v679
      %v694 = vpop.permute.xlu0 %693
      %697 = vset.pattern.permute.xlu0 0
      %698 = vperm.xlu0 %697, %v680
      %v699 = vpop.permute.xlu0 %698
      %v701 = vadd.f32 %v673, %v684
      %v702 = vadd.f32 %v674, %v689
      %v703 = vadd.f32 %v675, %v694
      %v704 = vadd.f32 %v676, %v699
      %v705 = vadd.f32 %v701, %v388
      %v706 = vadd.f32 %v702, %v389
      %v707 = vadd.f32 %v703, %v390
      %v708 = vadd.f32 %v704, %v391
      %v709 = vmax.f32 %v705, 0.0
      %v710 = vmax.f32 %v706, 0.0
      %v711 = vmax.f32 %v707, 0.0
      %v712 = vmax.f32 %v708, 0.0
      %vm713 = vcmask 523264
      %714 = vst.msk [vmem:[%s386] sm:$0xff] %vm713, %v709
      %715 = vst.msk [vmem:[%s386 + $0x8] sm:$0xff] %vm713, %v710
      %716 = vst.msk [vmem:[%s386 + $0x10] sm:$0xff] %vm713, %v711
      %717 = vst.msk [vmem:[%s386 + $0x18] sm:$0xff] %vm713, %v712
      %p718 = scmp.lt.s32.totalorder %s22, 1
      %s719 = scalar_select %p718, %s22, 1
      %s720 = smul.addr %s719, 4
      %s721 = smul.addr %s720, 8
      %s722 = scalar_lea.vmem %s11, %s721
      // Predicated region
      $region65: #{_lambda_.3} parent=63 // pred_check
        %p723 = pneg %p276
      $region66: #{_lambda_.3} parent=63 // pred_check_branch
        %725 = sbr.rel (%p723) target = $region68
      $region67: #{_lambda_.3} parent=63 // pred_region
        _
      $region68: #{_lambda_.3} parent=63 // pred_fallthru
        _
    $region64: #{_lambda_.3} parent=5 // pred_fallthru
      _
    %p726 = scmp.le.s32.totalorder 2, %s17
    // Predicated region
    $region69: #{_lambda_.3} parent=5 // pred_check
      %p727 = pneg %p726
    $region70: #{_lambda_.3} parent=5 // pred_check_branch
      %729 = sbr.rel (%p727) target = $region72
    $region71: #{_lambda_.3} parent=5 // pred_region
      %s730 = ssub.s32 %s17, 2
      // Predicated region
      $region73: #{_lambda_.3} parent=71 // pred_check
        %p731 = pneg %p282
      $region74: #{_lambda_.3} parent=71 // pred_check_branch
        %733 = sbr.rel (%p731) target = $region76
      $region75: #{_lambda_.3} parent=71 // pred_region
        %p734 = scmp.lt.s32.totalorder %s23, 1
        %s735 = scalar_select %p734, %s23, 1
        %s736 = smul.addr %s735, 4
        %s737 = smul.addr %s736, 8
        %s738 = scalar_lea.vmem %s11, %s737
      $region76: #{_lambda_.3} parent=71 // pred_fallthru
        _
    $region72: #{_lambda_.3} parent=5 // pred_fallthru
      _
  $region6: #{_lambda_.3} parent=0 // loop_footer
    %s21 = sadd.s32 1, %s17
  $region7: #{_lambda_.3} parent=0 // loop_footer_branch
    %16 = sbr.rel target = $region3
  $region8: #{_lambda_.3} parent=0 // loop_exit
    _

// kernel: _lambda_.2
$region0: #{_lambda_.2}
  #allocation0 [shape = 'u32[]', space=smem, size = 0x4, offset = 0x4, fixed_abs, tag = 'smem constant byte address 0x4 - core index']
  #allocation1 [shape = 'u32[144,128]{1,0:T(1,128)}', space=vmem, size = 0x12000, scoped, tag = 'internal scratch']
  #allocation2 [shape = 'f32[6,290]{1,0:T(8,128)}', space=vmem, size = 0x3000, scoped, tag = 'scratch operand']
  #allocation3 [shape = 'f32[8,290]{1,0:T(8,128)}', space=vmem, size = 0x3000, scoped, tag = 'scratch operand']
  %s0 = inlined_call_operand.vmem [shape: f32[2,8,256], index: 0, kind: input, shape index: {}]
  %s1 = inlined_call_operand.vmem [shape: f32[6,8], index: 1, kind: input, shape index: {}]
  %s2 = inlined_call_operand.vmem [shape: f32[6,1], index: 2, kind: input, shape index: {}]
  %s3 = inlined_call_operand.vmem [shape: f32[6,1], index: 3, kind: input, shape index: {}]
  %s4 = inlined_call_operand.vmem [shape: f32[6,9], index: 4, kind: input, shape index: {}]
  %s5 = inlined_call_operand.vmem [shape: f32[6,1], index: 5, kind: input, shape index: {}]
  %s6 = inlined_call_operand.vmem [shape: f32[6,1], index: 6, kind: input, shape index: {}]
  %s7 = inlined_call_operand.vmem [shape: f32[24,6], index: 7, kind: input, shape index: {}]
  %s8 = inlined_call_operand.vmem [shape: f32[24,1], index: 8, kind: input, shape index: {}]
  %s9 = inlined_call_operand.vmem [shape: f32[24,1], index: 9, kind: input, shape index: {}]
  %s10 = inlined_call_operand.vmem [shape: f32[2,256], index: 10, kind: input, shape index: {}]
  %s11 = inlined_call_operand.vmem [shape: f32[256,64], index: 11, kind: input, shape index: {}]
  %s12 = inlined_call_operand.vmem [shape: f32[2,32,64], index: 12, kind: output, shape index: {}]
  %s13 = sld [smem:[#allocation0]]
  $region81: #{_lambda_.2} parent=0
    _
  %s15 = ssub.s32 1, %s13
  %s16 = scalar_select 0, %s15, %s13
  loop: start=0, step=1, limit=4
  $region2: #{_lambda_.2} parent=0 // loop_pre_header
    _
  $region3: #{_lambda_.2} parent=0 // loop_header
    %s18 = sphi 0, %s22
    %p19 = scmp.ge.s32.totalorder %s18, 4
    %s28 = sphi 0, %s30
    %s31 = sphi 0, %s28
    %s32 = sphi 0, %s31
    %s48 = sphi 0, %s32
    %s52 = sphi 0, %s52
    %s54 = sphi 0, %s52
    %s55 = sphi 0, %s54
    %s69 = sphi 0, %s55
    %s73 = sphi 0, %s73
    %s75 = sphi 0, %s73
    %s76 = sphi 0, %s75
    %s90 = sphi 0, %s76
    %s94 = sphi 0, %s94
    %s96 = sphi 0, %s94
    %s97 = sphi 0, %s96
    %s111 = sphi 0, %s97
    %s115 = sphi 0, %s115
    %s117 = sphi 0, %s115
    %s118 = sphi 0, %s117
    %s132 = sphi 0, %s118
    %s136 = sphi 0, %s136
    %s138 = sphi 0, %s136
    %s139 = sphi 0, %s138
    %s153 = sphi 0, %s139
    %s157 = sphi 0, %s157
    %s159 = sphi 0, %s157
    %s160 = sphi 0, %s159
    %s174 = sphi 0, %s160
    %s178 = sphi 0, %s178
    %s180 = sphi 0, %s178
    %s181 = sphi 0, %s180
    %s195 = sphi 0, %s181
    %s199 = sphi 0, %s199
    %s201 = sphi 0, %s199
    %s202 = sphi 0, %s201
    %s216 = sphi 0, %s202
    %s220 = sphi 0, %s220
    %s222 = sphi 0, %s220
    %s223 = sphi 0, %s222
    %s237 = sphi 0, %s223
    %s241 = sphi 0, %s241
    %s243 = sphi 0, %s241
    %s244 = sphi 0, %s243
    %s258 = sphi 0, %s244
    %s262 = sphi 0, %s262
    %s264 = sphi 0, %s262
    %s265 = sphi 0, %s264
    %s279 = sphi 0, %s265
    %s285 = sphi 0, %s287
    %s288 = sphi 0, %s285
    %s289 = sphi 0, %s288
    %s305 = sphi 0, %s289
  $region4: #{_lambda_.2} parent=0 // loop_header_branch
    %21 = sbr.rel (%p19) target = $region8
  $region5: #{_lambda_.2} parent=0 // loop_body
    %s23 = ssub.s32 %s18, 1
    %s24 = ssub.s32 %s18, 2
    %s25 = sadd.s32 %s18, 1
    %s26 = ssub.s32 %s18, %s25
    %p27 = scmp.eq.s32.totalorder %s26, 0
    %s29 = sadd.s32 %s28, 1
    %s30 = scalar_select %p27, %s28, %s29
    %p33 = pneg %p27
    %p34 = scmp.eq.s32.totalorder %s18, 1
    %p35 = por %p33, %p34
    %p36 = scmp.ne.s32.totalorder %s28, %s31
    %p37 = scmp.eq.s32.totalorder %s18, 0
    %p38 = por %p36, %p37
    %p39 = scmp.ne.s32.totalorder %s28, %s31
    %p40 = scmp.eq.s32.totalorder %s23, 1
    %p41 = por %p39, %p40
    %p42 = scmp.ne.s32.totalorder %s31, %s32
    %p43 = scmp.eq.s32.totalorder %s23, 0
    %p44 = por %p42, %p43
    %p45 = scmp.ne.s32.totalorder %s31, %s32
    %p46 = scmp.eq.s32.totalorder %s24, 1
    %p47 = por %p45, %p46
    %p49 = scmp.ne.s32.totalorder %s32, %s48
    %p50 = scmp.eq.s32.totalorder %s24, 0
    %p51 = por %p49, %p50
    %s53 = sadd.s32 %s52, 1
    %p56 = scmp.eq.s32.totalorder %s18, 1
    %p57 = scmp.ne.s32.totalorder %s52, %s54
    %p58 = scmp.eq.s32.totalorder %s18, 0
    %p59 = por %p57, %p58
    %p60 = scmp.ne.s32.totalorder %s52, %s54
    %p61 = scmp.eq.s32.totalorder %s23, 1
    %p62 = por %p60, %p61
    %p63 = scmp.ne.s32.totalorder %s54, %s55
    %p64 = scmp.eq.s32.totalorder %s23, 0
    %p65 = por %p63, %p64
    %p66 = scmp.ne.s32.totalorder %s54, %s55
    %p67 = scmp.eq.s32.totalorder %s24, 1
    %p68 = por %p66, %p67
    %p70 = scmp.ne.s32.totalorder %s55, %s69
    %p71 = scmp.eq.s32.totalorder %s24, 0
    %p72 = por %p70, %p71
    %s74 = sadd.s32 %s73, 1
    %p77 = scmp.eq.s32.totalorder %s18, 1
    %p78 = scmp.ne.s32.totalorder %s73, %s75
    %p79 = scmp.eq.s32.totalorder %s18, 0
    %p80 = por %p78, %p79
    %p81 = scmp.ne.s32.totalorder %s73, %s75
    %p82 = scmp.eq.s32.totalorder %s23, 1
    %p83 = por %p81, %p82
    %p84 = scmp.ne.s32.totalorder %s75, %s76
    %p85 = scmp.eq.s32.totalorder %s23, 0
    %p86 = por %p84, %p85
    %p87 = scmp.ne.s32.totalorder %s75, %s76
    %p88 = scmp.eq.s32.totalorder %s24, 1
    %p89 = por %p87, %p88
    %p91 = scmp.ne.s32.totalorder %s76, %s90
    %p92 = scmp.eq.s32.totalorder %s24, 0
    %p93 = por %p91, %p92
    %s95 = sadd.s32 %s94, 1
    %p98 = scmp.eq.s32.totalorder %s18, 1
    %p99 = scmp.ne.s32.totalorder %s94, %s96
    %p100 = scmp.eq.s32.totalorder %s18, 0
    %p101 = por %p99, %p100
    %p102 = scmp.ne.s32.totalorder %s94, %s96
    %p103 = scmp.eq.s32.totalorder %s23, 1
    %p104 = por %p102, %p103
    %p105 = scmp.ne.s32.totalorder %s96, %s97
    %p106 = scmp.eq.s32.totalorder %s23, 0
    %p107 = por %p105, %p106
    %p108 = scmp.ne.s32.totalorder %s96, %s97
    %p109 = scmp.eq.s32.totalorder %s24, 1
    %p110 = por %p108, %p109
    %p112 = scmp.ne.s32.totalorder %s97, %s111
    %p113 = scmp.eq.s32.totalorder %s24, 0
    %p114 = por %p112, %p113
    %s116 = sadd.s32 %s115, 1
    %p119 = scmp.eq.s32.totalorder %s18, 1
    %p120 = scmp.ne.s32.totalorder %s115, %s117
    %p121 = scmp.eq.s32.totalorder %s18, 0
    %p122 = por %p120, %p121
    %p123 = scmp.ne.s32.totalorder %s115, %s117
    %p124 = scmp.eq.s32.totalorder %s23, 1
    %p125 = por %p123, %p124
    %p126 = scmp.ne.s32.totalorder %s117, %s118
    %p127 = scmp.eq.s32.totalorder %s23, 0
    %p128 = por %p126, %p127
    %p129 = scmp.ne.s32.totalorder %s117, %s118
    %p130 = scmp.eq.s32.totalorder %s24, 1
    %p131 = por %p129, %p130
    %p133 = scmp.ne.s32.totalorder %s118, %s132
    %p134 = scmp.eq.s32.totalorder %s24, 0
    %p135 = por %p133, %p134
    %s137 = sadd.s32 %s136, 1
    %p140 = scmp.eq.s32.totalorder %s18, 1
    %p141 = scmp.ne.s32.totalorder %s136, %s138
    %p142 = scmp.eq.s32.totalorder %s18, 0
    %p143 = por %p141, %p142
    %p144 = scmp.ne.s32.totalorder %s136, %s138
    %p145 = scmp.eq.s32.totalorder %s23, 1
    %p146 = por %p144, %p145
    %p147 = scmp.ne.s32.totalorder %s138, %s139
    %p148 = scmp.eq.s32.totalorder %s23, 0
    %p149 = por %p147, %p148
    %p150 = scmp.ne.s32.totalorder %s138, %s139
    %p151 = scmp.eq.s32.totalorder %s24, 1
    %p152 = por %p150, %p151
    %p154 = scmp.ne.s32.totalorder %s139, %s153
    %p155 = scmp.eq.s32.totalorder %s24, 0
    %p156 = por %p154, %p155
    %s158 = sadd.s32 %s157, 1
    %p161 = scmp.eq.s32.totalorder %s18, 1
    %p162 = scmp.ne.s32.totalorder %s157, %s159
    %p163 = scmp.eq.s32.totalorder %s18, 0
    %p164 = por %p162, %p163
    %p165 = scmp.ne.s32.totalorder %s157, %s159
    %p166 = scmp.eq.s32.totalorder %s23, 1
    %p167 = por %p165, %p166
    %p168 = scmp.ne.s32.totalorder %s159, %s160
    %p169 = scmp.eq.s32.totalorder %s23, 0
    %p170 = por %p168, %p169
    %p171 = scmp.ne.s32.totalorder %s159, %s160
    %p172 = scmp.eq.s32.totalorder %s24, 1
    %p173 = por %p171, %p172
    %p175 = scmp.ne.s32.totalorder %s160, %s174
    %p176 = scmp.eq.s32.totalorder %s24, 0
    %p177 = por %p175, %p176
    %s179 = sadd.s32 %s178, 1
    %p182 = scmp.eq.s32.totalorder %s18, 1
    %p183 = scmp.ne.s32.totalorder %s178, %s180
    %p184 = scmp.eq.s32.totalorder %s18, 0
    %p185 = por %p183, %p184
    %p186 = scmp.ne.s32.totalorder %s178, %s180
    %p187 = scmp.eq.s32.totalorder %s23, 1
    %p188 = por %p186, %p187
    %p189 = scmp.ne.s32.totalorder %s180, %s181
    %p190 = scmp.eq.s32.totalorder %s23, 0
    %p191 = por %p189, %p190
    %p192 = scmp.ne.s32.totalorder %s180, %s181
    %p193 = scmp.eq.s32.totalorder %s24, 1
    %p194 = por %p192, %p193
    %p196 = scmp.ne.s32.totalorder %s181, %s195
    %p197 = scmp.eq.s32.totalorder %s24, 0
    %p198 = por %p196, %p197
    %s200 = sadd.s32 %s199, 1
    %p203 = scmp.eq.s32.totalorder %s18, 1
    %p204 = scmp.ne.s32.totalorder %s199, %s201
    %p205 = scmp.eq.s32.totalorder %s18, 0
    %p206 = por %p204, %p205
    %p207 = scmp.ne.s32.totalorder %s199, %s201
    %p208 = scmp.eq.s32.totalorder %s23, 1
    %p209 = por %p207, %p208
    %p210 = scmp.ne.s32.totalorder %s201, %s202
    %p211 = scmp.eq.s32.totalorder %s23, 0
    %p212 = por %p210, %p211
    %p213 = scmp.ne.s32.totalorder %s201, %s202
    %p214 = scmp.eq.s32.totalorder %s24, 1
    %p215 = por %p213, %p214
    %p217 = scmp.ne.s32.totalorder %s202, %s216
    %p218 = scmp.eq.s32.totalorder %s24, 0
    %p219 = por %p217, %p218
    %s221 = sadd.s32 %s220, 1
    %p224 = scmp.eq.s32.totalorder %s18, 1
    %p225 = scmp.ne.s32.totalorder %s220, %s222
    %p226 = scmp.eq.s32.totalorder %s18, 0
    %p227 = por %p225, %p226
    %p228 = scmp.ne.s32.totalorder %s220, %s222
    %p229 = scmp.eq.s32.totalorder %s23, 1
    %p230 = por %p228, %p229
    %p231 = scmp.ne.s32.totalorder %s222, %s223
    %p232 = scmp.eq.s32.totalorder %s23, 0
    %p233 = por %p231, %p232
    %p234 = scmp.ne.s32.totalorder %s222, %s223
    %p235 = scmp.eq.s32.totalorder %s24, 1
    %p236 = por %p234, %p235
    %p238 = scmp.ne.s32.totalorder %s223, %s237
    %p239 = scmp.eq.s32.totalorder %s24, 0
    %p240 = por %p238, %p239
    %s242 = sadd.s32 %s241, 1
    %p245 = scmp.eq.s32.totalorder %s18, 1
    %p246 = scmp.ne.s32.totalorder %s241, %s243
    %p247 = scmp.eq.s32.totalorder %s18, 0
    %p248 = por %p246, %p247
    %p249 = scmp.ne.s32.totalorder %s241, %s243
    %p250 = scmp.eq.s32.totalorder %s23, 1
    %p251 = por %p249, %p250
    %p252 = scmp.ne.s32.totalorder %s243, %s244
    %p253 = scmp.eq.s32.totalorder %s23, 0
    %p254 = por %p252, %p253
    %p255 = scmp.ne.s32.totalorder %s243, %s244
    %p256 = scmp.eq.s32.totalorder %s24, 1
    %p257 = por %p255, %p256
    %p259 = scmp.ne.s32.totalorder %s244, %s258
    %p260 = scmp.eq.s32.totalorder %s24, 0
    %p261 = por %p259, %p260
    %s263 = sadd.s32 %s262, 1
    %p266 = scmp.eq.s32.totalorder %s18, 1
    %p267 = scmp.ne.s32.totalorder %s262, %s264
    %p268 = scmp.eq.s32.totalorder %s18, 0
    %p269 = por %p267, %p268
    %p270 = scmp.ne.s32.totalorder %s262, %s264
    %p271 = scmp.eq.s32.totalorder %s23, 1
    %p272 = por %p270, %p271
    %p273 = scmp.ne.s32.totalorder %s264, %s265
    %p274 = scmp.eq.s32.totalorder %s23, 0
    %p275 = por %p273, %p274
    %p276 = scmp.ne.s32.totalorder %s264, %s265
    %p277 = scmp.eq.s32.totalorder %s24, 1
    %p278 = por %p276, %p277
    %p280 = scmp.ne.s32.totalorder %s265, %s279
    %p281 = scmp.eq.s32.totalorder %s24, 0
    %p282 = por %p280, %p281
    %s283 = ssub.s32 %s18, %s25
    %p284 = scmp.eq.s32.totalorder %s283, 0
    %s286 = sadd.s32 %s285, 1
    %s287 = scalar_select %p284, %s285, %s286
    %p290 = pneg %p284
    %p291 = scmp.eq.s32.totalorder %s18, 1
    %p292 = por %p290, %p291
    %p293 = scmp.ne.s32.totalorder %s285, %s288
    %p294 = scmp.eq.s32.totalorder %s18, 0
    %p295 = por %p293, %p294
    %p296 = scmp.ne.s32.totalorder %s285, %s288
    %p297 = scmp.eq.s32.totalorder %s23, 1
    %p298 = por %p296, %p297
    %p299 = scmp.ne.s32.totalorder %s288, %s289
    %p300 = scmp.eq.s32.totalorder %s23, 0
    %p301 = por %p299, %p300
    %p302 = scmp.ne.s32.totalorder %s288, %s289
    %p303 = scmp.eq.s32.totalorder %s24, 1
    %p304 = por %p302, %p303
    %p306 = scmp.ne.s32.totalorder %s289, %s305
    %p307 = scmp.eq.s32.totalorder %s24, 0
    %p308 = por %p306, %p307
    %p309 = scmp.le.s32.totalorder 1, %s18
    %p310 = scmp.lt.s32.totalorder %s18, 3
    %p311 = pnand %p309, %p310
    %p312 = pneg %p311
    // Predicated region
    $region9: #{_lambda_.2} parent=5 // pred_check
      _
    $region10: #{_lambda_.2} parent=5 // pred_check_branch
      %314 = sbr.rel (%p311) target = $region12
    $region11: #{_lambda_.2} parent=5 // pred_region
      %s315 = ssub.s32 %s18, 1
      // Predicated region
      $region13: #{_lambda_.2} parent=11 // pred_check
        %p316 = pneg %p65
      $region14: #{_lambda_.2} parent=11 // pred_check_branch
        %318 = sbr.rel (%p316) target = $region16
      $region15: #{_lambda_.2} parent=11 // pred_region
        _
      $region16: #{_lambda_.2} parent=11 // pred_fallthru
        _
      // Predicated region
      $region17: #{_lambda_.2} parent=11 // pred_check
        %p319 = pneg %p86
      $region18: #{_lambda_.2} parent=11 // pred_check_branch
        %321 = sbr.rel (%p319) target = $region20
      $region19: #{_lambda_.2} parent=11 // pred_region
        _
      $region20: #{_lambda_.2} parent=11 // pred_fallthru
        _
      // Predicated region
      $region21: #{_lambda_.2} parent=11 // pred_check
        %p322 = pneg %p107
      $region22: #{_lambda_.2} parent=11 // pred_check_branch
        %324 = sbr.rel (%p322) target = $region24
      $region23: #{_lambda_.2} parent=11 // pred_region
        _
      $region24: #{_lambda_.2} parent=11 // pred_fallthru
        _
      // Predicated region
      $region25: #{_lambda_.2} parent=11 // pred_check
        %p325 = pneg %p128
      $region26: #{_lambda_.2} parent=11 // pred_check_branch
        %327 = sbr.rel (%p325) target = $region28
      $region27: #{_lambda_.2} parent=11 // pred_region
        _
      $region28: #{_lambda_.2} parent=11 // pred_fallthru
        _
      // Predicated region
      $region29: #{_lambda_.2} parent=11 // pred_check
        %p328 = pneg %p149
      $region30: #{_lambda_.2} parent=11 // pred_check_branch
        %330 = sbr.rel (%p328) target = $region32
      $region31: #{_lambda_.2} parent=11 // pred_region
        _
      $region32: #{_lambda_.2} parent=11 // pred_fallthru
        _
      // Predicated region
      $region33: #{_lambda_.2} parent=11 // pred_check
        %p331 = pneg %p170
      $region34: #{_lambda_.2} parent=11 // pred_check_branch
        %333 = sbr.rel (%p331) target = $region36
      $region35: #{_lambda_.2} parent=11 // pred_region
        _
      $region36: #{_lambda_.2} parent=11 // pred_fallthru
        _
      // Predicated region
      $region37: #{_lambda_.2} parent=11 // pred_check
        %p334 = pneg %p191
      $region38: #{_lambda_.2} parent=11 // pred_check_branch
        %336 = sbr.rel (%p334) target = $region40
      $region39: #{_lambda_.2} parent=11 // pred_region
        _
      $region40: #{_lambda_.2} parent=11 // pred_fallthru
        _
      // Predicated region
      $region41: #{_lambda_.2} parent=11 // pred_check
        %p337 = pneg %p212
      $region42: #{_lambda_.2} parent=11 // pred_check_branch
        %339 = sbr.rel (%p337) target = $region44
      $region43: #{_lambda_.2} parent=11 // pred_region
        _
      $region44: #{_lambda_.2} parent=11 // pred_fallthru
        _
      // Predicated region
      $region45: #{_lambda_.2} parent=11 // pred_check
        %p340 = pneg %p233
      $region46: #{_lambda_.2} parent=11 // pred_check_branch
        %342 = sbr.rel (%p340) target = $region48
      $region47: #{_lambda_.2} parent=11 // pred_region
        _
      $region48: #{_lambda_.2} parent=11 // pred_fallthru
        _
      // Predicated region
      $region49: #{_lambda_.2} parent=11 // pred_check
        %p343 = pneg %p254
      $region50: #{_lambda_.2} parent=11 // pred_check_branch
        %345 = sbr.rel (%p343) target = $region52
      $region51: #{_lambda_.2} parent=11 // pred_region
        _
      $region52: #{_lambda_.2} parent=11 // pred_fallthru
        _
      // Predicated region
      $region53: #{_lambda_.2} parent=11 // pred_check
        %p346 = pneg %p275
      $region54: #{_lambda_.2} parent=11 // pred_check_branch
        %348 = sbr.rel (%p346) target = $region56
      $region55: #{_lambda_.2} parent=11 // pred_region
        _
      $region56: #{_lambda_.2} parent=11 // pred_fallthru
        _
    $region12: #{_lambda_.2} parent=5 // pred_fallthru
      _
    %p349 = scmp.lt.s32.totalorder %s18, 2
    // Predicated region
    $region57: #{_lambda_.2} parent=5 // pred_check
      %p350 = pneg %p349
    $region58: #{_lambda_.2} parent=5 // pred_check_branch
      %352 = sbr.rel (%p350) target = $region60
    $region59: #{_lambda_.2} parent=5 // pred_region
      // Predicated region
      $region61: #{_lambda_.2} parent=59 // pred_check
        %p353 = pneg %p38
      $region62: #{_lambda_.2} parent=59 // pred_check_branch
        %355 = sbr.rel (%p353) target = $region64
      $region63: #{_lambda_.2} parent=59 // pred_region
        %p356 = scmp.lt.s32.totalorder %s18, 1
        %s357 = scalar_select %p356, %s18, 1
        %s358 = smul.addr %s357, 2
        %s359 = smul.addr %s358, 8
        %s360 = scalar_lea.vmem %s0, %s359
      $region64: #{_lambda_.2} parent=59 // pred_fallthru
        _
    $region60: #{_lambda_.2} parent=5 // pred_fallthru
      _
    %p361 = scmp.le.s32.totalorder 1, %s18
    %p362 = scmp.lt.s32.totalorder %s18, 3
    %p363 = pnand %p361, %p362
    %p364 = pneg %p363
    // Predicated region
    $region65: #{_lambda_.2} parent=5 // pred_check
      _
    $region66: #{_lambda_.2} parent=5 // pred_check_branch
      %366 = sbr.rel (%p363) target = $region68
    $region67: #{_lambda_.2} parent=5 // pred_region
      %s367 = ssub.s32 %s18, 1
      %p368 = scmp.lt.s32.totalorder %s23, 1
      %s369 = scalar_select %p368, %s23, 1
      %s370 = smul.addr %s369, 2
      %s371 = smul.addr %s370, 8
      %s372 = scalar_lea.vmem %s0, %s371
      %p373 = pneg %p44
      %p374 = pneg %p41
      %p375 = pneg %p65
      %p376 = pneg %p62
      %p377 = pneg %p86
      %p378 = pneg %p83
      %p379 = pneg %p107
      %p380 = pneg %p104
      %p381 = pneg %p128
      %p382 = pneg %p125
      %p383 = pneg %p149
      %p384 = pneg %p146
      %p385 = pneg %p170
      %p386 = pneg %p167
      %p387 = pneg %p191
      %p388 = pneg %p188
      %p389 = pneg %p212
      %p390 = pneg %p209
      %p391 = pneg %p233
      %p392 = pneg %p230
      %p393 = pneg %p254
      %p394 = pneg %p251
      %p395 = pneg %p275
      %p396 = pneg %p272
      %p397 = pneg %p301
      %p398 = pneg %p298
      %p399 = scmp.lt.s32.totalorder %s23, 1
      %s400 = scalar_select %p399, %s23, 1
      %s401 = smul.addr %s400, 4
      %s402 = smul.addr %s401, 8
      %s403 = scalar_lea.vmem %s12, %s402
      %p404 = scmp.lt.s32.totalorder %s23, 1
      %s405 = scalar_select %p404, %s23, 1
      %s406 = smul.addr %s405, 2
      %s407 = smul.addr %s406, 8
      %s408 = scalar_lea.vmem %s0, %s407
      %p409 = scmp.lt.s32.totalorder %s23, 1
      %s410 = scalar_select %p409, %s23, 1
      %s411 = smul.addr %s410, 4
      %s412 = smul.addr %s411, 8
      %s413 = scalar_lea.vmem %s12, %s412
      %v415 = vld [vmem:[%s408] sm:$0xff]
      %v416 = vld [vmem:[%s408 + $0x8] sm:$0xff]
      %v417 = vld [vmem:[%s1] sm:$0x3f]
      %v418 = vpack.c.bf16 %v417, %v417
      %v419 = vpack.c.bf16 %v415, %v415
      %v420 = vpack.c.bf16 %v416, %v416
      %vm421 = vcmask 64512
      %v423 = vsel %vm421, %v418, 0
      %vm425 = vcmask 1043456
      %v427 = vsel %vm425, %v419, 0
      %v430 = vsel %vm425, %v420, 0
      %432 = vmatprep.subr.bf16.mxu0 0
      %433 = vmatpush1.bf16.msra.mxu0 0
      %434 = vmatprep.subr.bf16.mxu0 0
      %435 = vmatpush1.bf16.msra.mxu0 0
      %436 = vmatprep.subr.bf16.mxu0 0
      %437 = vmatpush1.bf16.msra.mxu0 0
      %438 = vmatprep.subr.bf16.mxu0 0
      %439 = vmatpush1.bf16.msra.mxu0 0
      %440 = vmatprep.subr.bf16.mxu0 0
      %441 = vmatpush1.bf16.msra.mxu0 0
      %442 = vmatprep.subr.bf16.mxu0 0
      %443 = vmatpush1.bf16.msra.mxu0 0
      %444 = vmatprep.subr.bf16.mxu0 0
      %445 = vmatpush1.bf16.msra.mxu0 0
      %446 = vmatprep.subr.bf16.mxu0 %v430
      %447 = vmatpush1.bf16.msra.mxu0 %v427
      %448 = vmatprep.subr.bf16.mxu0 0
      %449 = vmatpush2.bf16.msra.mxu0 0
      %450 = vmatprep.subr.bf16.mxu0 0
      %451 = vmatpush2.bf16.msra.mxu0 0
      %452 = vmatprep.subr.bf16.mxu0 0
      %453 = vmatpush2.bf16.msra.mxu0 0
      %454 = vmatprep.subr.bf16.mxu0 0
      %455 = vmatpush2.bf16.msra.mxu0 0
      %456 = vmatprep.subr.bf16.mxu0 0
      %457 = vmatpush2.bf16.msra.mxu0 0
      %458 = vmatprep.subr.bf16.mxu0 0
      %459 = vmatpush2.bf16.msra.mxu0 0
      %460 = vmatprep.subr.bf16.mxu0 0
      %461 = vmatpush2.bf16.msra.mxu0 0
      %462 = vmatprep.subr.bf16.mxu0 0
      %463 = vmatpush2.bf16.msra.mxu0 0
      %464 = vmatprep.mubr.bf16.mxu0 0
      %465 = vmatmul.mubr.bf16.gmra.mxu0 %v423
      %v466 = vpop.f32.mrf.mxu0
      %v467 = vadd.f32 0.0, %v466
      %v468 = vpop.f32.mrf.mxu0
      %v469 = vadd.f32 0.0, %v468
      %v470 = vpop.f32.mrf.mxu0
      %v471 = vpop.f32.mrf.mxu0
      %472 = vdwg.mxu0
      %v473 = vld [vmem:[%s2] sm:$0x3f]
      %475 = vset.pattern.permute.xlu0 0
      %476 = vperm.xlu0 %475, %v473
      %v477 = vpop.permute.xlu0 %476
      %v479 = vmul.f32 %v467, %v477
      %v480 = vmul.f32 %v469, %v477
      %v481 = vld [vmem:[%s3] sm:$0x3f]
      %483 = vset.pattern.permute.xlu0 0
      %484 = vperm.xlu0 %483, %v481
      %v485 = vpop.permute.xlu0 %484
      %v487 = vadd.f32 %v479, %v485
      %v488 = vadd.f32 %v480, %v485
      %v489 = vmax.f32 %v487, 0.0
      %v490 = vmax.f32 %v488, 0.0
      %v491 = vld [vmem:[%s10] sm:$0xf]
      %vm492 = vcmask 136192
      %493 = vst.msk [vmem:[#allocation2] sm:$0x3f] %vm492, 0.0
      %vm494 = vcmask 275592
      %495 = vst.msk [vmem:[#allocation2 + $0x10] sm:$0x3f] %vm494, 0.0
      %498 = vrot.lane.b32.xlu0 %v489, 17
      %v499 = vpop.permute.xlu0 %498
      %500 = vrot.lane.b32.xlu0 %v490, 17
      %v501 = vpop.permute.xlu0 %500
      %vm502 = vcmask 138240
      %v503 = vsel %vm502, %v499, %v501
      %vm507 = vcmask 1045640
      %508 = vst.msk [vmem:[#allocation2] sm:$0x3f] %vm507, %v499
      %509 = vst [vmem:[#allocation2 + $0x8] sm:$0x3f] %v503
      %510 = vst.msk [vmem:[#allocation2 + $0x10] sm:$0x3f] %vm492, %v501
      %511 = vst.msk [vmem:[#allocation3] sm:$0xff] %vm502, 0.0
      %vm512 = vcmask 277640
      %513 = vst.msk [vmem:[#allocation3 + $0x10] sm:$0xff] %vm512, 0.0
      %516 = vrot.lane.b32.xlu0 %v415, 17
      %v517 = vpop.permute.xlu0 %516
      %518 = vrot.lane.b32.xlu0 %v416, 17
      %v519 = vpop.permute.xlu0 %518
      %v520 = vsel %vm502, %v517, %v519
      %vm524 = vcmask 1047688
      %525 = vst.msk [vmem:[#allocation3] sm:$0xff] %vm524, %v517
      %526 = vst [vmem:[#allocation3 + $0x8] sm:$0xff] %v520
      %527 = vst.msk [vmem:[#allocation3 + $0x10] sm:$0xff] %vm502, %v519
      %v528 = vld [vmem:[%s4] sm:$0x3f]
      %v529 = vld [vmem:[#allocation2] sm:$0x3f]
      %v530 = vld [vmem:[#allocation2 + $0x8] sm:$0x3f]
      %532 = vset.pattern.permute.xlu0 0
      %533 = vperm.xlu0 %532, %v528
      %v534 = vpop.permute.xlu0 %533
      %v536 = vmul.f32 %v529, %v534
      %v537 = vmul.f32 %v530, %v534
      %v538 = vld [vmem:[#allocation2] sm:$0x3f]
      %v539 = vld [vmem:[#allocation2 + $0x8] sm:$0x3f]
      %v540 = vld [vmem:[#allocation2 + $0x10] sm:$0x3f]
      %541 = vset.pattern.permute.xlu0 3
      %542 = vperm.xlu0 %541, %v528
      %v543 = vpop.permute.xlu0 %542
      %v545 = vmul.f32 %v538, %v543
      %v546 = vmul.f32 %v539, %v543
      %v547 = vmul.f32 %v540, %v543
      %551 = vrot.lane.b32.xlu0 %v545, 112
      %v552 = vpop.permute.xlu0 %551
      %553 = vrot.lane.b32.xlu0 %v546, 112
      %v554 = vpop.permute.xlu0 %553
      %555 = vrot.lane.b32.xlu0 %v547, 112
      %v556 = vpop.permute.xlu0 %555
      %vm557 = vcmask 916480
      %v558 = vsel %vm557, %v552, %v554
      %v559 = vsel %vm557, %v554, %v556
      %v562 = vadd.f32 %v536, %v558
      %v563 = vadd.f32 %v537, %v559
      %564 = vset.pattern.permute.xlu0 6
      %565 = vperm.xlu0 %564, %v528
      %v566 = vpop.permute.xlu0 %565
      %v568 = vmul.f32 %v538, %v566
      %v569 = vmul.f32 %v539, %v566
      %v570 = vmul.f32 %v540, %v566
      %574 = vrot.lane.b32.xlu0 %v568, 96
      %v575 = vpop.permute.xlu0 %574
      %576 = vrot.lane.b32.xlu0 %v569, 96
      %v577 = vpop.permute.xlu0 %576
      %578 = vrot.lane.b32.xlu0 %v570, 96
      %v579 = vpop.permute.xlu0 %578
      %vm580 = vcmask 785408
      %v581 = vsel %vm580, %v575, %v577
      %v582 = vsel %vm580, %v577, %v579
      %v585 = vadd.f32 %v562, %v581
      %v586 = vadd.f32 %v563, %v582
      %v588 = vlaneseq
      %v589 = vshrl.u32 %v588, 7
      %v590 = vsub.s32 0, %v589
      %v591 = vrot.slane %v491, %v590
      %v592 = vlaneseq
      %v593 = vshrl.u32 %v592, 7
      %v594 = vsub.s32 2, %v593
      %v595 = vrot.slane %v491, %v594
      %v598 = vlaneseq
      %v599 = vshrl.u32 %v598, 7
      %v600 = vsub.s32 0, %v599
      %v601 = vrot.slane %v591, %v600
      %v602 = vlaneseq
      %v603 = vshrl.u32 %v602, 7
      %v604 = vsub.s32 0, %v603
      %v605 = vrot.slane %v595, %v604
      %v606 = vmul.f32 %v585, %v601
      %v607 = vmul.f32 %v586, %v605
      %608 = vset.pattern.permute.xlu0 1
      %609 = vperm.xlu0 %608, %v528
      %v610 = vpop.permute.xlu0 %609
      %v612 = vmul.f32 %v538, %v610
      %v613 = vmul.f32 %v539, %v610
      %v614 = vmul.f32 %v540, %v610
      %615 = vset.pattern.permute.xlu0 4
      %616 = vperm.xlu0 %615, %v528
      %v617 = vpop.permute.xlu0 %616
      %v619 = vmul.f32 %v538, %v617
      %v620 = vmul.f32 %v539, %v617
      %v621 = vmul.f32 %v540, %v617
      %625 = vrot.lane.b32.xlu0 %v619, 112
      %v626 = vpop.permute.xlu0 %625
      %627 = vrot.lane.b32.xlu0 %v620, 112
      %v628 = vpop.permute.xlu0 %627
      %629 = vrot.lane.b32.xlu0 %v621, 112
      %v630 = vpop.permute.xlu0 %629
      %v631 = vsel %vm557, %v626, %v628
      %v632 = vsel %vm557, %v628, %v630
      %v636 = vadd.f32 %v612, %v631
      %v637 = vadd.f32 %v613, %v632
      %v638 = vadd.f32 %v614, %v630
      %639 = vset.pattern.permute.xlu0 7
      %640 = vperm.xlu0 %639, %v528
      %v641 = vpop.permute.xlu0 %640
      %v643 = vmul.f32 %v538, %v641
      %v644 = vmul.f32 %v539, %v641
      %v645 = vmul.f32 %v540, %v641
      %649 = vrot.lane.b32.xlu0 %v643, 96
      %v650 = vpop.permute.xlu0 %649
      %651 = vrot.lane.b32.xlu0 %v644, 96
      %v652 = vpop.permute.xlu0 %651
      %653 = vrot.lane.b32.xlu0 %v645, 96
      %v654 = vpop.permute.xlu0 %653
      %v655 = vsel %vm580, %v650, %v652
      %v656 = vsel %vm580, %v652, %v654
      %v660 = vadd.f32 %v636, %v655
      %v661 = vadd.f32 %v637, %v656
      %v662 = vadd.f32 %v638, %v654
      %666 = vrot.lane.b32.xlu0 %v660, 127
      %v667 = vpop.permute.xlu0 %666
      %668 = vrot.lane.b32.xlu0 %v661, 127
      %v669 = vpop.permute.xlu0 %668
      %670 = vrot.lane.b32.xlu0 %v662, 127
      %v671 = vpop.permute.xlu0 %670
      %vm672 = vcmask 1039360
      %v673 = vsel %vm672, %v667, %v669
      %v674 = vsel %vm672, %v669, %v671
      %v677 = vadd.f32 %v606, %v673
      %v678 = vadd.f32 %v607, %v674
      %679 = vset.pattern.permute.xlu0 2
      %680 = vperm.xlu0 %679, %v528
      %v681 = vpop.permute.xlu0 %680
      %v683 = vmul.f32 %v538, %v681
      %v684 = vmul.f32 %v539, %v681
      %v685 = vmul.f32 %v540, %v681
      %686 = vset.pattern.permute.xlu0 5
      %687 = vperm.xlu0 %686, %v528
      %v688 = vpop.permute.xlu0 %687
      %v690 = vmul.f32 %v538, %v688
      %v691 = vmul.f32 %v539, %v688
      %v692 = vmul.f32 %v540, %v688
      %696 = vrot.lane.b32.xlu0 %v690, 112
      %v697 = vpop.permute.xlu0 %696
      %698 = vrot.lane.b32.xlu0 %v691, 112
      %v699 = vpop.permute.xlu0 %698
      %700 = vrot.lane.b32.xlu0 %v692, 112
      %v701 = vpop.permute.xlu0 %700
      %v702 = vsel %vm557, %v697, %v699
      %v703 = vsel %vm557, %v699, %v701
      %v707 = vadd.f32 %v683, %v702
      %v708 = vadd.f32 %v684, %v703
      %v709 = vadd.f32 %v685, %v701
      %710 = vset.pattern.permute.xlu0 8
      %711 = vperm.xlu0 %710, %v528
      %v712 = vpop.permute.xlu0 %711
      %v714 = vmul.f32 %v538, %v712
      %v715 = vmul.f32 %v539, %v712
      %v716 = vmul.f32 %v540, %v712
      %720 = vrot.lane.b32.xlu0 %v714, 96
      %v721 = vpop.permute.xlu0 %720
      %722 = vrot.lane.b32.xlu0 %v715, 96
      %v723 = vpop.permute.xlu0 %722
      %724 = vrot.lane.b32.xlu0 %v716, 96
      %v725 = vpop.permute.xlu0 %724
      %v726 = vsel %vm580, %v721, %v723
      %v727 = vsel %vm580, %v723, %v725
      %v731 = vadd.f32 %v707, %v726
      %v732 = vadd.f32 %v708, %v727
      %v733 = vadd.f32 %v709, %v725
      %v734 = vlaneseq
      %v735 = vshrl.u32 %v734, 7
      %v736 = vsub.s32 1, %v735
      %v737 = vrot.slane %v491, %v736
      %v738 = vlaneseq
      %v739 = vshrl.u32 %v738, 7
      %v740 = vsub.s32 3, %v739
      %v741 = vrot.slane %v491, %v740
      %v744 = vlaneseq
      %v745 = vshrl.u32 %v744, 7
      %v746 = vsub.s32 1, %v745
      %v747 = vrot.slane %v737, %v746
      %v748 = vlaneseq
      %v749 = vshrl.u32 %v748, 7
      %v750 = vsub.s32 1, %v749
      %v751 = vrot.slane %v741, %v750
      %754 = vrot.lane.b32.xlu0 %v747, 2
      %v755 = vpop.permute.xlu0 %754
      %756 = vrot.lane.b32.xlu0 %v751, 2
      %v757 = vpop.permute.xlu0 %756
      %vm758 = vcmask 15360
      %v759 = vsel %vm758, %v755, %v757
      %v763 = vmul.f32 %v731, %v755
      %v764 = vmul.f32 %v732, %v759
      %v765 = vmul.f32 %v733, %v757
      %769 = vrot.lane.b32.xlu0 %v763, 126
      %v770 = vpop.permute.xlu0 %769
      %771 = vrot.lane.b32.xlu0 %v764, 126
      %v772 = vpop.permute.xlu0 %771
      %773 = vrot.lane.b32.xlu0 %v765, 126
      %v774 = vpop.permute.xlu0 %773
      %vm775 = vcmask 1031168
      %v776 = vsel %vm775, %v770, %v772
      %v777 = vsel %vm775, %v772, %v774
      %v780 = vadd.f32 %v677, %v776
      %v781 = vadd.f32 %v678, %v777
      %v782 = vld [vmem:[%s5] sm:$0x3f]
      %784 = vset.pattern.permute.xlu0 0
      %785 = vperm.xlu0 %784, %v782
      %v786 = vpop.permute.xlu0 %785
      %v788 = vmul.f32 %v780, %v786
      %v789 = vmul.f32 %v781, %v786
      %v790 = vld [vmem:[%s6] sm:$0x3f]
      %792 = vset.pattern.permute.xlu0 0
      %793 = vperm.xlu0 %792, %v790
      %v794 = vpop.permute.xlu0 %793
      %v796 = vadd.f32 %v788, %v794
      %v797 = vadd.f32 %v789, %v794
      %v798 = vld [vmem:[%s11] sm:$0xff]
      %v799 = vld [vmem:[%s11 + $0x8] sm:$0xff]
      %v800 = vld [vmem:[%s11 + $0x10] sm:$0xff]
      %v801 = vld [vmem:[%s11 + $0x18] sm:$0xff]
      %v802 = vld [vmem:[%s11 + $0x20] sm:$0xff]
      %v803 = vld [vmem:[%s11 + $0x28] sm:$0xff]
      %v804 = vld [vmem:[%s11 + $0x30] sm:$0xff]
      %v805 = vld [vmem:[%s11 + $0x38] sm:$0xff]
      %v806 = vld [vmem:[%s11 + $0x40] sm:$0xff]
      %v807 = vld [vmem:[%s11 + $0x48] sm:$0xff]
      %v808 = vld [vmem:[%s11 + $0x50] sm:$0xff]
      %v809 = vld [vmem:[%s11 + $0x58] sm:$0xff]
      %v810 = vld [vmem:[%s11 + $0x60] sm:$0xff]
      %v811 = vld [vmem:[%s11 + $0x68] sm:$0xff]
      %v812 = vld [vmem:[%s11 + $0x70] sm:$0xff]
      %v813 = vld [vmem:[%s11 + $0x78] sm:$0xff]
      %v814 = vld [vmem:[%s11 + $0x80] sm:$0xff]
      %v815 = vld [vmem:[%s11 + $0x88] sm:$0xff]
      %v816 = vld [vmem:[%s11 + $0x90] sm:$0xff]
      %v817 = vld [vmem:[%s11 + $0x98] sm:$0xff]
      %v818 = vld [vmem:[%s11 + $0xa0] sm:$0xff]
      %v819 = vld [vmem:[%s11 + $0xa8] sm:$0xff]
      %v820 = vld [vmem:[%s11 + $0xb0] sm:$0xff]
      %v821 = vld [vmem:[%s11 + $0xb8] sm:$0xff]
      %v822 = vld [vmem:[%s11 + $0xc0] sm:$0xff]
      %v823 = vld [vmem:[%s11 + $0xc8] sm:$0xff]
      %v824 = vld [vmem:[%s11 + $0xd0] sm:$0xff]
      %v825 = vld [vmem:[%s11 + $0xd8] sm:$0xff]
      %v826 = vld [vmem:[%s11 + $0xe0] sm:$0xff]
      %v827 = vld [vmem:[%s11 + $0xe8] sm:$0xff]
      %v828 = vld [vmem:[%s11 + $0xf0] sm:$0xff]
      %v829 = vld [vmem:[%s11 + $0xf8] sm:$0xff]
      %830 = vmatprep.subr.mxu0 0.0
      %v831 = vand.u32 %v813, 4294901760
      %832 = vmatpush1.msra.mxu0 %v831
      %833 = vmatprep.subr.mxu0 0.0
      %v834 = vand.u32 %v812, 4294901760
      %835 = vmatpush1.msra.mxu0 %v834
      %836 = vmatprep.subr.mxu0 0.0
      %v837 = vand.u32 %v811, 4294901760
      %838 = vmatpush1.msra.mxu0 %v837
      %839 = vmatprep.subr.mxu0 0.0
      %v840 = vand.u32 %v810, 4294901760
      %841 = vmatpush1.msra.mxu0 %v840
      %842 = vmatprep.subr.mxu0 0.0
      %v843 = vand.u32 %v809, 4294901760
      %844 = vmatpush1.msra.mxu0 %v843
      %845 = vmatprep.subr.mxu0 0.0
      %v846 = vand.u32 %v808, 4294901760
      %847 = vmatpush1.msra.mxu0 %v846
      %848 = vmatprep.subr.mxu0 0.0
      %v849 = vand.u32 %v807, 4294901760
      %850 = vmatpush1.msra.mxu0 %v849
      %851 = vmatprep.subr.mxu0 0.0
      %v852 = vand.u32 %v806, 4294901760
      %853 = vmatpush1.msra.mxu0 %v852
      %854 = vmatprep.subr.mxu0 0.0
      %v855 = vand.u32 %v805, 4294901760
      %856 = vmatpush1.msra.mxu0 %v855
      %857 = vmatprep.subr.mxu0 0.0
      %v858 = vand.u32 %v804, 4294901760
      %859 = vmatpush1.msra.mxu0 %v858
      %860 = vmatprep.subr.mxu0 0.0
      %v861 = vand.u32 %v803, 4294901760
      %862 = vmatpush1.msra.mxu0 %v861
      %863 = vmatprep.subr.mxu0 0.0
      %v864 = vand.u32 %v802, 4294901760
      %865 = vmatpush1.msra.mxu0 %v864
      %866 = vmatprep.subr.mxu0 0.0
      %v867 = vand.u32 %v801, 4294901760
      %868 = vmatpush1.msra.mxu0 %v867
      %869 = vmatprep.subr.mxu0 0.0
      %v870 = vand.u32 %v800, 4294901760
      %871 = vmatpush1.msra.mxu0 %v870
      %872 = vmatprep.subr.mxu0 0.0
      %v873 = vand.u32 %v799, 4294901760
      %874 = vmatpush1.msra.mxu0 %v873
      %875 = vmatprep.subr.mxu0 0.0
      %v876 = vand.u32 %v798, 4294901760
      %877 = vmatpush1.msra.mxu0 %v876
      %878 = vmatprep.subr.mxu0 0.0
      %v879 = vand.u32 %v829, 4294901760
      %880 = vmatpush2.msra.mxu0 %v879
      %881 = vmatprep.subr.mxu0 0.0
      %v882 = vand.u32 %v828, 4294901760
      %883 = vmatpush2.msra.mxu0 %v882
      %884 = vmatprep.subr.mxu0 0.0
      %v885 = vand.u32 %v827, 4294901760
      %886 = vmatpush2.msra.mxu0 %v885
      %887 = vmatprep.subr.mxu0 0.0
      %v888 = vand.u32 %v826, 4294901760
      %889 = vmatpush2.msra.mxu0 %v888
      %890 = vmatprep.subr.mxu0 0.0
      %v891 = vand.u32 %v825, 4294901760
      %892 = vmatpush2.msra.mxu0 %v891
      %893 = vmatprep.subr.mxu0 0.0
      %v894 = vand.u32 %v824, 4294901760
      %895 = vmatpush2.msra.mxu0 %v894
      %896 = vmatprep.subr.mxu0 0.0
      %v897 = vand.u32 %v823, 4294901760
      %898 = vmatpush2.msra.mxu0 %v897
      %899 = vmatprep.subr.mxu0 0.0
      %v900 = vand.u32 %v822, 4294901760
      %901 = vmatpush2.msra.mxu0 %v900
      %902 = vmatprep.subr.mxu0 0.0
      %v903 = vand.u32 %v821, 4294901760
      %904 = vmatpush2.msra.mxu0 %v903
      %905 = vmatprep.subr.mxu0 0.0
      %v906 = vand.u32 %v820, 4294901760
      %907 = vmatpush2.msra.mxu0 %v906
      %908 = vmatprep.subr.mxu0 0.0
      %v909 = vand.u32 %v819, 4294901760
      %910 = vmatpush2.msra.mxu0 %v909
      %911 = vmatprep.subr.mxu0 0.0
      %v912 = vand.u32 %v818, 4294901760
      %913 = vmatpush2.msra.mxu0 %v912
      %914 = vmatprep.subr.mxu0 0.0
      %v915 = vand.u32 %v817, 4294901760
      %916 = vmatpush2.msra.mxu0 %v915
      %917 = vmatprep.subr.mxu0 0.0
      %v918 = vand.u32 %v816, 4294901760
      %919 = vmatpush2.msra.mxu0 %v918
      %920 = vmatprep.subr.mxu0 0.0
      %v921 = vand.u32 %v815, 4294901760
      %922 = vmatpush2.msra.mxu0 %v921
      %923 = vmatprep.subr.mxu0 0.0
      %v924 = vand.u32 %v814, 4294901760
      %925 = vmatpush2.msra.mxu0 %v924
      %v926 = vand.u32 %v797, 4294901760
      %v927 = vsub.f32 %v797, %v926
      %v928 = vand.u32 %v927, 4294901760
      %v929 = vsub.f32 %v927, %v928
      %v930 = vand.u32 %v929, 4294901760
      %931 = vmatprep.mubr.f32.mxu0 %v930
      %v932 = vand.u32 %v796, 4294901760
      %v933 = vsub.f32 %v796, %v932
      %v934 = vand.u32 %v933, 4294901760
      %v935 = vsub.f32 %v933, %v934
      %v936 = vand.u32 %v935, 4294901760
      %937 = vmatmul.mubr.f32.gmra.mxu0 %v936
      %v938 = vpop.f32.mrf.mxu0
      %v939 = vadd.f32 0.0, %v938
      %v940 = vpop.f32.mrf.mxu0
      %941 = vdwg.mxu0
      %942 = vmatprep.subr.mxu0 0.0
      %v943 = vand.u32 %v813, 4294901760
      %v944 = vsub.f32 %v813, %v943
      %v945 = vand.u32 %v944, 4294901760
      %v946 = vsub.f32 %v944, %v945
      %v947 = vand.u32 %v946, 4294901760
      %948 = vmatpush1.msra.mxu0 %v947
      %949 = vmatprep.subr.mxu0 0.0
      %v950 = vand.u32 %v812, 4294901760
      %v951 = vsub.f32 %v812, %v950
      %v952 = vand.u32 %v951, 4294901760
      %v953 = vsub.f32 %v951, %v952
      %v954 = vand.u32 %v953, 4294901760
      %955 = vmatpush1.msra.mxu0 %v954
      %956 = vmatprep.subr.mxu0 0.0
      %v957 = vand.u32 %v811, 4294901760
      %v958 = vsub.f32 %v811, %v957
      %v959 = vand.u32 %v958, 4294901760
      %v960 = vsub.f32 %v958, %v959
      %v961 = vand.u32 %v960, 4294901760
      %962 = vmatpush1.msra.mxu0 %v961
      %963 = vmatprep.subr.mxu0 0.0
      %v964 = vand.u32 %v810, 4294901760
      %v965 = vsub.f32 %v810, %v964
      %v966 = vand.u32 %v965, 4294901760
      %v967 = vsub.f32 %v965, %v966
      %v968 = vand.u32 %v967, 4294901760
      %969 = vmatpush1.msra.mxu0 %v968
      %970 = vmatprep.subr.mxu0 0.0
      %v971 = vand.u32 %v809, 4294901760
      %v972 = vsub.f32 %v809, %v971
      %v973 = vand.u32 %v972, 4294901760
      %v974 = vsub.f32 %v972, %v973
      %v975 = vand.u32 %v974, 4294901760
      %976 = vmatpush1.msra.mxu0 %v975
      %977 = vmatprep.subr.mxu0 0.0
      %v978 = vand.u32 %v808, 4294901760
      %v979 = vsub.f32 %v808, %v978
      %v980 = vand.u32 %v979, 4294901760
      %v981 = vsub.f32 %v979, %v980
      %v982 = vand.u32 %v981, 4294901760
      %983 = vmatpush1.msra.mxu0 %v982
      %984 = vmatprep.subr.mxu0 0.0
      %v985 = vand.u32 %v807, 4294901760
      %v986 = vsub.f32 %v807, %v985
      %v987 = vand.u32 %v986, 4294901760
      %v988 = vsub.f32 %v986, %v987
      %v989 = vand.u32 %v988, 4294901760
      %990 = vmatpush1.msra.mxu0 %v989
      %991 = vmatprep.subr.mxu0 0.0
      %v992 = vand.u32 %v806, 4294901760
      %v993 = vsub.f32 %v806, %v992
      %v994 = vand.u32 %v993, 4294901760
      %v995 = vsub.f32 %v993, %v994
      %v996 = vand.u32 %v995, 4294901760
      %997 = vmatpush1.msra.mxu0 %v996
      %998 = vmatprep.subr.mxu0 0.0
      %v999 = vand.u32 %v805, 4294901760
      %v1000 = vsub.f32 %v805, %v999
      %v1001 = vand.u32 %v1000, 4294901760
      %v1002 = vsub.f32 %v1000, %v1001
      %v1003 = vand.u32 %v1002, 4294901760
      %1004 = vmatpush1.msra.mxu0 %v1003
      %1005 = vmatprep.subr.mxu0 0.0
      %v1006 = vand.u32 %v804, 4294901760
      %v1007 = vsub.f32 %v804, %v1006
      %v1008 = vand.u32 %v1007, 4294901760
      %v1009 = vsub.f32 %v1007, %v1008
      %v1010 = vand.u32 %v1009, 4294901760
      %1011 = vmatpush1.msra.mxu0 %v1010
      %1012 = vmatprep.subr.mxu0 0.0
      %v1013 = vand.u32 %v803, 4294901760
      %v1014 = vsub.f32 %v803, %v1013
      %v1015 = vand.u32 %v1014, 4294901760
      %v1016 = vsub.f32 %v1014, %v1015
      %v1017 = vand.u32 %v1016, 4294901760
      %1018 = vmatpush1.msra.mxu0 %v1017
      %1019 = vmatprep.subr.mxu0 0.0
      %v1020 = vand.u32 %v802, 4294901760
      %v1021 = vsub.f32 %v802, %v1020
      %v1022 = vand.u32 %v1021, 4294901760
      %v1023 = vsub.f32 %v1021, %v1022
      %v1024 = vand.u32 %v1023, 4294901760
      %1025 = vmatpush1.msra.mxu0 %v1024
      %1026 = vmatprep.subr.mxu0 0.0
      %v1027 = vand.u32 %v801, 4294901760
      %v1028 = vsub.f32 %v801, %v1027
      %v1029 = vand.u32 %v1028, 4294901760
      %v1030 = vsub.f32 %v1028, %v1029
      %v1031 = vand.u32 %v1030, 4294901760
      %1032 = vmatpush1.msra.mxu0 %v1031
      %1033 = vmatprep.subr.mxu0 0.0
      %v1034 = vand.u32 %v800, 4294901760
      %v1035 = vsub.f32 %v800, %v1034
      %v1036 = vand.u32 %v1035, 4294901760
      %v1037 = vsub.f32 %v1035, %v1036
      %v1038 = vand.u32 %v1037, 4294901760
      %1039 = vmatpush1.msra.mxu0 %v1038
      %1040 = vmatprep.subr.mxu0 0.0
      %v1041 = vand.u32 %v799, 4294901760
      %v1042 = vsub.f32 %v799, %v1041
      %v1043 = vand.u32 %v1042, 4294901760
      %v1044 = vsub.f32 %v1042, %v1043
      %v1045 = vand.u32 %v1044, 4294901760
      %1046 = vmatpush1.msra.mxu0 %v1045
      %1047 = vmatprep.subr.mxu0 0.0
      %v1048 = vand.u32 %v798, 4294901760
      %v1049 = vsub.f32 %v798, %v1048
      %v1050 = vand.u32 %v1049, 4294901760
      %v1051 = vsub.f32 %v1049, %v1050
      %v1052 = vand.u32 %v1051, 4294901760
      %1053 = vmatpush1.msra.mxu0 %v1052
      %1054 = vmatprep.subr.mxu0 0.0
      %v1055 = vand.u32 %v829, 4294901760
      %v1056 = vsub.f32 %v829, %v1055
      %v1057 = vand.u32 %v1056, 4294901760
      %v1058 = vsub.f32 %v1056, %v1057
      %v1059 = vand.u32 %v1058, 4294901760
      %1060 = vmatpush2.msra.mxu0 %v1059
      %1061 = vmatprep.subr.mxu0 0.0
      %v1062 = vand.u32 %v828, 4294901760
      %v1063 = vsub.f32 %v828, %v1062
      %v1064 = vand.u32 %v1063, 4294901760
      %v1065 = vsub.f32 %v1063, %v1064
      %v1066 = vand.u32 %v1065, 4294901760
      %1067 = vmatpush2.msra.mxu0 %v1066
      %1068 = vmatprep.subr.mxu0 0.0
      %v1069 = vand.u32 %v827, 4294901760
      %v1070 = vsub.f32 %v827, %v1069
      %v1071 = vand.u32 %v1070, 4294901760
      %v1072 = vsub.f32 %v1070, %v1071
      %v1073 = vand.u32 %v1072, 4294901760
      %1074 = vmatpush2.msra.mxu0 %v1073
      %1075 = vmatprep.subr.mxu0 0.0
      %v1076 = vand.u32 %v826, 4294901760
      %v1077 = vsub.f32 %v826, %v1076
      %v1078 = vand.u32 %v1077, 4294901760
      %v1079 = vsub.f32 %v1077, %v1078
      %v1080 = vand.u32 %v1079, 4294901760
      %1081 = vmatpush2.msra.mxu0 %v1080
      %1082 = vmatprep.subr.mxu0 0.0
      %v1083 = vand.u32 %v825, 4294901760
      %v1084 = vsub.f32 %v825, %v1083
      %v1085 = vand.u32 %v1084, 4294901760
      %v1086 = vsub.f32 %v1084, %v1085
      %v1087 = vand.u32 %v1086, 4294901760
      %1088 = vmatpush2.msra.mxu0 %v1087
      %1089 = vmatprep.subr.mxu0 0.0
      %v1090 = vand.u32 %v824, 4294901760
      %v1091 = vsub.f32 %v824, %v1090
      %v1092 = vand.u32 %v1091, 4294901760
      %v1093 = vsub.f32 %v1091, %v1092
      %v1094 = vand.u32 %v1093, 4294901760
      %1095 = vmatpush2.msra.mxu0 %v1094
      %1096 = vmatprep.subr.mxu0 0.0
      %v1097 = vand.u32 %v823, 4294901760
      %v1098 = vsub.f32 %v823, %v1097
      %v1099 = vand.u32 %v1098, 4294901760
      %v1100 = vsub.f32 %v1098, %v1099
      %v1101 = vand.u32 %v1100, 4294901760
      %1102 = vmatpush2.msra.mxu0 %v1101
      %1103 = vmatprep.subr.mxu0 0.0
      %v1104 = vand.u32 %v822, 4294901760
      %v1105 = vsub.f32 %v822, %v1104
      %v1106 = vand.u32 %v1105, 4294901760
      %v1107 = vsub.f32 %v1105, %v1106
      %v1108 = vand.u32 %v1107, 4294901760
      %1109 = vmatpush2.msra.mxu0 %v1108
      %1110 = vmatprep.subr.mxu0 0.0
      %v1111 = vand.u32 %v821, 4294901760
      %v1112 = vsub.f32 %v821, %v1111
      %v1113 = vand.u32 %v1112, 4294901760
      %v1114 = vsub.f32 %v1112, %v1113
      %v1115 = vand.u32 %v1114, 4294901760
      %1116 = vmatpush2.msra.mxu0 %v1115
      %1117 = vmatprep.subr.mxu0 0.0
      %v1118 = vand.u32 %v820, 4294901760
      %v1119 = vsub.f32 %v820, %v1118
      %v1120 = vand.u32 %v1119, 4294901760
      %v1121 = vsub.f32 %v1119, %v1120
      %v1122 = vand.u32 %v1121, 4294901760
      %1123 = vmatpush2.msra.mxu0 %v1122
      %1124 = vmatprep.subr.mxu0 0.0
      %v1125 = vand.u32 %v819, 4294901760
      %v1126 = vsub.f32 %v819, %v1125
      %v1127 = vand.u32 %v1126, 4294901760
      %v1128 = vsub.f32 %v1126, %v1127
      %v1129 = vand.u32 %v1128, 4294901760
      %1130 = vmatpush2.msra.mxu0 %v1129
      %1131 = vmatprep.subr.mxu0 0.0
      %v1132 = vand.u32 %v818, 4294901760
      %v1133 = vsub.f32 %v818, %v1132
      %v1134 = vand.u32 %v1133, 4294901760
      %v1135 = vsub.f32 %v1133, %v1134
      %v1136 = vand.u32 %v1135, 4294901760
      %1137 = vmatpush2.msra.mxu0 %v1136
      %1138 = vmatprep.subr.mxu0 0.0
      %v1139 = vand.u32 %v817, 4294901760
      %v1140 = vsub.f32 %v817, %v1139
      %v1141 = vand.u32 %v1140, 4294901760
      %v1142 = vsub.f32 %v1140, %v1141
      %v1143 = vand.u32 %v1142, 4294901760
      %1144 = vmatpush2.msra.mxu0 %v1143
      %1145 = vmatprep.subr.mxu0 0.0
      %v1146 = vand.u32 %v816, 4294901760
      %v1147 = vsub.f32 %v816, %v1146
      %v1148 = vand.u32 %v1147, 4294901760
      %v1149 = vsub.f32 %v1147, %v1148
      %v1150 = vand.u32 %v1149, 4294901760
      %1151 = vmatpush2.msra.mxu0 %v1150
      %1152 = vmatprep.subr.mxu0 0.0
      %v1153 = vand.u32 %v815, 4294901760
      %v1154 = vsub.f32 %v815, %v1153
      %v1155 = vand.u32 %v1154, 4294901760
      %v1156 = vsub.f32 %v1154, %v1155
      %v1157 = vand.u32 %v1156, 4294901760
      %1158 = vmatpush2.msra.mxu0 %v1157
      %1159 = vmatprep.subr.mxu0 0.0
      %v1160 = vand.u32 %v814, 4294901760
      %v1161 = vsub.f32 %v814, %v1160
      %v1162 = vand.u32 %v1161, 4294901760
      %v1163 = vsub.f32 %v1161, %v1162
      %v1164 = vand.u32 %v1163, 4294901760
      %1165 = vmatpush2.msra.mxu0 %v1164
      %v1166 = vand.u32 %v797, 4294901760
      %1167 = vmatprep.mubr.f32.mxu0 %v1166
      %v1168 = vand.u32 %v796, 4294901760
      %1169 = vmatmul.mubr.f32.gmra.mxu0 %v1168
      %v1170 = vpop.f32.mrf.mxu0
      %v1171 = vadd.f32 %v939, %v1170
      %v1172 = vpop.f32.mrf.mxu0
      %1173 = vdwg.mxu0
      %1174 = vmatprep.subr.mxu0 0.0
      %v1175 = vand.u32 %v813, 4294901760
      %v1176 = vsub.f32 %v813, %v1175
      %1177 = vmatpush1.msra.mxu0 %v1176
      %1178 = vmatprep.subr.mxu0 0.0
      %v1179 = vand.u32 %v812, 4294901760
      %v1180 = vsub.f32 %v812, %v1179
      %1181 = vmatpush1.msra.mxu0 %v1180
      %1182 = vmatprep.subr.mxu0 0.0
      %v1183 = vand.u32 %v811, 4294901760
      %v1184 = vsub.f32 %v811, %v1183
      %1185 = vmatpush1.msra.mxu0 %v1184
      %1186 = vmatprep.subr.mxu0 0.0
      %v1187 = vand.u32 %v810, 4294901760
      %v1188 = vsub.f32 %v810, %v1187
      %1189 = vmatpush1.msra.mxu0 %v1188
      %1190 = vmatprep.subr.mxu0 0.0
      %v1191 = vand.u32 %v809, 4294901760
      %v1192 = vsub.f32 %v809, %v1191
      %1193 = vmatpush1.msra.mxu0 %v1192
      %1194 = vmatprep.subr.mxu0 0.0
      %v1195 = vand.u32 %v808, 4294901760
      %v1196 = vsub.f32 %v808, %v1195
      %1197 = vmatpush1.msra.mxu0 %v1196
      %1198 = vmatprep.subr.mxu0 0.0
      %v1199 = vand.u32 %v807, 4294901760
      %v1200 = vsub.f32 %v807, %v1199
      %1201 = vmatpush1.msra.mxu0 %v1200
      %1202 = vmatprep.subr.mxu0 0.0
      %v1203 = vand.u32 %v806, 4294901760
      %v1204 = vsub.f32 %v806, %v1203
      %1205 = vmatpush1.msra.mxu0 %v1204
      %1206 = vmatprep.subr.mxu0 0.0
      %v1207 = vand.u32 %v805, 4294901760
      %v1208 = vsub.f32 %v805, %v1207
      %1209 = vmatpush1.msra.mxu0 %v1208
      %1210 = vmatprep.subr.mxu0 0.0
      %v1211 = vand.u32 %v804, 4294901760
      %v1212 = vsub.f32 %v804, %v1211
      %1213 = vmatpush1.msra.mxu0 %v1212
      %1214 = vmatprep.subr.mxu0 0.0
      %v1215 = vand.u32 %v803, 4294901760
      %v1216 = vsub.f32 %v803, %v1215
      %1217 = vmatpush1.msra.mxu0 %v1216
      %1218 = vmatprep.subr.mxu0 0.0
      %v1219 = vand.u32 %v802, 4294901760
      %v1220 = vsub.f32 %v802, %v1219
      %1221 = vmatpush1.msra.mxu0 %v1220
      %1222 = vmatprep.subr.mxu0 0.0
      %v1223 = vand.u32 %v801, 4294901760
      %v1224 = vsub.f32 %v801, %v1223
      %1225 = vmatpush1.msra.mxu0 %v1224
      %1226 = vmatprep.subr.mxu0 0.0
      %v1227 = vand.u32 %v800, 4294901760
      %v1228 = vsub.f32 %v800, %v1227
      %1229 = vmatpush1.msra.mxu0 %v1228
      %1230 = vmatprep.subr.mxu0 0.0
      %v1231 = vand.u32 %v799, 4294901760
      %v1232 = vsub.f32 %v799, %v1231
      %1233 = vmatpush1.msra.mxu0 %v1232
      %1234 = vmatprep.subr.mxu0 0.0
      %v1235 = vand.u32 %v798, 4294901760
      %v1236 = vsub.f32 %v798, %v1235
      %1237 = vmatpush1.msra.mxu0 %v1236
      %1238 = vmatprep.subr.mxu0 0.0
      %v1239 = vand.u32 %v829, 4294901760
      %v1240 = vsub.f32 %v829, %v1239
      %1241 = vmatpush2.msra.mxu0 %v1240
      %1242 = vmatprep.subr.mxu0 0.0
      %v1243 = vand.u32 %v828, 4294901760
      %v1244 = vsub.f32 %v828, %v1243
      %1245 = vmatpush2.msra.mxu0 %v1244
      %1246 = vmatprep.subr.mxu0 0.0
      %v1247 = vand.u32 %v827, 4294901760
      %v1248 = vsub.f32 %v827, %v1247
      %1249 = vmatpush2.msra.mxu0 %v1248
      %1250 = vmatprep.subr.mxu0 0.0
      %v1251 = vand.u32 %v826, 4294901760
      %v1252 = vsub.f32 %v826, %v1251
      %1253 = vmatpush2.msra.mxu0 %v1252
      %1254 = vmatprep.subr.mxu0 0.0
      %v1255 = vand.u32 %v825, 4294901760
      %v1256 = vsub.f32 %v825, %v1255
      %1257 = vmatpush2.msra.mxu0 %v1256
      %1258 = vmatprep.subr.mxu0 0.0
      %v1259 = vand.u32 %v824, 4294901760
      %v1260 = vsub.f32 %v824, %v1259
      %1261 = vmatpush2.msra.mxu0 %v1260
      %1262 = vmatprep.subr.mxu0 0.0
      %v1263 = vand.u32 %v823, 4294901760
      %v1264 = vsub.f32 %v823, %v1263
      %1265 = vmatpush2.msra.mxu0 %v1264
      %1266 = vmatprep.subr.mxu0 0.0
      %v1267 = vand.u32 %v822, 4294901760
      %v1268 = vsub.f32 %v822, %v1267
      %1269 = vmatpush2.msra.mxu0 %v1268
      %1270 = vmatprep.subr.mxu0 0.0
      %v1271 = vand.u32 %v821, 4294901760
      %v1272 = vsub.f32 %v821, %v1271
      %1273 = vmatpush2.msra.mxu0 %v1272
      %1274 = vmatprep.subr.mxu0 0.0
      %v1275 = vand.u32 %v820, 4294901760
      %v1276 = vsub.f32 %v820, %v1275
      %1277 = vmatpush2.msra.mxu0 %v1276
      %1278 = vmatprep.subr.mxu0 0.0
      %v1279 = vand.u32 %v819, 4294901760
      %v1280 = vsub.f32 %v819, %v1279
      %1281 = vmatpush2.msra.mxu0 %v1280
      %1282 = vmatprep.subr.mxu0 0.0
      %v1283 = vand.u32 %v818, 4294901760
      %v1284 = vsub.f32 %v818, %v1283
      %1285 = vmatpush2.msra.mxu0 %v1284
      %1286 = vmatprep.subr.mxu0 0.0
      %v1287 = vand.u32 %v817, 4294901760
      %v1288 = vsub.f32 %v817, %v1287
      %1289 = vmatpush2.msra.mxu0 %v1288
      %1290 = vmatprep.subr.mxu0 0.0
      %v1291 = vand.u32 %v816, 4294901760
      %v1292 = vsub.f32 %v816, %v1291
      %1293 = vmatpush2.msra.mxu0 %v1292
      %1294 = vmatprep.subr.mxu0 0.0
      %v1295 = vand.u32 %v815, 4294901760
      %v1296 = vsub.f32 %v815, %v1295
      %1297 = vmatpush2.msra.mxu0 %v1296
      %1298 = vmatprep.subr.mxu0 0.0
      %v1299 = vand.u32 %v814, 4294901760
      %v1300 = vsub.f32 %v814, %v1299
      %1301 = vmatpush2.msra.mxu0 %v1300
      %v1302 = vand.u32 %v797, 4294901760
      %v1303 = vsub.f32 %v797, %v1302
      %1304 = vmatprep.mubr.f32.mxu0 %v1303
      %v1305 = vand.u32 %v796, 4294901760
      %v1306 = vsub.f32 %v796, %v1305
      %1307 = vmatmul.mubr.f32.gmra.mxu0 %v1306
      %v1308 = vpop.f32.mrf.mxu0
      %v1309 = vadd.f32 %v1171, %v1308
      %v1310 = vpop.f32.mrf.mxu0
      %1311 = vdwg.mxu0
      %1312 = vmatprep.subr.mxu0 0.0
      %v1313 = vand.u32 %v813, 4294901760
      %1314 = vmatpush1.msra.mxu0 %v1313
      %1315 = vmatprep.subr.mxu0 0.0
      %v1316 = vand.u32 %v812, 4294901760
      %1317 = vmatpush1.msra.mxu0 %v1316
      %1318 = vmatprep.subr.mxu0 0.0
      %v1319 = vand.u32 %v811, 4294901760
      %1320 = vmatpush1.msra.mxu0 %v1319
      %1321 = vmatprep.subr.mxu0 0.0
      %v1322 = vand.u32 %v810, 4294901760
      %1323 = vmatpush1.msra.mxu0 %v1322
      %1324 = vmatprep.subr.mxu0 0.0
      %v1325 = vand.u32 %v809, 4294901760
      %1326 = vmatpush1.msra.mxu0 %v1325
      %1327 = vmatprep.subr.mxu0 0.0
      %v1328 = vand.u32 %v808, 4294901760
      %1329 = vmatpush1.msra.mxu0 %v1328
      %1330 = vmatprep.subr.mxu0 0.0
      %v1331 = vand.u32 %v807, 4294901760
      %1332 = vmatpush1.msra.mxu0 %v1331
      %1333 = vmatprep.subr.mxu0 0.0
      %v1334 = vand.u32 %v806, 4294901760
      %1335 = vmatpush1.msra.mxu0 %v1334
      %1336 = vmatprep.subr.mxu0 0.0
      %v1337 = vand.u32 %v805, 4294901760
      %1338 = vmatpush1.msra.mxu0 %v1337
      %1339 = vmatprep.subr.mxu0 0.0
      %v1340 = vand.u32 %v804, 4294901760
      %1341 = vmatpush1.msra.mxu0 %v1340
      %1342 = vmatprep.subr.mxu0 0.0
      %v1343 = vand.u32 %v803, 4294901760
      %1344 = vmatpush1.msra.mxu0 %v1343
      %1345 = vmatprep.subr.mxu0 0.0
      %v1346 = vand.u32 %v802, 4294901760
      %1347 = vmatpush1.msra.mxu0 %v1346
      %1348 = vmatprep.subr.mxu0 0.0
      %v1349 = vand.u32 %v801, 4294901760
      %1350 = vmatpush1.msra.mxu0 %v1349
      %1351 = vmatprep.subr.mxu0 0.0
      %v1352 = vand.u32 %v800, 4294901760
      %1353 = vmatpush1.msra.mxu0 %v1352
      %1354 = vmatprep.subr.mxu0 0.0
      %v1355 = vand.u32 %v799, 4294901760
      %1356 = vmatpush1.msra.mxu0 %v1355
      %1357 = vmatprep.subr.mxu0 0.0
      %v1358 = vand.u32 %v798, 4294901760
      %1359 = vmatpush1.msra.mxu0 %v1358
      %1360 = vmatprep.subr.mxu0 0.0
      %v1361 = vand.u32 %v829, 4294901760
      %1362 = vmatpush2.msra.mxu0 %v1361
      %1363 = vmatprep.subr.mxu0 0.0
      %v1364 = vand.u32 %v828, 4294901760
      %1365 = vmatpush2.msra.mxu0 %v1364
      %1366 = vmatprep.subr.mxu0 0.0
      %v1367 = vand.u32 %v827, 4294901760
      %1368 = vmatpush2.msra.mxu0 %v1367
      %1369 = vmatprep.subr.mxu0 0.0
      %v1370 = vand.u32 %v826, 4294901760
      %1371 = vmatpush2.msra.mxu0 %v1370
      %1372 = vmatprep.subr.mxu0 0.0
      %v1373 = vand.u32 %v825, 4294901760
      %1374 = vmatpush2.msra.mxu0 %v1373
      %1375 = vmatprep.subr.mxu0 0.0
      %v1376 = vand.u32 %v824, 4294901760
      %1377 = vmatpush2.msra.mxu0 %v1376
      %1378 = vmatprep.subr.mxu0 0.0
      %v1379 = vand.u32 %v823, 4294901760
      %1380 = vmatpush2.msra.mxu0 %v1379
      %1381 = vmatprep.subr.mxu0 0.0
      %v1382 = vand.u32 %v822, 4294901760
      %1383 = vmatpush2.msra.mxu0 %v1382
      %1384 = vmatprep.subr.mxu0 0.0
      %v1385 = vand.u32 %v821, 4294901760
      %1386 = vmatpush2.msra.mxu0 %v1385
      %1387 = vmatprep.subr.mxu0 0.0
      %v1388 = vand.u32 %v820, 4294901760
      %1389 = vmatpush2.msra.mxu0 %v1388
      %1390 = vmatprep.subr.mxu0 0.0
      %v1391 = vand.u32 %v819, 4294901760
      %1392 = vmatpush2.msra.mxu0 %v1391
      %1393 = vmatprep.subr.mxu0 0.0
      %v1394 = vand.u32 %v818, 4294901760
      %1395 = vmatpush2.msra.mxu0 %v1394
      %1396 = vmatprep.subr.mxu0 0.0
      %v1397 = vand.u32 %v817, 4294901760
      %1398 = vmatpush2.msra.mxu0 %v1397
      %1399 = vmatprep.subr.mxu0 0.0
      %v1400 = vand.u32 %v816, 4294901760
      %1401 = vmatpush2.msra.mxu0 %v1400
      %1402 = vmatprep.subr.mxu0 0.0
      %v1403 = vand.u32 %v815, 4294901760
      %1404 = vmatpush2.msra.mxu0 %v1403
      %1405 = vmatprep.subr.mxu0 0.0
      %v1406 = vand.u32 %v814, 4294901760
      %1407 = vmatpush2.msra.mxu0 %v1406
      %v1408 = vand.u32 %v797, 4294901760
      %v1409 = vsub.f32 %v797, %v1408
      %v1410 = vand.u32 %v1409, 4294901760
      %1411 = vmatprep.mubr.f32.mxu0 %v1410
      %v1412 = vand.u32 %v796, 4294901760
      %v1413 = vsub.f32 %v796, %v1412
      %v1414 = vand.u32 %v1413, 4294901760
      %1415 = vmatmul.mubr.f32.gmra.mxu0 %v1414
      %v1416 = vpop.f32.mrf.mxu0
      %v1417 = vadd.f32 %v1309, %v1416
      %v1418 = vpop.f32.mrf.mxu0
      %1419 = vdwg.mxu0
      %1420 = vmatprep.subr.mxu0 0.0
      %v1421 = vand.u32 %v813, 4294901760
      %v1422 = vsub.f32 %v813, %v1421
      %v1423 = vand.u32 %v1422, 4294901760
      %1424 = vmatpush1.msra.mxu0 %v1423
      %1425 = vmatprep.subr.mxu0 0.0
      %v1426 = vand.u32 %v812, 4294901760
      %v1427 = vsub.f32 %v812, %v1426
      %v1428 = vand.u32 %v1427, 4294901760
      %1429 = vmatpush1.msra.mxu0 %v1428
      %1430 = vmatprep.subr.mxu0 0.0
      %v1431 = vand.u32 %v811, 4294901760
      %v1432 = vsub.f32 %v811, %v1431
      %v1433 = vand.u32 %v1432, 4294901760
      %1434 = vmatpush1.msra.mxu0 %v1433
      %1435 = vmatprep.subr.mxu0 0.0
      %v1436 = vand.u32 %v810, 4294901760
      %v1437 = vsub.f32 %v810, %v1436
      %v1438 = vand.u32 %v1437, 4294901760
      %1439 = vmatpush1.msra.mxu0 %v1438
      %1440 = vmatprep.subr.mxu0 0.0
      %v1441 = vand.u32 %v809, 4294901760
      %v1442 = vsub.f32 %v809, %v1441
      %v1443 = vand.u32 %v1442, 4294901760
      %1444 = vmatpush1.msra.mxu0 %v1443
      %1445 = vmatprep.subr.mxu0 0.0
      %v1446 = vand.u32 %v808, 4294901760
      %v1447 = vsub.f32 %v808, %v1446
      %v1448 = vand.u32 %v1447, 4294901760
      %1449 = vmatpush1.msra.mxu0 %v1448
      %1450 = vmatprep.subr.mxu0 0.0
      %v1451 = vand.u32 %v807, 4294901760
      %v1452 = vsub.f32 %v807, %v1451
      %v1453 = vand.u32 %v1452, 4294901760
      %1454 = vmatpush1.msra.mxu0 %v1453
      %1455 = vmatprep.subr.mxu0 0.0
      %v1456 = vand.u32 %v806, 4294901760
      %v1457 = vsub.f32 %v806, %v1456
      %v1458 = vand.u32 %v1457, 4294901760
      %1459 = vmatpush1.msra.mxu0 %v1458
      %1460 = vmatprep.subr.mxu0 0.0
      %v1461 = vand.u32 %v805, 4294901760
      %v1462 = vsub.f32 %v805, %v1461
      %v1463 = vand.u32 %v1462, 4294901760
      %1464 = vmatpush1.msra.mxu0 %v1463
      %1465 = vmatprep.subr.mxu0 0.0
      %v1466 = vand.u32 %v804, 4294901760
      %v1467 = vsub.f32 %v804, %v1466
      %v1468 = vand.u32 %v1467, 4294901760
      %1469 = vmatpush1.msra.mxu0 %v1468
      %1470 = vmatprep.subr.mxu0 0.0
      %v1471 = vand.u32 %v803, 4294901760
      %v1472 = vsub.f32 %v803, %v1471
      %v1473 = vand.u32 %v1472, 4294901760
      %1474 = vmatpush1.msra.mxu0 %v1473
      %1475 = vmatprep.subr.mxu0 0.0
      %v1476 = vand.u32 %v802, 4294901760
      %v1477 = vsub.f32 %v802, %v1476
      %v1478 = vand.u32 %v1477, 4294901760
      %1479 = vmatpush1.msra.mxu0 %v1478
      %1480 = vmatprep.subr.mxu0 0.0
      %v1481 = vand.u32 %v801, 4294901760
      %v1482 = vsub.f32 %v801, %v1481
      %v1483 = vand.u32 %v1482, 4294901760
      %1484 = vmatpush1.msra.mxu0 %v1483
      %1485 = vmatprep.subr.mxu0 0.0
      %v1486 = vand.u32 %v800, 4294901760
      %v1487 = vsub.f32 %v800, %v1486
      %v1488 = vand.u32 %v1487, 4294901760
      %1489 = vmatpush1.msra.mxu0 %v1488
      %1490 = vmatprep.subr.mxu0 0.0
      %v1491 = vand.u32 %v799, 4294901760
      %v1492 = vsub.f32 %v799, %v1491
      %v1493 = vand.u32 %v1492, 4294901760
      %1494 = vmatpush1.msra.mxu0 %v1493
      %1495 = vmatprep.subr.mxu0 0.0
      %v1496 = vand.u32 %v798, 4294901760
      %v1497 = vsub.f32 %v798, %v1496
      %v1498 = vand.u32 %v1497, 4294901760
      %1499 = vmatpush1.msra.mxu0 %v1498
      %1500 = vmatprep.subr.mxu0 0.0
      %v1501 = vand.u32 %v829, 4294901760
      %v1502 = vsub.f32 %v829, %v1501
      %v1503 = vand.u32 %v1502, 4294901760
      %1504 = vmatpush2.msra.mxu0 %v1503
      %1505 = vmatprep.subr.mxu0 0.0
      %v1506 = vand.u32 %v828, 4294901760
      %v1507 = vsub.f32 %v828, %v1506
      %v1508 = vand.u32 %v1507, 4294901760
      %1509 = vmatpush2.msra.mxu0 %v1508
      %1510 = vmatprep.subr.mxu0 0.0
      %v1511 = vand.u32 %v827, 4294901760
      %v1512 = vsub.f32 %v827, %v1511
      %v1513 = vand.u32 %v1512, 4294901760
      %1514 = vmatpush2.msra.mxu0 %v1513
      %1515 = vmatprep.subr.mxu0 0.0
      %v1516 = vand.u32 %v826, 4294901760
      %v1517 = vsub.f32 %v826, %v1516
      %v1518 = vand.u32 %v1517, 4294901760
      %1519 = vmatpush2.msra.mxu0 %v1518
      %1520 = vmatprep.subr.mxu0 0.0
      %v1521 = vand.u32 %v825, 4294901760
      %v1522 = vsub.f32 %v825, %v1521
      %v1523 = vand.u32 %v1522, 4294901760
      %1524 = vmatpush2.msra.mxu0 %v1523
      %1525 = vmatprep.subr.mxu0 0.0
      %v1526 = vand.u32 %v824, 4294901760
      %v1527 = vsub.f32 %v824, %v1526
      %v1528 = vand.u32 %v1527, 4294901760
      %1529 = vmatpush2.msra.mxu0 %v1528
      %1530 = vmatprep.subr.mxu0 0.0
      %v1531 = vand.u32 %v823, 4294901760
      %v1532 = vsub.f32 %v823, %v1531
      %v1533 = vand.u32 %v1532, 4294901760
      %1534 = vmatpush2.msra.mxu0 %v1533
      %1535 = vmatprep.subr.mxu0 0.0
      %v1536 = vand.u32 %v822, 4294901760
      %v1537 = vsub.f32 %v822, %v1536
      %v1538 = vand.u32 %v1537, 4294901760
      %1539 = vmatpush2.msra.mxu0 %v1538
      %1540 = vmatprep.subr.mxu0 0.0
      %v1541 = vand.u32 %v821, 4294901760
      %v1542 = vsub.f32 %v821, %v1541
      %v1543 = vand.u32 %v1542, 4294901760
      %1544 = vmatpush2.msra.mxu0 %v1543
      %1545 = vmatprep.subr.mxu0 0.0
      %v1546 = vand.u32 %v820, 4294901760
      %v1547 = vsub.f32 %v820, %v1546
      %v1548 = vand.u32 %v1547, 4294901760
      %1549 = vmatpush2.msra.mxu0 %v1548
      %1550 = vmatprep.subr.mxu0 0.0
      %v1551 = vand.u32 %v819, 4294901760
      %v1552 = vsub.f32 %v819, %v1551
      %v1553 = vand.u32 %v1552, 4294901760
      %1554 = vmatpush2.msra.mxu0 %v1553
      %1555 = vmatprep.subr.mxu0 0.0
      %v1556 = vand.u32 %v818, 4294901760
      %v1557 = vsub.f32 %v818, %v1556
      %v1558 = vand.u32 %v1557, 4294901760
      %1559 = vmatpush2.msra.mxu0 %v1558
      %1560 = vmatprep.subr.mxu0 0.0
      %v1561 = vand.u32 %v817, 4294901760
      %v1562 = vsub.f32 %v817, %v1561
      %v1563 = vand.u32 %v1562, 4294901760
      %1564 = vmatpush2.msra.mxu0 %v1563
      %1565 = vmatprep.subr.mxu0 0.0
      %v1566 = vand.u32 %v816, 4294901760
      %v1567 = vsub.f32 %v816, %v1566
      %v1568 = vand.u32 %v1567, 4294901760
      %1569 = vmatpush2.msra.mxu0 %v1568
      %1570 = vmatprep.subr.mxu0 0.0
      %v1571 = vand.u32 %v815, 4294901760
      %v1572 = vsub.f32 %v815, %v1571
      %v1573 = vand.u32 %v1572, 4294901760
      %1574 = vmatpush2.msra.mxu0 %v1573
      %1575 = vmatprep.subr.mxu0 0.0
      %v1576 = vand.u32 %v814, 4294901760
      %v1577 = vsub.f32 %v814, %v1576
      %v1578 = vand.u32 %v1577, 4294901760
      %1579 = vmatpush2.msra.mxu0 %v1578
      %v1580 = vand.u32 %v797, 4294901760
      %1581 = vmatprep.mubr.f32.mxu0 %v1580
      %v1582 = vand.u32 %v796, 4294901760
      %1583 = vmatmul.mubr.f32.gmra.mxu0 %v1582
      %v1584 = vpop.f32.mrf.mxu0
      %v1585 = vadd.f32 %v1417, %v1584
      %v1586 = vpop.f32.mrf.mxu0
      %1587 = vdwg.mxu0
      %1588 = vmatprep.subr.mxu0 0.0
      %v1589 = vand.u32 %v813, 4294901760
      %1590 = vmatpush1.msra.mxu0 %v1589
      %1591 = vmatprep.subr.mxu0 0.0
      %v1592 = vand.u32 %v812, 4294901760
      %1593 = vmatpush1.msra.mxu0 %v1592
      %1594 = vmatprep.subr.mxu0 0.0
      %v1595 = vand.u32 %v811, 4294901760
      %1596 = vmatpush1.msra.mxu0 %v1595
      %1597 = vmatprep.subr.mxu0 0.0
      %v1598 = vand.u32 %v810, 4294901760
      %1599 = vmatpush1.msra.mxu0 %v1598
      %1600 = vmatprep.subr.mxu0 0.0
      %v1601 = vand.u32 %v809, 4294901760
      %1602 = vmatpush1.msra.mxu0 %v1601
      %1603 = vmatprep.subr.mxu0 0.0
      %v1604 = vand.u32 %v808, 4294901760
      %1605 = vmatpush1.msra.mxu0 %v1604
      %1606 = vmatprep.subr.mxu0 0.0
      %v1607 = vand.u32 %v807, 4294901760
      %1608 = vmatpush1.msra.mxu0 %v1607
      %1609 = vmatprep.subr.mxu0 0.0
      %v1610 = vand.u32 %v806, 4294901760
      %1611 = vmatpush1.msra.mxu0 %v1610
      %1612 = vmatprep.subr.mxu0 0.0
      %v1613 = vand.u32 %v805, 4294901760
      %1614 = vmatpush1.msra.mxu0 %v1613
      %1615 = vmatprep.subr.mxu0 0.0
      %v1616 = vand.u32 %v804, 4294901760
      %1617 = vmatpush1.msra.mxu0 %v1616
      %1618 = vmatprep.subr.mxu0 0.0
      %v1619 = vand.u32 %v803, 4294901760
      %1620 = vmatpush1.msra.mxu0 %v1619
      %1621 = vmatprep.subr.mxu0 0.0
      %v1622 = vand.u32 %v802, 4294901760
      %1623 = vmatpush1.msra.mxu0 %v1622
      %1624 = vmatprep.subr.mxu0 0.0
      %v1625 = vand.u32 %v801, 4294901760
      %1626 = vmatpush1.msra.mxu0 %v1625
      %1627 = vmatprep.subr.mxu0 0.0
      %v1628 = vand.u32 %v800, 4294901760
      %1629 = vmatpush1.msra.mxu0 %v1628
      %1630 = vmatprep.subr.mxu0 0.0
      %v1631 = vand.u32 %v799, 4294901760
      %1632 = vmatpush1.msra.mxu0 %v1631
      %1633 = vmatprep.subr.mxu0 0.0
      %v1634 = vand.u32 %v798, 4294901760
      %1635 = vmatpush1.msra.mxu0 %v1634
      %1636 = vmatprep.subr.mxu0 0.0
      %v1637 = vand.u32 %v829, 4294901760
      %1638 = vmatpush2.msra.mxu0 %v1637
      %1639 = vmatprep.subr.mxu0 0.0
      %v1640 = vand.u32 %v828, 4294901760
      %1641 = vmatpush2.msra.mxu0 %v1640
      %1642 = vmatprep.subr.mxu0 0.0
      %v1643 = vand.u32 %v827, 4294901760
      %1644 = vmatpush2.msra.mxu0 %v1643
      %1645 = vmatprep.subr.mxu0 0.0
      %v1646 = vand.u32 %v826, 4294901760
      %1647 = vmatpush2.msra.mxu0 %v1646
      %1648 = vmatprep.subr.mxu0 0.0
      %v1649 = vand.u32 %v825, 4294901760
      %1650 = vmatpush2.msra.mxu0 %v1649
      %1651 = vmatprep.subr.mxu0 0.0
      %v1652 = vand.u32 %v824, 4294901760
      %1653 = vmatpush2.msra.mxu0 %v1652
      %1654 = vmatprep.subr.mxu0 0.0
      %v1655 = vand.u32 %v823, 4294901760
      %1656 = vmatpush2.msra.mxu0 %v1655
      %1657 = vmatprep.subr.mxu0 0.0
      %v1658 = vand.u32 %v822, 4294901760
      %1659 = vmatpush2.msra.mxu0 %v1658
      %1660 = vmatprep.subr.mxu0 0.0
      %v1661 = vand.u32 %v821, 4294901760
      %1662 = vmatpush2.msra.mxu0 %v1661
      %1663 = vmatprep.subr.mxu0 0.0
      %v1664 = vand.u32 %v820, 4294901760
      %1665 = vmatpush2.msra.mxu0 %v1664
      %1666 = vmatprep.subr.mxu0 0.0
      %v1667 = vand.u32 %v819, 4294901760
      %1668 = vmatpush2.msra.mxu0 %v1667
      %1669 = vmatprep.subr.mxu0 0.0
      %v1670 = vand.u32 %v818, 4294901760
      %1671 = vmatpush2.msra.mxu0 %v1670
      %1672 = vmatprep.subr.mxu0 0.0
      %v1673 = vand.u32 %v817, 4294901760
      %1674 = vmatpush2.msra.mxu0 %v1673
      %1675 = vmatprep.subr.mxu0 0.0
      %v1676 = vand.u32 %v816, 4294901760
      %1677 = vmatpush2.msra.mxu0 %v1676
      %1678 = vmatprep.subr.mxu0 0.0
      %v1679 = vand.u32 %v815, 4294901760
      %1680 = vmatpush2.msra.mxu0 %v1679
      %1681 = vmatprep.subr.mxu0 0.0
      %v1682 = vand.u32 %v814, 4294901760
      %1683 = vmatpush2.msra.mxu0 %v1682
      %v1684 = vand.u32 %v797, 4294901760
      %1685 = vmatprep.mubr.f32.mxu0 %v1684
      %v1686 = vand.u32 %v796, 4294901760
      %1687 = vmatmul.mubr.f32.gmra.mxu0 %v1686
      %v1688 = vpop.f32.mrf.mxu0
      %v1689 = vadd.f32 %v1585, %v1688
      %v1690 = vpop.f32.mrf.mxu0
      %1691 = vdwg.mxu0
      %v1692 = vld [vmem:[%s7] sm:$0xff]
      %v1693 = vld [vmem:[%s7 + $0x8] sm:$0xff]
      %v1694 = vld [vmem:[%s7 + $0x10] sm:$0xff]
      %v1695 = vpack.c.bf16 %v1693, %v1692
      %v1696 = vpack.c.bf16 %v1694, %v1694
      %v1697 = vpack.c.bf16 %v1689, %v1689
      %vm1698 = vcmask 48128
      %v1700 = vsel %vm1698, %v1695, 0
      %v1703 = vsel %vm1698, %v1696, 0
      %vm1705 = vcmask 1042432
      %v1707 = vsel %vm1705, %v1697, 0
      %1709 = vmatprep.subr.bf16.mxu0 0
      %1710 = vmatpush1.bf16.msra.mxu0 0
      %1711 = vmatprep.subr.bf16.mxu0 0
      %1712 = vmatpush1.bf16.msra.mxu0 0
      %1713 = vmatprep.subr.bf16.mxu0 0
      %1714 = vmatpush1.bf16.msra.mxu0 0
      %1715 = vmatprep.subr.bf16.mxu0 0
      %1716 = vmatpush1.bf16.msra.mxu0 0
      %1717 = vmatprep.subr.bf16.mxu0 0
      %1718 = vmatpush1.bf16.msra.mxu0 0
      %1719 = vmatprep.subr.bf16.mxu0 0
      %1720 = vmatpush1.bf16.msra.mxu0 0
      %1721 = vmatprep.subr.bf16.mxu0 0
      %1722 = vmatpush1.bf16.msra.mxu0 0
      %1723 = vmatprep.subr.bf16.mxu0 0
      %1724 = vmatpush1.bf16.msra.mxu0 %v1707
      %1725 = vmatprep.subr.bf16.mxu0 0
      %1726 = vmatpush2.bf16.msra.mxu0 0
      %1727 = vmatprep.subr.bf16.mxu0 0
      %1728 = vmatpush2.bf16.msra.mxu0 0
      %1729 = vmatprep.subr.bf16.mxu0 0
      %1730 = vmatpush2.bf16.msra.mxu0 0
      %1731 = vmatprep.subr.bf16.mxu0 0
      %1732 = vmatpush2.bf16.msra.mxu0 0
      %1733 = vmatprep.subr.bf16.mxu0 0
      %1734 = vmatpush2.bf16.msra.mxu0 0
      %1735 = vmatprep.subr.bf16.mxu0 0
      %1736 = vmatpush2.bf16.msra.mxu0 0
      %1737 = vmatprep.subr.bf16.mxu0 0
      %1738 = vmatpush2.bf16.msra.mxu0 0
      %1739 = vmatprep.subr.bf16.mxu0 0
      %1740 = vmatpush2.bf16.msra.mxu0 0
      %1741 = vmatprep.mubr.bf16.mxu0 0
      %1742 = vmatmul.mubr.bf16.gmra.mxu0 %v1700
      %v1743 = vpop.f32.mrf.mxu0
      %v1744 = vadd.f32 0.0, %v1743
      %v1745 = vpop.f32.mrf.mxu0
      %v1746 = vpop.f32.mrf.mxu0
      %v1747 = vadd.f32 0.0, %v1746
      %v1748 = vpop.f32.mrf.mxu0
      %1749 = vmatprep.mubr.bf16.mxu0 0
      %1750 = vmatmul.mubr.bf16.gmra.mxu0 %v1703
      %v1751 = vpop.f32.mrf.mxu0
      %v1752 = vadd.f32 0.0, %v1751
      %v1753 = vpop.f32.mrf.mxu0
      %v1754 = vpop.f32.mrf.mxu0
      %v1755 = vpop.f32.mrf.mxu0
      %1756 = vdwg.mxu0
      %v1757 = vld [vmem:[%s8] sm:$0xff]
      %v1758 = vld [vmem:[%s8 + $0x8] sm:$0xff]
      %v1759 = vld [vmem:[%s8 + $0x10] sm:$0xff]
      %1761 = vset.pattern.permute.xlu0 0
      %1762 = vperm.xlu0 %1761, %v1757
      %v1763 = vpop.permute.xlu0 %1762
      %1766 = vset.pattern.permute.xlu0 0
      %1767 = vperm.xlu0 %1766, %v1758
      %v1768 = vpop.permute.xlu0 %1767
      %1771 = vset.pattern.permute.xlu0 0
      %1772 = vperm.xlu0 %1771, %v1759
      %v1773 = vpop.permute.xlu0 %1772
      %v1775 = vmul.f32 %v1744, %v1763
      %v1776 = vmul.f32 %v1747, %v1768
      %v1777 = vmul.f32 %v1752, %v1773
      %v1778 = vld [vmem:[%s9] sm:$0xff]
      %v1779 = vld [vmem:[%s9 + $0x8] sm:$0xff]
      %v1780 = vld [vmem:[%s9 + $0x10] sm:$0xff]
      %1782 = vset.pattern.permute.xlu0 0
      %1783 = vperm.xlu0 %1782, %v1778
      %v1784 = vpop.permute.xlu0 %1783
      %1787 = vset.pattern.permute.xlu0 0
      %1788 = vperm.xlu0 %1787, %v1779
      %v1789 = vpop.permute.xlu0 %1788
      %1792 = vset.pattern.permute.xlu0 0
      %1793 = vperm.xlu0 %1792, %v1780
      %v1794 = vpop.permute.xlu0 %1793
      %v1796 = vadd.f32 %v1775, %v1784
      %v1797 = vadd.f32 %v1776, %v1789
      %v1798 = vadd.f32 %v1777, %v1794
      %v1799 = vld [vmem:[#allocation3] sm:$0xff]
      %v1800 = vld [vmem:[#allocation3 + $0x8] sm:$0xff]
      %v1801 = vld [vmem:[#allocation3 + $0x10] sm:$0xff]
      %1805 = vrot.lane.b32.xlu0 %v1799, 112
      %v1806 = vpop.permute.xlu0 %1805
      %1807 = vrot.lane.b32.xlu0 %v1800, 112
      %v1808 = vpop.permute.xlu0 %1807
      %1809 = vrot.lane.b32.xlu0 %v1801, 112
      %v1810 = vpop.permute.xlu0 %1809
      %v1811 = vsel %vm557, %v1806, %v1808
      %v1812 = vsel %vm557, %v1808, %v1810
      %v1815 = vadd.f32 %v1799, %v1811
      %v1816 = vadd.f32 %v1800, %v1812
      %1817 = vrot.lane.b32.xlu0 %v1799, 96
      %v1818 = vpop.permute.xlu0 %1817
      %1819 = vrot.lane.b32.xlu0 %v1800, 96
      %v1820 = vpop.permute.xlu0 %1819
      %1821 = vrot.lane.b32.xlu0 %v1801, 96
      %v1822 = vpop.permute.xlu0 %1821
      %v1823 = vsel %vm580, %v1818, %v1820
      %v1824 = vsel %vm580, %v1820, %v1822
      %v1827 = vadd.f32 %v1815, %v1823
      %v1828 = vadd.f32 %v1816, %v1824
      %v1829 = vmul.f32 %v1827, %v601
      %v1830 = vmul.f32 %v1828, %v605
      %v1832 = vadd.f32 %v1801, %v1810
      %v1834 = vadd.f32 %v1832, %v1822
      %1838 = vrot.lane.b32.xlu0 %v1827, 127
      %v1839 = vpop.permute.xlu0 %1838
      %1840 = vrot.lane.b32.xlu0 %v1828, 127
      %v1841 = vpop.permute.xlu0 %1840
      %1842 = vrot.lane.b32.xlu0 %v1834, 127
      %v1843 = vpop.permute.xlu0 %1842
      %v1844 = vsel %vm672, %v1839, %v1841
      %v1845 = vsel %vm672, %v1841, %v1843
      %v1848 = vadd.f32 %v1829, %v1844
      %v1849 = vadd.f32 %v1830, %v1845
      %v1850 = vmul.f32 %v1827, %v755
      %v1851 = vmul.f32 %v1828, %v759
      %v1852 = vmul.f32 %v1834, %v757
      %1856 = vrot.lane.b32.xlu0 %v1850, 126
      %v1857 = vpop.permute.xlu0 %1856
      %1858 = vrot.lane.b32.xlu0 %v1851, 126
      %v1859 = vpop.permute.xlu0 %1858
      %1860 = vrot.lane.b32.xlu0 %v1852, 126
      %v1861 = vpop.permute.xlu0 %1860
      %v1862 = vsel %vm775, %v1857, %v1859
      %v1863 = vsel %vm775, %v1859, %v1861
      %v1866 = vadd.f32 %v1848, %v1862
      %v1867 = vadd.f32 %v1849, %v1863
      %1868 = vmatprep.subr.mxu0 0.0
      %v1869 = vand.u32 %v813, 4294901760
      %1870 = vmatpush1.msra.mxu0 %v1869
      %1871 = vmatprep.subr.mxu0 0.0
      %v1872 = vand.u32 %v812, 4294901760
      %1873 = vmatpush1.msra.mxu0 %v1872
      %1874 = vmatprep.subr.mxu0 0.0
      %v1875 = vand.u32 %v811, 4294901760
      %1876 = vmatpush1.msra.mxu0 %v1875
      %1877 = vmatprep.subr.mxu0 0.0
      %v1878 = vand.u32 %v810, 4294901760
      %1879 = vmatpush1.msra.mxu0 %v1878
      %1880 = vmatprep.subr.mxu0 0.0
      %v1881 = vand.u32 %v809, 4294901760
      %1882 = vmatpush1.msra.mxu0 %v1881
      %1883 = vmatprep.subr.mxu0 0.0
      %v1884 = vand.u32 %v808, 4294901760
      %1885 = vmatpush1.msra.mxu0 %v1884
      %1886 = vmatprep.subr.mxu0 0.0
      %v1887 = vand.u32 %v807, 4294901760
      %1888 = vmatpush1.msra.mxu0 %v1887
      %1889 = vmatprep.subr.mxu0 0.0
      %v1890 = vand.u32 %v806, 4294901760
      %1891 = vmatpush1.msra.mxu0 %v1890
      %1892 = vmatprep.subr.mxu0 0.0
      %v1893 = vand.u32 %v805, 4294901760
      %1894 = vmatpush1.msra.mxu0 %v1893
      %1895 = vmatprep.subr.mxu0 0.0
      %v1896 = vand.u32 %v804, 4294901760
      %1897 = vmatpush1.msra.mxu0 %v1896
      %1898 = vmatprep.subr.mxu0 0.0
      %v1899 = vand.u32 %v803, 4294901760
      %1900 = vmatpush1.msra.mxu0 %v1899
      %1901 = vmatprep.subr.mxu0 0.0
      %v1902 = vand.u32 %v802, 4294901760
      %1903 = vmatpush1.msra.mxu0 %v1902
      %1904 = vmatprep.subr.mxu0 0.0
      %v1905 = vand.u32 %v801, 4294901760
      %1906 = vmatpush1.msra.mxu0 %v1905
      %1907 = vmatprep.subr.mxu0 0.0
      %v1908 = vand.u32 %v800, 4294901760
      %1909 = vmatpush1.msra.mxu0 %v1908
      %1910 = vmatprep.subr.mxu0 0.0
      %v1911 = vand.u32 %v799, 4294901760
      %1912 = vmatpush1.msra.mxu0 %v1911
      %1913 = vmatprep.subr.mxu0 0.0
      %v1914 = vand.u32 %v798, 4294901760
      %1915 = vmatpush1.msra.mxu0 %v1914
      %1916 = vmatprep.subr.mxu0 0.0
      %v1917 = vand.u32 %v829, 4294901760
      %1918 = vmatpush2.msra.mxu0 %v1917
      %1919 = vmatprep.subr.mxu0 0.0
      %v1920 = vand.u32 %v828, 4294901760
      %1921 = vmatpush2.msra.mxu0 %v1920
      %1922 = vmatprep.subr.mxu0 0.0
      %v1923 = vand.u32 %v827, 4294901760
      %1924 = vmatpush2.msra.mxu0 %v1923
      %1925 = vmatprep.subr.mxu0 0.0
      %v1926 = vand.u32 %v826, 4294901760
      %1927 = vmatpush2.msra.mxu0 %v1926
      %1928 = vmatprep.subr.mxu0 0.0
      %v1929 = vand.u32 %v825, 4294901760
      %1930 = vmatpush2.msra.mxu0 %v1929
      %1931 = vmatprep.subr.mxu0 0.0
      %v1932 = vand.u32 %v824, 4294901760
      %1933 = vmatpush2.msra.mxu0 %v1932
      %1934 = vmatprep.subr.mxu0 0.0
      %v1935 = vand.u32 %v823, 4294901760
      %1936 = vmatpush2.msra.mxu0 %v1935
      %1937 = vmatprep.subr.mxu0 0.0
      %v1938 = vand.u32 %v822, 4294901760
      %1939 = vmatpush2.msra.mxu0 %v1938
      %1940 = vmatprep.subr.mxu0 0.0
      %v1941 = vand.u32 %v821, 4294901760
      %1942 = vmatpush2.msra.mxu0 %v1941
      %1943 = vmatprep.subr.mxu0 0.0
      %v1944 = vand.u32 %v820, 4294901760
      %1945 = vmatpush2.msra.mxu0 %v1944
      %1946 = vmatprep.subr.mxu0 0.0
      %v1947 = vand.u32 %v819, 4294901760
      %1948 = vmatpush2.msra.mxu0 %v1947
      %1949 = vmatprep.subr.mxu0 0.0
      %v1950 = vand.u32 %v818, 4294901760
      %1951 = vmatpush2.msra.mxu0 %v1950
      %1952 = vmatprep.subr.mxu0 0.0
      %v1953 = vand.u32 %v817, 4294901760
      %1954 = vmatpush2.msra.mxu0 %v1953
      %1955 = vmatprep.subr.mxu0 0.0
      %v1956 = vand.u32 %v816, 4294901760
      %1957 = vmatpush2.msra.mxu0 %v1956
      %1958 = vmatprep.subr.mxu0 0.0
      %v1959 = vand.u32 %v815, 4294901760
      %1960 = vmatpush2.msra.mxu0 %v1959
      %1961 = vmatprep.subr.mxu0 0.0
      %v1962 = vand.u32 %v814, 4294901760
      %1963 = vmatpush2.msra.mxu0 %v1962
      %v1964 = vand.u32 %v1867, 4294901760
      %v1965 = vsub.f32 %v1867, %v1964
      %v1966 = vand.u32 %v1965, 4294901760
      %v1967 = vsub.f32 %v1965, %v1966
      %v1968 = vand.u32 %v1967, 4294901760
      %1969 = vmatprep.mubr.f32.mxu0 %v1968
      %v1970 = vand.u32 %v1866, 4294901760
      %v1971 = vsub.f32 %v1866, %v1970
      %v1972 = vand.u32 %v1971, 4294901760
      %v1973 = vsub.f32 %v1971, %v1972
      %v1974 = vand.u32 %v1973, 4294901760
      %1975 = vmatmul.mubr.f32.gmra.mxu0 %v1974
      %v1976 = vpop.f32.mrf.mxu0
      %v1977 = vadd.f32 0.0, %v1976
      %v1978 = vpop.f32.mrf.mxu0
      %1979 = vdwg.mxu0
      %1980 = vmatprep.subr.mxu0 0.0
      %v1981 = vand.u32 %v813, 4294901760
      %v1982 = vsub.f32 %v813, %v1981
      %v1983 = vand.u32 %v1982, 4294901760
      %v1984 = vsub.f32 %v1982, %v1983
      %v1985 = vand.u32 %v1984, 4294901760
      %1986 = vmatpush1.msra.mxu0 %v1985
      %1987 = vmatprep.subr.mxu0 0.0
      %v1988 = vand.u32 %v812, 4294901760
      %v1989 = vsub.f32 %v812, %v1988
      %v1990 = vand.u32 %v1989, 4294901760
      %v1991 = vsub.f32 %v1989, %v1990
      %v1992 = vand.u32 %v1991, 4294901760
      %1993 = vmatpush1.msra.mxu0 %v1992
      %1994 = vmatprep.subr.mxu0 0.0
      %v1995 = vand.u32 %v811, 4294901760
      %v1996 = vsub.f32 %v811, %v1995
      %v1997 = vand.u32 %v1996, 4294901760
      %v1998 = vsub.f32 %v1996, %v1997
      %v1999 = vand.u32 %v1998, 4294901760
      %2000 = vmatpush1.msra.mxu0 %v1999
      %2001 = vmatprep.subr.mxu0 0.0
      %v2002 = vand.u32 %v810, 4294901760
      %v2003 = vsub.f32 %v810, %v2002
      %v2004 = vand.u32 %v2003, 4294901760
      %v2005 = vsub.f32 %v2003, %v2004
      %v2006 = vand.u32 %v2005, 4294901760
      %2007 = vmatpush1.msra.mxu0 %v2006
      %2008 = vmatprep.subr.mxu0 0.0
      %v2009 = vand.u32 %v809, 4294901760
      %v2010 = vsub.f32 %v809, %v2009
      %v2011 = vand.u32 %v2010, 4294901760
      %v2012 = vsub.f32 %v2010, %v2011
      %v2013 = vand.u32 %v2012, 4294901760
      %2014 = vmatpush1.msra.mxu0 %v2013
      %2015 = vmatprep.subr.mxu0 0.0
      %v2016 = vand.u32 %v808, 4294901760
      %v2017 = vsub.f32 %v808, %v2016
      %v2018 = vand.u32 %v2017, 4294901760
      %v2019 = vsub.f32 %v2017, %v2018
      %v2020 = vand.u32 %v2019, 4294901760
      %2021 = vmatpush1.msra.mxu0 %v2020
      %2022 = vmatprep.subr.mxu0 0.0
      %v2023 = vand.u32 %v807, 4294901760
      %v2024 = vsub.f32 %v807, %v2023
      %v2025 = vand.u32 %v2024, 4294901760
      %v2026 = vsub.f32 %v2024, %v2025
      %v2027 = vand.u32 %v2026, 4294901760
      %2028 = vmatpush1.msra.mxu0 %v2027
      %2029 = vmatprep.subr.mxu0 0.0
      %v2030 = vand.u32 %v806, 4294901760
      %v2031 = vsub.f32 %v806, %v2030
      %v2032 = vand.u32 %v2031, 4294901760
      %v2033 = vsub.f32 %v2031, %v2032
      %v2034 = vand.u32 %v2033, 4294901760
      %2035 = vmatpush1.msra.mxu0 %v2034
      %2036 = vmatprep.subr.mxu0 0.0
      %v2037 = vand.u32 %v805, 4294901760
      %v2038 = vsub.f32 %v805, %v2037
      %v2039 = vand.u32 %v2038, 4294901760
      %v2040 = vsub.f32 %v2038, %v2039
      %v2041 = vand.u32 %v2040, 4294901760
      %2042 = vmatpush1.msra.mxu0 %v2041
      %2043 = vmatprep.subr.mxu0 0.0
      %v2044 = vand.u32 %v804, 4294901760
      %v2045 = vsub.f32 %v804, %v2044
      %v2046 = vand.u32 %v2045, 4294901760
      %v2047 = vsub.f32 %v2045, %v2046
      %v2048 = vand.u32 %v2047, 4294901760
      %2049 = vmatpush1.msra.mxu0 %v2048
      %2050 = vmatprep.subr.mxu0 0.0
      %v2051 = vand.u32 %v803, 4294901760
      %v2052 = vsub.f32 %v803, %v2051
      %v2053 = vand.u32 %v2052, 4294901760
      %v2054 = vsub.f32 %v2052, %v2053
      %v2055 = vand.u32 %v2054, 4294901760
      %2056 = vmatpush1.msra.mxu0 %v2055
      %2057 = vmatprep.subr.mxu0 0.0
      %v2058 = vand.u32 %v802, 4294901760
      %v2059 = vsub.f32 %v802, %v2058
      %v2060 = vand.u32 %v2059, 4294901760
      %v2061 = vsub.f32 %v2059, %v2060
      %v2062 = vand.u32 %v2061, 4294901760
      %2063 = vmatpush1.msra.mxu0 %v2062
      %2064 = vmatprep.subr.mxu0 0.0
      %v2065 = vand.u32 %v801, 4294901760
      %v2066 = vsub.f32 %v801, %v2065
      %v2067 = vand.u32 %v2066, 4294901760
      %v2068 = vsub.f32 %v2066, %v2067
      %v2069 = vand.u32 %v2068, 4294901760
      %2070 = vmatpush1.msra.mxu0 %v2069
      %2071 = vmatprep.subr.mxu0 0.0
      %v2072 = vand.u32 %v800, 4294901760
      %v2073 = vsub.f32 %v800, %v2072
      %v2074 = vand.u32 %v2073, 4294901760
      %v2075 = vsub.f32 %v2073, %v2074
      %v2076 = vand.u32 %v2075, 4294901760
      %2077 = vmatpush1.msra.mxu0 %v2076
      %2078 = vmatprep.subr.mxu0 0.0
      %v2079 = vand.u32 %v799, 4294901760
      %v2080 = vsub.f32 %v799, %v2079
      %v2081 = vand.u32 %v2080, 4294901760
      %v2082 = vsub.f32 %v2080, %v2081
      %v2083 = vand.u32 %v2082, 4294901760
      %2084 = vmatpush1.msra.mxu0 %v2083
      %2085 = vmatprep.subr.mxu0 0.0
      %v2086 = vand.u32 %v798, 4294901760
      %v2087 = vsub.f32 %v798, %v2086
      %v2088 = vand.u32 %v2087, 4294901760
      %v2089 = vsub.f32 %v2087, %v2088
      %v2090 = vand.u32 %v2089, 4294901760
      %2091 = vmatpush1.msra.mxu0 %v2090
      %2092 = vmatprep.subr.mxu0 0.0
      %v2093 = vand.u32 %v829, 4294901760
      %v2094 = vsub.f32 %v829, %v2093
      %v2095 = vand.u32 %v2094, 4294901760
      %v2096 = vsub.f32 %v2094, %v2095
      %v2097 = vand.u32 %v2096, 4294901760
      %2098 = vmatpush2.msra.mxu0 %v2097
      %2099 = vmatprep.subr.mxu0 0.0
      %v2100 = vand.u32 %v828, 4294901760
      %v2101 = vsub.f32 %v828, %v2100
      %v2102 = vand.u32 %v2101, 4294901760
      %v2103 = vsub.f32 %v2101, %v2102
      %v2104 = vand.u32 %v2103, 4294901760
      %2105 = vmatpush2.msra.mxu0 %v2104
      %2106 = vmatprep.subr.mxu0 0.0
      %v2107 = vand.u32 %v827, 4294901760
      %v2108 = vsub.f32 %v827, %v2107
      %v2109 = vand.u32 %v2108, 4294901760
      %v2110 = vsub.f32 %v2108, %v2109
      %v2111 = vand.u32 %v2110, 4294901760
      %2112 = vmatpush2.msra.mxu0 %v2111
      %2113 = vmatprep.subr.mxu0 0.0
      %v2114 = vand.u32 %v826, 4294901760
      %v2115 = vsub.f32 %v826, %v2114
      %v2116 = vand.u32 %v2115, 4294901760
      %v2117 = vsub.f32 %v2115, %v2116
      %v2118 = vand.u32 %v2117, 4294901760
      %2119 = vmatpush2.msra.mxu0 %v2118
      %2120 = vmatprep.subr.mxu0 0.0
      %v2121 = vand.u32 %v825, 4294901760
      %v2122 = vsub.f32 %v825, %v2121
      %v2123 = vand.u32 %v2122, 4294901760
      %v2124 = vsub.f32 %v2122, %v2123
      %v2125 = vand.u32 %v2124, 4294901760
      %2126 = vmatpush2.msra.mxu0 %v2125
      %2127 = vmatprep.subr.mxu0 0.0
      %v2128 = vand.u32 %v824, 4294901760
      %v2129 = vsub.f32 %v824, %v2128
      %v2130 = vand.u32 %v2129, 4294901760
      %v2131 = vsub.f32 %v2129, %v2130
      %v2132 = vand.u32 %v2131, 4294901760
      %2133 = vmatpush2.msra.mxu0 %v2132
      %2134 = vmatprep.subr.mxu0 0.0
      %v2135 = vand.u32 %v823, 4294901760
      %v2136 = vsub.f32 %v823, %v2135
      %v2137 = vand.u32 %v2136, 4294901760
      %v2138 = vsub.f32 %v2136, %v2137
      %v2139 = vand.u32 %v2138, 4294901760
      %2140 = vmatpush2.msra.mxu0 %v2139
      %2141 = vmatprep.subr.mxu0 0.0
      %v2142 = vand.u32 %v822, 4294901760
      %v2143 = vsub.f32 %v822, %v2142
      %v2144 = vand.u32 %v2143, 4294901760
      %v2145 = vsub.f32 %v2143, %v2144
      %v2146 = vand.u32 %v2145, 4294901760
      %2147 = vmatpush2.msra.mxu0 %v2146
      %2148 = vmatprep.subr.mxu0 0.0
      %v2149 = vand.u32 %v821, 4294901760
      %v2150 = vsub.f32 %v821, %v2149
      %v2151 = vand.u32 %v2150, 4294901760
      %v2152 = vsub.f32 %v2150, %v2151
      %v2153 = vand.u32 %v2152, 4294901760
      %2154 = vmatpush2.msra.mxu0 %v2153
      %2155 = vmatprep.subr.mxu0 0.0
      %v2156 = vand.u32 %v820, 4294901760
      %v2157 = vsub.f32 %v820, %v2156
      %v2158 = vand.u32 %v2157, 4294901760
      %v2159 = vsub.f32 %v2157, %v2158
      %v2160 = vand.u32 %v2159, 4294901760
      %2161 = vmatpush2.msra.mxu0 %v2160
      %2162 = vmatprep.subr.mxu0 0.0
      %v2163 = vand.u32 %v819, 4294901760
      %v2164 = vsub.f32 %v819, %v2163
      %v2165 = vand.u32 %v2164, 4294901760
      %v2166 = vsub.f32 %v2164, %v2165
      %v2167 = vand.u32 %v2166, 4294901760
      %2168 = vmatpush2.msra.mxu0 %v2167
      %2169 = vmatprep.subr.mxu0 0.0
      %v2170 = vand.u32 %v818, 4294901760
      %v2171 = vsub.f32 %v818, %v2170
      %v2172 = vand.u32 %v2171, 4294901760
      %v2173 = vsub.f32 %v2171, %v2172
      %v2174 = vand.u32 %v2173, 4294901760
      %2175 = vmatpush2.msra.mxu0 %v2174
      %2176 = vmatprep.subr.mxu0 0.0
      %v2177 = vand.u32 %v817, 4294901760
      %v2178 = vsub.f32 %v817, %v2177
      %v2179 = vand.u32 %v2178, 4294901760
      %v2180 = vsub.f32 %v2178, %v2179
      %v2181 = vand.u32 %v2180, 4294901760
      %2182 = vmatpush2.msra.mxu0 %v2181
      %2183 = vmatprep.subr.mxu0 0.0
      %v2184 = vand.u32 %v816, 4294901760
      %v2185 = vsub.f32 %v816, %v2184
      %v2186 = vand.u32 %v2185, 4294901760
      %v2187 = vsub.f32 %v2185, %v2186
      %v2188 = vand.u32 %v2187, 4294901760
      %2189 = vmatpush2.msra.mxu0 %v2188
      %2190 = vmatprep.subr.mxu0 0.0
      %v2191 = vand.u32 %v815, 4294901760
      %v2192 = vsub.f32 %v815, %v2191
      %v2193 = vand.u32 %v2192, 4294901760
      %v2194 = vsub.f32 %v2192, %v2193
      %v2195 = vand.u32 %v2194, 4294901760
      %2196 = vmatpush2.msra.mxu0 %v2195
      %2197 = vmatprep.subr.mxu0 0.0
      %v2198 = vand.u32 %v814, 4294901760
      %v2199 = vsub.f32 %v814, %v2198
      %v2200 = vand.u32 %v2199, 4294901760
      %v2201 = vsub.f32 %v2199, %v2200
      %v2202 = vand.u32 %v2201, 4294901760
      %2203 = vmatpush2.msra.mxu0 %v2202
      %v2204 = vand.u32 %v1867, 4294901760
      %2205 = vmatprep.mubr.f32.mxu0 %v2204
      %v2206 = vand.u32 %v1866, 4294901760
      %2207 = vmatmul.mubr.f32.gmra.mxu0 %v2206
      %v2208 = vpop.f32.mrf.mxu0
      %v2209 = vadd.f32 %v1977, %v2208
      %v2210 = vpop.f32.mrf.mxu0
      %2211 = vdwg.mxu0
      %2212 = vmatprep.subr.mxu0 0.0
      %v2213 = vand.u32 %v813, 4294901760
      %v2214 = vsub.f32 %v813, %v2213
      %2215 = vmatpush1.msra.mxu0 %v2214
      %2216 = vmatprep.subr.mxu0 0.0
      %v2217 = vand.u32 %v812, 4294901760
      %v2218 = vsub.f32 %v812, %v2217
      %2219 = vmatpush1.msra.mxu0 %v2218
      %2220 = vmatprep.subr.mxu0 0.0
      %v2221 = vand.u32 %v811, 4294901760
      %v2222 = vsub.f32 %v811, %v2221
      %2223 = vmatpush1.msra.mxu0 %v2222
      %2224 = vmatprep.subr.mxu0 0.0
      %v2225 = vand.u32 %v810, 4294901760
      %v2226 = vsub.f32 %v810, %v2225
      %2227 = vmatpush1.msra.mxu0 %v2226
      %2228 = vmatprep.subr.mxu0 0.0
      %v2229 = vand.u32 %v809, 4294901760
      %v2230 = vsub.f32 %v809, %v2229
      %2231 = vmatpush1.msra.mxu0 %v2230
      %2232 = vmatprep.subr.mxu0 0.0
      %v2233 = vand.u32 %v808, 4294901760
      %v2234 = vsub.f32 %v808, %v2233
      %2235 = vmatpush1.msra.mxu0 %v2234
      %2236 = vmatprep.subr.mxu0 0.0
      %v2237 = vand.u32 %v807, 4294901760
      %v2238 = vsub.f32 %v807, %v2237
      %2239 = vmatpush1.msra.mxu0 %v2238
      %2240 = vmatprep.subr.mxu0 0.0
      %v2241 = vand.u32 %v806, 4294901760
      %v2242 = vsub.f32 %v806, %v2241
      %2243 = vmatpush1.msra.mxu0 %v2242
      %2244 = vmatprep.subr.mxu0 0.0
      %v2245 = vand.u32 %v805, 4294901760
      %v2246 = vsub.f32 %v805, %v2245
      %2247 = vmatpush1.msra.mxu0 %v2246
      %2248 = vmatprep.subr.mxu0 0.0
      %v2249 = vand.u32 %v804, 4294901760
      %v2250 = vsub.f32 %v804, %v2249
      %2251 = vmatpush1.msra.mxu0 %v2250
      %2252 = vmatprep.subr.mxu0 0.0
      %v2253 = vand.u32 %v803, 4294901760
      %v2254 = vsub.f32 %v803, %v2253
      %2255 = vmatpush1.msra.mxu0 %v2254
      %2256 = vmatprep.subr.mxu0 0.0
      %v2257 = vand.u32 %v802, 4294901760
      %v2258 = vsub.f32 %v802, %v2257
      %2259 = vmatpush1.msra.mxu0 %v2258
      %2260 = vmatprep.subr.mxu0 0.0
      %v2261 = vand.u32 %v801, 4294901760
      %v2262 = vsub.f32 %v801, %v2261
      %2263 = vmatpush1.msra.mxu0 %v2262
      %2264 = vmatprep.subr.mxu0 0.0
      %v2265 = vand.u32 %v800, 4294901760
      %v2266 = vsub.f32 %v800, %v2265
      %2267 = vmatpush1.msra.mxu0 %v2266
      %2268 = vmatprep.subr.mxu0 0.0
      %v2269 = vand.u32 %v799, 4294901760
      %v2270 = vsub.f32 %v799, %v2269
      %2271 = vmatpush1.msra.mxu0 %v2270
      %2272 = vmatprep.subr.mxu0 0.0
      %v2273 = vand.u32 %v798, 4294901760
      %v2274 = vsub.f32 %v798, %v2273
      %2275 = vmatpush1.msra.mxu0 %v2274
      %2276 = vmatprep.subr.mxu0 0.0
      %v2277 = vand.u32 %v829, 4294901760
      %v2278 = vsub.f32 %v829, %v2277
      %2279 = vmatpush2.msra.mxu0 %v2278
      %2280 = vmatprep.subr.mxu0 0.0
      %v2281 = vand.u32 %v828, 4294901760
      %v2282 = vsub.f32 %v828, %v2281
      %2283 = vmatpush2.msra.mxu0 %v2282
      %2284 = vmatprep.subr.mxu0 0.0
      %v2285 = vand.u32 %v827, 4294901760
      %v2286 = vsub.f32 %v827, %v2285
      %2287 = vmatpush2.msra.mxu0 %v2286
      %2288 = vmatprep.subr.mxu0 0.0
      %v2289 = vand.u32 %v826, 4294901760
      %v2290 = vsub.f32 %v826, %v2289
      %2291 = vmatpush2.msra.mxu0 %v2290
      %2292 = vmatprep.subr.mxu0 0.0
      %v2293 = vand.u32 %v825, 4294901760
      %v2294 = vsub.f32 %v825, %v2293
      %2295 = vmatpush2.msra.mxu0 %v2294
      %2296 = vmatprep.subr.mxu0 0.0
      %v2297 = vand.u32 %v824, 4294901760
      %v2298 = vsub.f32 %v824, %v2297
      %2299 = vmatpush2.msra.mxu0 %v2298
      %2300 = vmatprep.subr.mxu0 0.0
      %v2301 = vand.u32 %v823, 4294901760
      %v2302 = vsub.f32 %v823, %v2301
      %2303 = vmatpush2.msra.mxu0 %v2302
      %2304 = vmatprep.subr.mxu0 0.0
      %v2305 = vand.u32 %v822, 4294901760
      %v2306 = vsub.f32 %v822, %v2305
      %2307 = vmatpush2.msra.mxu0 %v2306
      %2308 = vmatprep.subr.mxu0 0.0
      %v2309 = vand.u32 %v821, 4294901760
      %v2310 = vsub.f32 %v821, %v2309
      %2311 = vmatpush2.msra.mxu0 %v2310
      %2312 = vmatprep.subr.mxu0 0.0
      %v2313 = vand.u32 %v820, 4294901760
      %v2314 = vsub.f32 %v820, %v2313
      %2315 = vmatpush2.msra.mxu0 %v2314
      %2316 = vmatprep.subr.mxu0 0.0
      %v2317 = vand.u32 %v819, 4294901760
      %v2318 = vsub.f32 %v819, %v2317
      %2319 = vmatpush2.msra.mxu0 %v2318
      %2320 = vmatprep.subr.mxu0 0.0
      %v2321 = vand.u32 %v818, 4294901760
      %v2322 = vsub.f32 %v818, %v2321
      %2323 = vmatpush2.msra.mxu0 %v2322
      %2324 = vmatprep.subr.mxu0 0.0
      %v2325 = vand.u32 %v817, 4294901760
      %v2326 = vsub.f32 %v817, %v2325
      %2327 = vmatpush2.msra.mxu0 %v2326
      %2328 = vmatprep.subr.mxu0 0.0
      %v2329 = vand.u32 %v816, 4294901760
      %v2330 = vsub.f32 %v816, %v2329
      %2331 = vmatpush2.msra.mxu0 %v2330
      %2332 = vmatprep.subr.mxu0 0.0
      %v2333 = vand.u32 %v815, 4294901760
      %v2334 = vsub.f32 %v815, %v2333
      %2335 = vmatpush2.msra.mxu0 %v2334
      %2336 = vmatprep.subr.mxu0 0.0
      %v2337 = vand.u32 %v814, 4294901760
      %v2338 = vsub.f32 %v814, %v2337
      %2339 = vmatpush2.msra.mxu0 %v2338
      %v2340 = vand.u32 %v1867, 4294901760
      %v2341 = vsub.f32 %v1867, %v2340
      %2342 = vmatprep.mubr.f32.mxu0 %v2341
      %v2343 = vand.u32 %v1866, 4294901760
      %v2344 = vsub.f32 %v1866, %v2343
      %2345 = vmatmul.mubr.f32.gmra.mxu0 %v2344
      %v2346 = vpop.f32.mrf.mxu0
      %v2347 = vadd.f32 %v2209, %v2346
      %v2348 = vpop.f32.mrf.mxu0
      %2349 = vdwg.mxu0
      %2350 = vmatprep.subr.mxu0 0.0
      %v2351 = vand.u32 %v813, 4294901760
      %2352 = vmatpush1.msra.mxu0 %v2351
      %2353 = vmatprep.subr.mxu0 0.0
      %v2354 = vand.u32 %v812, 4294901760
      %2355 = vmatpush1.msra.mxu0 %v2354
      %2356 = vmatprep.subr.mxu0 0.0
      %v2357 = vand.u32 %v811, 4294901760
      %2358 = vmatpush1.msra.mxu0 %v2357
      %2359 = vmatprep.subr.mxu0 0.0
      %v2360 = vand.u32 %v810, 4294901760
      %2361 = vmatpush1.msra.mxu0 %v2360
      %2362 = vmatprep.subr.mxu0 0.0
      %v2363 = vand.u32 %v809, 4294901760
      %2364 = vmatpush1.msra.mxu0 %v2363
      %2365 = vmatprep.subr.mxu0 0.0
      %v2366 = vand.u32 %v808, 4294901760
      %2367 = vmatpush1.msra.mxu0 %v2366
      %2368 = vmatprep.subr.mxu0 0.0
      %v2369 = vand.u32 %v807, 4294901760
      %2370 = vmatpush1.msra.mxu0 %v2369
      %2371 = vmatprep.subr.mxu0 0.0
      %v2372 = vand.u32 %v806, 4294901760
      %2373 = vmatpush1.msra.mxu0 %v2372
      %2374 = vmatprep.subr.mxu0 0.0
      %v2375 = vand.u32 %v805, 4294901760
      %2376 = vmatpush1.msra.mxu0 %v2375
      %2377 = vmatprep.subr.mxu0 0.0
      %v2378 = vand.u32 %v804, 4294901760
      %2379 = vmatpush1.msra.mxu0 %v2378
      %2380 = vmatprep.subr.mxu0 0.0
      %v2381 = vand.u32 %v803, 4294901760
      %2382 = vmatpush1.msra.mxu0 %v2381
      %2383 = vmatprep.subr.mxu0 0.0
      %v2384 = vand.u32 %v802, 4294901760
      %2385 = vmatpush1.msra.mxu0 %v2384
      %2386 = vmatprep.subr.mxu0 0.0
      %v2387 = vand.u32 %v801, 4294901760
      %2388 = vmatpush1.msra.mxu0 %v2387
      %2389 = vmatprep.subr.mxu0 0.0
      %v2390 = vand.u32 %v800, 4294901760
      %2391 = vmatpush1.msra.mxu0 %v2390
      %2392 = vmatprep.subr.mxu0 0.0
      %v2393 = vand.u32 %v799, 4294901760
      %2394 = vmatpush1.msra.mxu0 %v2393
      %2395 = vmatprep.subr.mxu0 0.0
      %v2396 = vand.u32 %v798, 4294901760
      %2397 = vmatpush1.msra.mxu0 %v2396
      %2398 = vmatprep.subr.mxu0 0.0
      %v2399 = vand.u32 %v829, 4294901760
      %2400 = vmatpush2.msra.mxu0 %v2399
      %2401 = vmatprep.subr.mxu0 0.0
      %v2402 = vand.u32 %v828, 4294901760
      %2403 = vmatpush2.msra.mxu0 %v2402
      %2404 = vmatprep.subr.mxu0 0.0
      %v2405 = vand.u32 %v827, 4294901760
      %2406 = vmatpush2.msra.mxu0 %v2405
      %2407 = vmatprep.subr.mxu0 0.0
      %v2408 = vand.u32 %v826, 4294901760
      %2409 = vmatpush2.msra.mxu0 %v2408
      %2410 = vmatprep.subr.mxu0 0.0
      %v2411 = vand.u32 %v825, 4294901760
      %2412 = vmatpush2.msra.mxu0 %v2411
      %2413 = vmatprep.subr.mxu0 0.0
      %v2414 = vand.u32 %v824, 4294901760
      %2415 = vmatpush2.msra.mxu0 %v2414
      %2416 = vmatprep.subr.mxu0 0.0
      %v2417 = vand.u32 %v823, 4294901760
      %2418 = vmatpush2.msra.mxu0 %v2417
      %2419 = vmatprep.subr.mxu0 0.0
      %v2420 = vand.u32 %v822, 4294901760
      %2421 = vmatpush2.msra.mxu0 %v2420
      %2422 = vmatprep.subr.mxu0 0.0
      %v2423 = vand.u32 %v821, 4294901760
      %2424 = vmatpush2.msra.mxu0 %v2423
      %2425 = vmatprep.subr.mxu0 0.0
      %v2426 = vand.u32 %v820, 4294901760
      %2427 = vmatpush2.msra.mxu0 %v2426
      %2428 = vmatprep.subr.mxu0 0.0
      %v2429 = vand.u32 %v819, 4294901760
      %2430 = vmatpush2.msra.mxu0 %v2429
      %2431 = vmatprep.subr.mxu0 0.0
      %v2432 = vand.u32 %v818, 4294901760
      %2433 = vmatpush2.msra.mxu0 %v2432
      %2434 = vmatprep.subr.mxu0 0.0
      %v2435 = vand.u32 %v817, 4294901760
      %2436 = vmatpush2.msra.mxu0 %v2435
      %2437 = vmatprep.subr.mxu0 0.0
      %v2438 = vand.u32 %v816, 4294901760
      %2439 = vmatpush2.msra.mxu0 %v2438
      %2440 = vmatprep.subr.mxu0 0.0
      %v2441 = vand.u32 %v815, 4294901760
      %2442 = vmatpush2.msra.mxu0 %v2441
      %2443 = vmatprep.subr.mxu0 0.0
      %v2444 = vand.u32 %v814, 4294901760
      %2445 = vmatpush2.msra.mxu0 %v2444
      %v2446 = vand.u32 %v1867, 4294901760
      %v2447 = vsub.f32 %v1867, %v2446
      %v2448 = vand.u32 %v2447, 4294901760
      %2449 = vmatprep.mubr.f32.mxu0 %v2448
      %v2450 = vand.u32 %v1866, 4294901760
      %v2451 = vsub.f32 %v1866, %v2450
      %v2452 = vand.u32 %v2451, 4294901760
      %2453 = vmatmul.mubr.f32.gmra.mxu0 %v2452
      %v2454 = vpop.f32.mrf.mxu0
      %v2455 = vadd.f32 %v2347, %v2454
      %v2456 = vpop.f32.mrf.mxu0
      %2457 = vdwg.mxu0
      %2458 = vmatprep.subr.mxu0 0.0
      %v2459 = vand.u32 %v813, 4294901760
      %v2460 = vsub.f32 %v813, %v2459
      %v2461 = vand.u32 %v2460, 4294901760
      %2462 = vmatpush1.msra.mxu0 %v2461
      %2463 = vmatprep.subr.mxu0 0.0
      %v2464 = vand.u32 %v812, 4294901760
      %v2465 = vsub.f32 %v812, %v2464
      %v2466 = vand.u32 %v2465, 4294901760
      %2467 = vmatpush1.msra.mxu0 %v2466
      %2468 = vmatprep.subr.mxu0 0.0
      %v2469 = vand.u32 %v811, 4294901760
      %v2470 = vsub.f32 %v811, %v2469
      %v2471 = vand.u32 %v2470, 4294901760
      %2472 = vmatpush1.msra.mxu0 %v2471
      %2473 = vmatprep.subr.mxu0 0.0
      %v2474 = vand.u32 %v810, 4294901760
      %v2475 = vsub.f32 %v810, %v2474
      %v2476 = vand.u32 %v2475, 4294901760
      %2477 = vmatpush1.msra.mxu0 %v2476
      %2478 = vmatprep.subr.mxu0 0.0
      %v2479 = vand.u32 %v809, 4294901760
      %v2480 = vsub.f32 %v809, %v2479
      %v2481 = vand.u32 %v2480, 4294901760
      %2482 = vmatpush1.msra.mxu0 %v2481
      %2483 = vmatprep.subr.mxu0 0.0
      %v2484 = vand.u32 %v808, 4294901760
      %v2485 = vsub.f32 %v808, %v2484
      %v2486 = vand.u32 %v2485, 4294901760
      %2487 = vmatpush1.msra.mxu0 %v2486
      %2488 = vmatprep.subr.mxu0 0.0
      %v2489 = vand.u32 %v807, 4294901760
      %v2490 = vsub.f32 %v807, %v2489
      %v2491 = vand.u32 %v2490, 4294901760
      %2492 = vmatpush1.msra.mxu0 %v2491
      %2493 = vmatprep.subr.mxu0 0.0
      %v2494 = vand.u32 %v806, 4294901760
      %v2495 = vsub.f32 %v806, %v2494
      %v2496 = vand.u32 %v2495, 4294901760
      %2497 = vmatpush1.msra.mxu0 %v2496
      %2498 = vmatprep.subr.mxu0 0.0
      %v2499 = vand.u32 %v805, 4294901760
      %v2500 = vsub.f32 %v805, %v2499
      %v2501 = vand.u32 %v2500, 4294901760
      %2502 = vmatpush1.msra.mxu0 %v2501
      %2503 = vmatprep.subr.mxu0 0.0
      %v2504 = vand.u32 %v804, 4294901760
      %v2505 = vsub.f32 %v804, %v2504
      %v2506 = vand.u32 %v2505, 4294901760
      %2507 = vmatpush1.msra.mxu0 %v2506
      %2508 = vmatprep.subr.mxu0 0.0
      %v2509 = vand.u32 %v803, 4294901760
      %v2510 = vsub.f32 %v803, %v2509
      %v2511 = vand.u32 %v2510, 4294901760
      %2512 = vmatpush1.msra.mxu0 %v2511
      %2513 = vmatprep.subr.mxu0 0.0
      %v2514 = vand.u32 %v802, 4294901760
      %v2515 = vsub.f32 %v802, %v2514
      %v2516 = vand.u32 %v2515, 4294901760
      %2517 = vmatpush1.msra.mxu0 %v2516
      %2518 = vmatprep.subr.mxu0 0.0
      %v2519 = vand.u32 %v801, 4294901760
      %v2520 = vsub.f32 %v801, %v2519
      %v2521 = vand.u32 %v2520, 4294901760
      %2522 = vmatpush1.msra.mxu0 %v2521
      %2523 = vmatprep.subr.mxu0 0.0
      %v2524 = vand.u32 %v800, 4294901760
      %v2525 = vsub.f32 %v800, %v2524
      %v2526 = vand.u32 %v2525, 4294901760
      %2527 = vmatpush1.msra.mxu0 %v2526
      %2528 = vmatprep.subr.mxu0 0.0
      %v2529 = vand.u32 %v799, 4294901760
      %v2530 = vsub.f32 %v799, %v2529
      %v2531 = vand.u32 %v2530, 4294901760
      %2532 = vmatpush1.msra.mxu0 %v2531
      %2533 = vmatprep.subr.mxu0 0.0
      %v2534 = vand.u32 %v798, 4294901760
      %v2535 = vsub.f32 %v798, %v2534
      %v2536 = vand.u32 %v2535, 4294901760
      %2537 = vmatpush1.msra.mxu0 %v2536
      %2538 = vmatprep.subr.mxu0 0.0
      %v2539 = vand.u32 %v829, 4294901760
      %v2540 = vsub.f32 %v829, %v2539
      %v2541 = vand.u32 %v2540, 4294901760
      %2542 = vmatpush2.msra.mxu0 %v2541
      %2543 = vmatprep.subr.mxu0 0.0
      %v2544 = vand.u32 %v828, 4294901760
      %v2545 = vsub.f32 %v828, %v2544
      %v2546 = vand.u32 %v2545, 4294901760
      %2547 = vmatpush2.msra.mxu0 %v2546
      %2548 = vmatprep.subr.mxu0 0.0
      %v2549 = vand.u32 %v827, 4294901760
      %v2550 = vsub.f32 %v827, %v2549
      %v2551 = vand.u32 %v2550, 4294901760
      %2552 = vmatpush2.msra.mxu0 %v2551
      %2553 = vmatprep.subr.mxu0 0.0
      %v2554 = vand.u32 %v826, 4294901760
      %v2555 = vsub.f32 %v826, %v2554
      %v2556 = vand.u32 %v2555, 4294901760
      %2557 = vmatpush2.msra.mxu0 %v2556
      %2558 = vmatprep.subr.mxu0 0.0
      %v2559 = vand.u32 %v825, 4294901760
      %v2560 = vsub.f32 %v825, %v2559
      %v2561 = vand.u32 %v2560, 4294901760
      %2562 = vmatpush2.msra.mxu0 %v2561
      %2563 = vmatprep.subr.mxu0 0.0
      %v2564 = vand.u32 %v824, 4294901760
      %v2565 = vsub.f32 %v824, %v2564
      %v2566 = vand.u32 %v2565, 4294901760
      %2567 = vmatpush2.msra.mxu0 %v2566
      %2568 = vmatprep.subr.mxu0 0.0
      %v2569 = vand.u32 %v823, 4294901760
      %v2570 = vsub.f32 %v823, %v2569
      %v2571 = vand.u32 %v2570, 4294901760
      %2572 = vmatpush2.msra.mxu0 %v2571
      %2573 = vmatprep.subr.mxu0 0.0
      %v2574 = vand.u32 %v822, 4294901760
      %v2575 = vsub.f32 %v822, %v2574
      %v2576 = vand.u32 %v2575, 4294901760
      %2577 = vmatpush2.msra.mxu0 %v2576
      %2578 = vmatprep.subr.mxu0 0.0
      %v2579 = vand.u32 %v821, 4294901760
      %v2580 = vsub.f32 %v821, %v2579
      %v2581 = vand.u32 %v2580, 4294901760
      %2582 = vmatpush2.msra.mxu0 %v2581
      %2583 = vmatprep.subr.mxu0 0.0
      %v2584 = vand.u32 %v820, 4294901760
      %v2585 = vsub.f32 %v820, %v2584
      %v2586 = vand.u32 %v2585, 4294901760
      %2587 = vmatpush2.msra.mxu0 %v2586
      %2588 = vmatprep.subr.mxu0 0.0
      %v2589 = vand.u32 %v819, 4294901760
      %v2590 = vsub.f32 %v819, %v2589
      %v2591 = vand.u32 %v2590, 4294901760
      %2592 = vmatpush2.msra.mxu0 %v2591
      %2593 = vmatprep.subr.mxu0 0.0
      %v2594 = vand.u32 %v818, 4294901760
      %v2595 = vsub.f32 %v818, %v2594
      %v2596 = vand.u32 %v2595, 4294901760
      %2597 = vmatpush2.msra.mxu0 %v2596
      %2598 = vmatprep.subr.mxu0 0.0
      %v2599 = vand.u32 %v817, 4294901760
      %v2600 = vsub.f32 %v817, %v2599
      %v2601 = vand.u32 %v2600, 4294901760
      %2602 = vmatpush2.msra.mxu0 %v2601
      %2603 = vmatprep.subr.mxu0 0.0
      %v2604 = vand.u32 %v816, 4294901760
      %v2605 = vsub.f32 %v816, %v2604
      %v2606 = vand.u32 %v2605, 4294901760
      %2607 = vmatpush2.msra.mxu0 %v2606
      %2608 = vmatprep.subr.mxu0 0.0
      %v2609 = vand.u32 %v815, 4294901760
      %v2610 = vsub.f32 %v815, %v2609
      %v2611 = vand.u32 %v2610, 4294901760
      %2612 = vmatpush2.msra.mxu0 %v2611
      %2613 = vmatprep.subr.mxu0 0.0
      %v2614 = vand.u32 %v814, 4294901760
      %v2615 = vsub.f32 %v814, %v2614
      %v2616 = vand.u32 %v2615, 4294901760
      %2617 = vmatpush2.msra.mxu0 %v2616
      %v2618 = vand.u32 %v1867, 4294901760
      %2619 = vmatprep.mubr.f32.mxu0 %v2618
      %v2620 = vand.u32 %v1866, 4294901760
      %2621 = vmatmul.mubr.f32.gmra.mxu0 %v2620
      %v2622 = vpop.f32.mrf.mxu0
      %v2623 = vadd.f32 %v2455, %v2622
      %v2624 = vpop.f32.mrf.mxu0
      %2625 = vdwg.mxu0
      %2626 = vmatprep.subr.mxu0 0.0
      %v2627 = vand.u32 %v813, 4294901760
      %2628 = vmatpush1.msra.mxu0 %v2627
      %2629 = vmatprep.subr.mxu0 0.0
      %v2630 = vand.u32 %v812, 4294901760
      %2631 = vmatpush1.msra.mxu0 %v2630
      %2632 = vmatprep.subr.mxu0 0.0
      %v2633 = vand.u32 %v811, 4294901760
      %2634 = vmatpush1.msra.mxu0 %v2633
      %2635 = vmatprep.subr.mxu0 0.0
      %v2636 = vand.u32 %v810, 4294901760
      %2637 = vmatpush1.msra.mxu0 %v2636
      %2638 = vmatprep.subr.mxu0 0.0
      %v2639 = vand.u32 %v809, 4294901760
      %2640 = vmatpush1.msra.mxu0 %v2639
      %2641 = vmatprep.subr.mxu0 0.0
      %v2642 = vand.u32 %v808, 4294901760
      %2643 = vmatpush1.msra.mxu0 %v2642
      %2644 = vmatprep.subr.mxu0 0.0
      %v2645 = vand.u32 %v807, 4294901760
      %2646 = vmatpush1.msra.mxu0 %v2645
      %2647 = vmatprep.subr.mxu0 0.0
      %v2648 = vand.u32 %v806, 4294901760
      %2649 = vmatpush1.msra.mxu0 %v2648
      %2650 = vmatprep.subr.mxu0 0.0
      %v2651 = vand.u32 %v805, 4294901760
      %2652 = vmatpush1.msra.mxu0 %v2651
      %2653 = vmatprep.subr.mxu0 0.0
      %v2654 = vand.u32 %v804, 4294901760
      %2655 = vmatpush1.msra.mxu0 %v2654
      %2656 = vmatprep.subr.mxu0 0.0
      %v2657 = vand.u32 %v803, 4294901760
      %2658 = vmatpush1.msra.mxu0 %v2657
      %2659 = vmatprep.subr.mxu0 0.0
      %v2660 = vand.u32 %v802, 4294901760
      %2661 = vmatpush1.msra.mxu0 %v2660
      %2662 = vmatprep.subr.mxu0 0.0
      %v2663 = vand.u32 %v801, 4294901760
      %2664 = vmatpush1.msra.mxu0 %v2663
      %2665 = vmatprep.subr.mxu0 0.0
      %v2666 = vand.u32 %v800, 4294901760
      %2667 = vmatpush1.msra.mxu0 %v2666
      %2668 = vmatprep.subr.mxu0 0.0
      %v2669 = vand.u32 %v799, 4294901760
      %2670 = vmatpush1.msra.mxu0 %v2669
      %2671 = vmatprep.subr.mxu0 0.0
      %v2672 = vand.u32 %v798, 4294901760
      %2673 = vmatpush1.msra.mxu0 %v2672
      %2674 = vmatprep.subr.mxu0 0.0
      %v2675 = vand.u32 %v829, 4294901760
      %2676 = vmatpush2.msra.mxu0 %v2675
      %2677 = vmatprep.subr.mxu0 0.0
      %v2678 = vand.u32 %v828, 4294901760
      %2679 = vmatpush2.msra.mxu0 %v2678
      %2680 = vmatprep.subr.mxu0 0.0
      %v2681 = vand.u32 %v827, 4294901760
      %2682 = vmatpush2.msra.mxu0 %v2681
      %2683 = vmatprep.subr.mxu0 0.0
      %v2684 = vand.u32 %v826, 4294901760
      %2685 = vmatpush2.msra.mxu0 %v2684
      %2686 = vmatprep.subr.mxu0 0.0
      %v2687 = vand.u32 %v825, 4294901760
      %2688 = vmatpush2.msra.mxu0 %v2687
      %2689 = vmatprep.subr.mxu0 0.0
      %v2690 = vand.u32 %v824, 4294901760
      %2691 = vmatpush2.msra.mxu0 %v2690
      %2692 = vmatprep.subr.mxu0 0.0
      %v2693 = vand.u32 %v823, 4294901760
      %2694 = vmatpush2.msra.mxu0 %v2693
      %2695 = vmatprep.subr.mxu0 0.0
      %v2696 = vand.u32 %v822, 4294901760
      %2697 = vmatpush2.msra.mxu0 %v2696
      %2698 = vmatprep.subr.mxu0 0.0
      %v2699 = vand.u32 %v821, 4294901760
      %2700 = vmatpush2.msra.mxu0 %v2699
      %2701 = vmatprep.subr.mxu0 0.0
      %v2702 = vand.u32 %v820, 4294901760
      %2703 = vmatpush2.msra.mxu0 %v2702
      %2704 = vmatprep.subr.mxu0 0.0
      %v2705 = vand.u32 %v819, 4294901760
      %2706 = vmatpush2.msra.mxu0 %v2705
      %2707 = vmatprep.subr.mxu0 0.0
      %v2708 = vand.u32 %v818, 4294901760
      %2709 = vmatpush2.msra.mxu0 %v2708
      %2710 = vmatprep.subr.mxu0 0.0
      %v2711 = vand.u32 %v817, 4294901760
      %2712 = vmatpush2.msra.mxu0 %v2711
      %2713 = vmatprep.subr.mxu0 0.0
      %v2714 = vand.u32 %v816, 4294901760
      %2715 = vmatpush2.msra.mxu0 %v2714
      %2716 = vmatprep.subr.mxu0 0.0
      %v2717 = vand.u32 %v815, 4294901760
      %2718 = vmatpush2.msra.mxu0 %v2717
      %2719 = vmatprep.subr.mxu0 0.0
      %v2720 = vand.u32 %v814, 4294901760
      %2721 = vmatpush2.msra.mxu0 %v2720
      %v2722 = vand.u32 %v1867, 4294901760
      %2723 = vmatprep.mubr.f32.mxu0 %v2722
      %v2724 = vand.u32 %v1866, 4294901760
      %2725 = vmatmul.mubr.f32.gmra.mxu0 %v2724
      %v2726 = vpop.f32.mrf.mxu0
      %v2727 = vadd.f32 %v2623, %v2726
      %v2728 = vpop.f32.mrf.mxu0
      %2729 = vdwg.mxu0
      %v2730 = vmul.f32 %v2727, 0.11111111
      %v2731 = vmax.f32 %v1796, 0.0
      %v2732 = vmax.f32 %v1797, 0.0
      %v2733 = vmax.f32 %v1798, 0.0
      %vm2734 = vcmask 523264
      %2735 = vst.msk [vmem:[%s413] sm:$0xff] %vm2734, %v2731
      %2736 = vst.msk [vmem:[%s413 + $0x8] sm:$0xff] %vm2734, %v2732
      %2737 = vst.msk [vmem:[%s413 + $0x10] sm:$0xff] %vm2734, %v2733
      %v2738 = vmax.f32 %v2730, 0.0
      %2739 = vst.msk [vmem:[%s413 + $0x18] sm:$0xff] %vm2734, %v2738
      %p2740 = scmp.lt.s32.totalorder %s23, 1
      %s2741 = scalar_select %p2740, %s23, 1
      %s2742 = smul.addr %s2741, 4
      %s2743 = smul.addr %s2742, 8
      %s2744 = scalar_lea.vmem %s12, %s2743
      // Predicated region
      $region69: #{_lambda_.2} parent=67 // pred_check
        %p2745 = pneg %p298
      $region70: #{_lambda_.2} parent=67 // pred_check_branch
        %2747 = sbr.rel (%p2745) target = $region72
      $region71: #{_lambda_.2} parent=67 // pred_region
        _
      $region72: #{_lambda_.2} parent=67 // pred_fallthru
        _
    $region68: #{_lambda_.2} parent=5 // pred_fallthru
      _
    %p2748 = scmp.le.s32.totalorder 2, %s18
    // Predicated region
    $region73: #{_lambda_.2} parent=5 // pred_check
      %p2749 = pneg %p2748
    $region74: #{_lambda_.2} parent=5 // pred_check_branch
      %2751 = sbr.rel (%p2749) target = $region76
    $region75: #{_lambda_.2} parent=5 // pred_region
      %s2752 = ssub.s32 %s18, 2
      // Predicated region
      $region77: #{_lambda_.2} parent=75 // pred_check
        %p2753 = pneg %p304
      $region78: #{_lambda_.2} parent=75 // pred_check_branch
        %2755 = sbr.rel (%p2753) target = $region80
      $region79: #{_lambda_.2} parent=75 // pred_region
        %p2756 = scmp.lt.s32.totalorder %s24, 1
        %s2757 = scalar_select %p2756, %s24, 1
        %s2758 = smul.addr %s2757, 4
        %s2759 = smul.addr %s2758, 8
        %s2760 = scalar_lea.vmem %s12, %s2759
      $region80: #{_lambda_.2} parent=75 // pred_fallthru
        _
    $region76: #{_lambda_.2} parent=5 // pred_fallthru
      _
  $region6: #{_lambda_.2} parent=0 // loop_footer
    %s22 = sadd.s32 1, %s18
  $region7: #{_lambda_.2} parent=0 // loop_footer_branch
    %17 = sbr.rel target = $region3
  $region8: #{_lambda_.2} parent=0 // loop_exit
    _

</llo_original>
